<compile_context>
chip_gen: v7x
topology: tpu7x:2x2x1
jax: 0.10.0
libtpu: 0.0.40
codegen_flags: <defaults>
</compile_context>

<pallas_src>
import jax
import jax.numpy as jnp
from jax.experimental import pallas as pl
from jax.experimental.pallas import tpu as pltpu

# --- model hyperparameters (small, consistent with the module's args) ---
D_MODEL = 32          # args.d_model
D_FF = 64             # args.d_ff
N_HEADS = 4           # args.n_heads
DIM_HEAD = D_MODEL // N_HEADS
E_LAYERS = 2          # args.e_layers
EPS = 1e-5            # nn.LayerNorm default eps

# row indices inside the packed per-layer vector array `vec` (L, 7, 128)
_AG, _AB, _FG, _FB, _BO, _B2, _B1 = range(7)


def _layernorm(x, gamma, beta):
    mean = jnp.mean(x, axis=-1, keepdims=True)
    var = jnp.mean((x - mean) ** 2, axis=-1, keepdims=True)
    return (x - mean) * jax.lax.rsqrt(var + EPS) * gamma + beta


def _erf(x):
    # Abramowitz & Stegun 7.1.26 rational approximation, |error| <= 1.5e-7.
    # Avoids relying on an erf primitive lowering inside Mosaic.
    a = jnp.where(x >= 0.0, x, -x)
    t = 1.0 / (1.0 + 0.3275911 * a)
    poly = ((((1.061405429 * t - 1.453152027) * t + 1.421413741) * t
             - 0.284496736) * t + 0.254829592) * t
    e = 1.0 - poly * jnp.exp(-a * a)
    return jnp.where(x >= 0.0, e, -e)


def _gelu(x):
    # exact (erf-based) GELU, matching torch.nn.GELU() default
    return 0.5 * x * (1.0 + _erf(x * 0.7071067811865475))


# -------------------- fused transformer forward (one pallas_call) --------------------

def transformer_forward(x, p):
    """Replicates Transformer.forward: returns (x_out (B,N,D), attn_maps (L*B,H,N,N))."""
    B, N, D = x.shape
    L, H, dh, F = E_LAYERS, N_HEADS, DIM_HEAD, D_FF
    BN = B * N
    QO, KO, VO = 0, H * dh, 2 * H * dh       # lane offsets inside the fused projection
    PW = 2 * H * dh + H * D                  # fused projection width (= 192)

    def kernel(x_ref, vec_ref, wattn_ref, ffw_ref, out_ref, attn_ref):
        # x_ref: (BN, D)   vec_ref: (L, 7, 128)   wattn_ref: (L, D, PW)
        # ffw_ref: (L, D+F, F)   out_ref: (BN, D)   attn_ref: (L*B*H, N, N)
        x = x_ref[...]                                           # (BN, D)

        for l in range(L):                                       # static layer unroll
            # ---------- PreNorm multi-head self-attention + residual ----------
            xn = _layernorm(x, vec_ref[l, _AG:_AG + 1, 0:D],
                            vec_ref[l, _AB:_AB + 1, 0:D])        # (BN, D)

            # one fused projection per layer: [ q*scale | k | v@wo (per head) ]
            proj = jnp.dot(xn, wattn_ref[l],
                           preferred_element_type=jnp.float32)   # (BN, PW)

            y_rows = []
            for bi in range(B):                                  # static batch unroll
                r0, r1 = bi * N, (bi + 1) * N
                yb = None
                for h in range(H):                               # static head unroll
                    q = proj[r0:r1, QO + h * dh:QO + (h + 1) * dh]     # (N, dh)
                    k = proj[r0:r1, KO + h * dh:KO + (h + 1) * dh]     # (N, dh)
                    s = jax.lax.dot_general(
                        q, k, (((1,), (1,)), ((), ())),
                        preferred_element_type=jnp.float32)            # (N, N)
                    s = s - jnp.max(s, axis=-1, keepdims=True)
                    e = jnp.exp(s)
                    attn = e / jnp.sum(e, axis=-1, keepdims=True)      # exact softmax
                    attn_ref[(l * B + bi) * H + h] = attn              # (N, N)

                    vo = proj[r0:r1, VO + h * D:VO + (h + 1) * D]      # (N, D)
                    ah = jnp.dot(attn, vo, preferred_element_type=jnp.float32)
                    yb = ah if yb is None else yb + ah
                y_rows.append(yb)                                      # (N, D)

            y = jnp.concatenate(y_rows, axis=0)                        # (BN, D)
            x = x + y + vec_ref[l, _BO:_BO + 1, 0:D]                   # residual

            # ---------- PreNorm FeedForward + residual ----------
            xn2 = _layernorm(x, vec_ref[l, _FG:_FG + 1, 0:D],
                             vec_ref[l, _FB:_FB + 1, 0:D])
            h1 = jnp.dot(xn2, ffw_ref[l, 0:D, :],
                         preferred_element_type=jnp.float32) \
                 + vec_ref[l, _B1:_B1 + 1, 0:F]                        # (BN, F)
            h1 = _gelu(h1)
            ff = jnp.dot(h1, ffw_ref[l, D:D + F, 0:D],
                         preferred_element_type=jnp.float32) \
                 + vec_ref[l, _B2:_B2 + 1, 0:D]                        # (BN, D)
            x = x + ff                                                 # residual

        out_ref[...] = x

    out, attn = pl.pallas_call(
        kernel,
        out_shape=(jax.ShapeDtypeStruct((BN, D), jnp.float32),
                   jax.ShapeDtypeStruct((L * B * H, N, N), jnp.float32)),
        grid=(1,),                               # single step: whole problem resident in VMEM
        in_specs=[
            pl.BlockSpec((BN, D), lambda i: (0, 0)),            # x (batch folded into sublanes)
            pl.BlockSpec((L, 7, 128), lambda i: (0, 0, 0)),     # all per-layer vectors (1 DMA)
            pl.BlockSpec((L, D, PW), lambda i: (0, 0, 0)),      # fused attention weights
            pl.BlockSpec((L, D + F, F), lambda i: (0, 0, 0)),   # w1 / w2 packed
        ],
        out_specs=(pl.BlockSpec((BN, D), lambda i: (0, 0)),
                   pl.BlockSpec((L * B * H, N, N), lambda i: (0, 0, 0))),
        compiler_params=pltpu.CompilerParams(
            dimension_semantics=("arbitrary",)),  # no megacore split for ~µs of work
    )(x.reshape(BN, D), p['vec'], p['w_attn'], p['ffw'])

    # contiguous (free) reshapes back to the module's output layout
    return out.reshape(B, N, D), attn.reshape(L * B, H, N, N)


transformer_forward_jit = jax.jit(transformer_forward)


# -------------------- deterministic parameter init (packed layout) --------------------

def init_params(key):
    L, D, F, H, dh = E_LAYERS, D_MODEL, D_FF, N_HEADS, DIM_HEAD
    ks = jax.random.split(key, 9)
    scale = dh ** -0.5   # softmax scale folded into the Q projection weights

    wq = 0.05 * jax.random.normal(ks[0], (L, D, H * dh), jnp.float32)
    wk = 0.05 * jax.random.normal(ks[1], (L, D, H * dh), jnp.float32)
    wv = 0.05 * jax.random.normal(ks[2], (L, D, H * dh), jnp.float32)
    wo = 0.05 * jax.random.normal(ks[3], (L, H * dh, D), jnp.float32)
    w1 = 0.05 * jax.random.normal(ks[4], (L, D, F), jnp.float32)
    w2 = 0.05 * jax.random.normal(ks[5], (L, F, D), jnp.float32)
    bo = 0.02 * jax.random.normal(ks[6], (L, D), jnp.float32)
    b1 = 0.02 * jax.random.normal(ks[7], (L, F), jnp.float32)
    b2 = 0.02 * jax.random.normal(ks[8], (L, D), jnp.float32)
    a_g = jnp.ones((L, D), jnp.float32)
    a_b = jnp.zeros((L, D), jnp.float32)
    f_g = jnp.ones((L, D), jnp.float32)
    f_b = jnp.zeros((L, D), jnp.float32)

    # fold the output projection into the value projection per head: wvo_h = wv_h @ wo_h
    wvo = jnp.einsum('lchk,lhkd->lchd',
                     wv.reshape(L, D, H, dh), wo.reshape(L, H, dh, D),
                     precision=jax.lax.Precision.HIGHEST).reshape(L, D, H * D)

    # fused attention projection weights: [ wq*scale | wk | wvo ]   (L, D, 192)
    w_attn = jnp.concatenate([wq * scale, wk, wvo], axis=-1)

    # all per-layer vectors packed into one array (one DMA), each padded to 128 lanes
    def pad128(v):
        return jnp.pad(v, ((0, 0), (0, 128 - v.shape[-1])))
    vec = jnp.stack([pad128(a_g), pad128(a_b), pad128(f_g), pad128(f_b),
                     pad128(bo), pad128(b2), pad128(b1)], axis=1)        # (L, 7, 128)

    # FFN weights packed along sublanes (w2 lane-padded to F): one DMA    (L, D+F, F)
    ffw = jnp.concatenate([w1, jnp.pad(w2, ((0, 0), (0, 0), (0, F - D)))], axis=1)

    return {'vec': vec, 'w_attn': w_attn, 'ffw': ffw}


# -------------------- pure-JAX reference (same packed weights) --------------------

def reference_forward(x, p):
    B, N, D = x.shape
    L, H, dh, F = E_LAYERS, N_HEADS, DIM_HEAD, D_FF
    hp = jax.lax.Precision.HIGHEST
    vec, w_attn, ffw = p['vec'], p['w_attn'], p['ffw']
    attn_maps = []
    for l in range(L):
        xn = _layernorm(x, vec[l, _AG, :D], vec[l, _AB, :D])
        proj = jnp.einsum('bnc,ce->bne', xn, w_attn[l], precision=hp)
        q = proj[..., 0:H * dh].reshape(B, N, H, dh)
        k = proj[..., H * dh:2 * H * dh].reshape(B, N, H, dh)
        vo = proj[..., 2 * H * dh:].reshape(B, N, H, D)
        s = jnp.einsum('bnhk,bmhk->bhnm', q, k, precision=hp)
        s = s - jnp.max(s, axis=-1, keepdims=True)
        e = jnp.exp(s)
        attn = e / jnp.sum(e, axis=-1, keepdims=True)                  # (B, H, N, N)
        attn_maps.append(attn)
        y = jnp.einsum('bhnm,bmhd->bnd', attn, vo, precision=hp)
        x = x + y + vec[l, _BO, :D]
        xn2 = _layernorm(x, vec[l, _FG, :D], vec[l, _FB, :D])
        h1 = jnp.einsum('bnc,cf->bnf', xn2, ffw[l, 0:D, :], precision=hp) + vec[l, _B1, :F]
        h1 = _gelu(h1)
        ff = jnp.einsum('bnf,fd->bnd', h1, ffw[l, D:D + F, 0:D], precision=hp) + vec[l, _B2, :D]
        x = x + ff
    return x, jnp.concatenate(attn_maps, axis=0)


if __name__ == "__main__":
    B, N = 2, 8
    key = jax.random.PRNGKey(0)
    key_x, key_p = jax.random.split(key)
    x = jax.random.normal(key_x, (B, N, D_MODEL), jnp.float32)
    params = init_params(key_p)

    x_out, attn_all = transformer_forward_jit(x, params)
    jax.block_until_ready((x_out, attn_all))

    assert x_out.shape == (B, N, D_MODEL)
    assert attn_all.shape == (E_LAYERS * B, N_HEADS, N, N)

    # cross-check kernel mechanics against a pure-JAX reference on the same weights
    x_ref, attn_ref = reference_forward(x, params)
    assert jnp.allclose(x_out, x_ref, atol=1e-3, rtol=1e-3)
    assert jnp.allclose(attn_all, attn_ref, atol=1e-3, rtol=1e-3)

    print("KERNEL_OK")
</pallas_src>

<mosaic_0001>
module attributes {stable_mosaic.version = 11 : i64} {
  func.func @kernel(%arg0: i32, %arg1: memref<16x32xf32, #tpu.memory_space<vmem>>, %arg2: memref<2x7x128xf32, #tpu.memory_space<vmem>>, %arg3: memref<2x32x192xf32, #tpu.memory_space<vmem>>, %arg4: memref<2x96x64xf32, #tpu.memory_space<vmem>>, %arg5: memref<16x32xf32, #tpu.memory_space<vmem>>, %arg6: memref<16x8x8xf32, #tpu.memory_space<vmem>>) attributes {dimension_semantics = [#tpu.dimension_semantics<arbitrary>], iteration_bounds = array<i64: 1>, scalar_prefetch = 0 : i64, scratch_operands = 0 : i64, tpu.core_type = #tpu.core_type<tc>, window_params = [{pipeline_mode = #tpu.pipeline_mode<synchronous>, transform_indices = @transform_0, window_bounds = array<i64: 16, 32>}, {pipeline_mode = #tpu.pipeline_mode<synchronous>, transform_indices = @transform_1, window_bounds = array<i64: 2, 7, 128>}, {pipeline_mode = #tpu.pipeline_mode<synchronous>, transform_indices = @transform_2, window_bounds = array<i64: 2, 32, 192>}, {pipeline_mode = #tpu.pipeline_mode<synchronous>, transform_indices = @transform_3, window_bounds = array<i64: 2, 96, 64>}, {pipeline_mode = #tpu.pipeline_mode<synchronous>, transform_indices = @transform_4, window_bounds = array<i64: 16, 32>}, {pipeline_mode = #tpu.pipeline_mode<synchronous>, transform_indices = @transform_5, window_bounds = array<i64: 16, 8, 8>}]} {
    %c0 = arith.constant 0 : index
    %c0_0 = arith.constant 0 : index
    %0 = vector.load %arg1[%c0, %c0_0] : memref<16x32xf32, #tpu.memory_space<vmem>>, vector<16x32xf32>
    %c0_1 = arith.constant 0 : index
    %c0_2 = arith.constant 0 : index
    %c0_3 = arith.constant 0 : index
    %1 = vector.load %arg2[%c0_1, %c0_2, %c0_3] : memref<2x7x128xf32, #tpu.memory_space<vmem>>, vector<1x1x32xf32>
    %2 = vector.shape_cast %1 : vector<1x1x32xf32> to vector<1x32xf32>
    %c0_4 = arith.constant 0 : index
    %c1 = arith.constant 1 : index
    %c0_5 = arith.constant 0 : index
    %3 = vector.load %arg2[%c0_4, %c1, %c0_5] : memref<2x7x128xf32, #tpu.memory_space<vmem>>, vector<1x1x32xf32>
    %4 = vector.shape_cast %3 : vector<1x1x32xf32> to vector<1x32xf32>
    %cst = arith.constant dense<0.000000e+00> : vector<16xf32>
    %5 = vector.multi_reduction <add>, %0, %cst [1] : vector<16x32xf32> to vector<16xf32>
    %6 = vector.shape_cast %5 : vector<16xf32> to vector<16x1xf32>
    %cst_6 = arith.constant 3.200000e+01 : f32
    %7 = vector.broadcast %cst_6 : f32 to vector<16x1xf32>
    %8 = arith.divf %6, %7 : vector<16x1xf32>
    %9 = vector.broadcast %8 : vector<16x1xf32> to vector<16x32xf32>
    %10 = arith.subf %0, %9 : vector<16x32xf32>
    %11 = arith.mulf %10, %10 : vector<16x32xf32>
    %cst_7 = arith.constant dense<0.000000e+00> : vector<16xf32>
    %12 = vector.multi_reduction <add>, %11, %cst_7 [1] : vector<16x32xf32> to vector<16xf32>
    %13 = vector.shape_cast %12 : vector<16xf32> to vector<16x1xf32>
    %cst_8 = arith.constant 3.200000e+01 : f32
    %14 = vector.broadcast %cst_8 : f32 to vector<16x1xf32>
    %15 = arith.divf %13, %14 : vector<16x1xf32>
    %16 = vector.broadcast %8 : vector<16x1xf32> to vector<16x32xf32>
    %17 = arith.subf %0, %16 : vector<16x32xf32>
    %cst_9 = arith.constant 9.99999974E-6 : f32
    %18 = vector.broadcast %cst_9 : f32 to vector<16x1xf32>
    %19 = arith.addf %15, %18 : vector<16x1xf32>
    %20 = math.rsqrt %19 : vector<16x1xf32>
    %21 = vector.broadcast %20 : vector<16x1xf32> to vector<16x32xf32>
    %22 = arith.mulf %17, %21 : vector<16x32xf32>
    %23 = vector.broadcast %2 : vector<1x32xf32> to vector<16x32xf32>
    %24 = arith.mulf %22, %23 : vector<16x32xf32>
    %25 = vector.broadcast %4 : vector<1x32xf32> to vector<16x32xf32>
    %26 = arith.addf %24, %25 : vector<16x32xf32>
    %c0_10 = arith.constant 0 : index
    %c0_11 = arith.constant 0 : index
    %c0_12 = arith.constant 0 : index
    %27 = vector.load %arg3[%c0_10, %c0_11, %c0_12] : memref<2x32x192xf32, #tpu.memory_space<vmem>>, vector<1x32x192xf32>
    %28 = vector.shape_cast %27 : vector<1x32x192xf32> to vector<32x192xf32>
    %cst_13 = arith.constant dense<0.000000e+00> : vector<16x192xf32>
    %29 = tpu.matmul %26, %28, %cst_13 {dimension_numbers = #tpu.dot_dimension_numbers<[1], [0], [0], [1], [0, 0, 1, 1], [], []>} : vector<16x32xf32>, vector<32x192xf32>, vector<16x192xf32> -> vector<16x192xf32>
    %30 = vector.extract_strided_slice %29 {offsets = [0, 0], sizes = [8, 8], strides = [1, 1]} : vector<16x192xf32> to vector<8x8xf32>
    %31 = vector.extract_strided_slice %29 {offsets = [0, 32], sizes = [8, 8], strides = [1, 1]} : vector<16x192xf32> to vector<8x8xf32>
    %cst_14 = arith.constant dense<0.000000e+00> : vector<8x8xf32>
    %32 = tpu.matmul %30, %31, %cst_14 {dimension_numbers = #tpu.dot_dimension_numbers<[1], [1], [0], [0], [0, 0, 1, 0], [], []>} : vector<8x8xf32>, vector<8x8xf32>, vector<8x8xf32> -> vector<8x8xf32>
    %cst_15 = arith.constant dense<0xFF800000> : vector<8xf32>
    %33 = vector.multi_reduction <maximumf>, %32, %cst_15 [1] : vector<8x8xf32> to vector<8xf32>
    %34 = vector.shape_cast %33 : vector<8xf32> to vector<8x1xf32>
    %35 = vector.broadcast %34 : vector<8x1xf32> to vector<8x8xf32>
    %36 = arith.subf %32, %35 : vector<8x8xf32>
    %37 = math.exp %36 : vector<8x8xf32>
    %cst_16 = arith.constant dense<0.000000e+00> : vector<8xf32>
    %38 = vector.multi_reduction <add>, %37, %cst_16 [1] : vector<8x8xf32> to vector<8xf32>
    %39 = vector.shape_cast %38 : vector<8xf32> to vector<8x1xf32>
    %40 = vector.broadcast %39 : vector<8x1xf32> to vector<8x8xf32>
    %41 = arith.divf %37, %40 : vector<8x8xf32>
    %c0_17 = arith.constant 0 : index
    %c0_18 = arith.constant 0 : index
    %c0_19 = arith.constant 0 : index
    %42 = vector.load %arg6[%c0_17, %c0_18, %c0_19] : memref<16x8x8xf32, #tpu.memory_space<vmem>>, vector<1x8x8xf32>
    %43 = vector.shape_cast %42 : vector<1x8x8xf32> to vector<8x8xf32>
    %44 = vector.shape_cast %41 : vector<8x8xf32> to vector<1x8x8xf32>
    tpu.vector_store %arg6[%c0_17, %c0_18, %c0_19], %44 {strides = array<i32>} : memref<16x8x8xf32, #tpu.memory_space<vmem>>, vector<1x8x8xf32>,
    %45 = vector.extract_strided_slice %29 {offsets = [0, 64], sizes = [8, 32], strides = [1, 1]} : vector<16x192xf32> to vector<8x32xf32>
    %cst_20 = arith.constant dense<0.000000e+00> : vector<8x32xf32>
    %46 = tpu.matmul %41, %45, %cst_20 {dimension_numbers = #tpu.dot_dimension_numbers<[1], [0], [0], [1], [0, 0, 1, 1], [], []>} : vector<8x8xf32>, vector<8x32xf32>, vector<8x32xf32> -> vector<8x32xf32>
    %47 = vector.extract_strided_slice %29 {offsets = [0, 8], sizes = [8, 8], strides = [1, 1]} : vector<16x192xf32> to vector<8x8xf32>
    %48 = vector.extract_strided_slice %29 {offsets = [0, 40], sizes = [8, 8], strides = [1, 1]} : vector<16x192xf32> to vector<8x8xf32>
    %cst_21 = arith.constant dense<0.000000e+00> : vector<8x8xf32>
    %49 = tpu.matmul %47, %48, %cst_21 {dimension_numbers = #tpu.dot_dimension_numbers<[1], [1], [0], [0], [0, 0, 1, 0], [], []>} : vector<8x8xf32>, vector<8x8xf32>, vector<8x8xf32> -> vector<8x8xf32>
    %cst_22 = arith.constant dense<0xFF800000> : vector<8xf32>
    %50 = vector.multi_reduction <maximumf>, %49, %cst_22 [1] : vector<8x8xf32> to vector<8xf32>
    %51 = vector.shape_cast %50 : vector<8xf32> to vector<8x1xf32>
    %52 = vector.broadcast %51 : vector<8x1xf32> to vector<8x8xf32>
    %53 = arith.subf %49, %52 : vector<8x8xf32>
    %54 = math.exp %53 : vector<8x8xf32>
    %cst_23 = arith.constant dense<0.000000e+00> : vector<8xf32>
    %55 = vector.multi_reduction <add>, %54, %cst_23 [1] : vector<8x8xf32> to vector<8xf32>
    %56 = vector.shape_cast %55 : vector<8xf32> to vector<8x1xf32>
    %57 = vector.broadcast %56 : vector<8x1xf32> to vector<8x8xf32>
    %58 = arith.divf %54, %57 : vector<8x8xf32>
    %c1_24 = arith.constant 1 : index
    %c0_25 = arith.constant 0 : index
    %c0_26 = arith.constant 0 : index
    %59 = vector.load %arg6[%c1_24, %c0_25, %c0_26] : memref<16x8x8xf32, #tpu.memory_space<vmem>>, vector<1x8x8xf32>
    %60 = vector.shape_cast %59 : vector<1x8x8xf32> to vector<8x8xf32>
    %61 = vector.shape_cast %58 : vector<8x8xf32> to vector<1x8x8xf32>
    tpu.vector_store %arg6[%c1_24, %c0_25, %c0_26], %61 {strides = array<i32>} : memref<16x8x8xf32, #tpu.memory_space<vmem>>, vector<1x8x8xf32>,
    %62 = vector.extract_strided_slice %29 {offsets = [0, 96], sizes = [8, 32], strides = [1, 1]} : vector<16x192xf32> to vector<8x32xf32>
    %cst_27 = arith.constant dense<0.000000e+00> : vector<8x32xf32>
    %63 = tpu.matmul %58, %62, %cst_27 {dimension_numbers = #tpu.dot_dimension_numbers<[1], [0], [0], [1], [0, 0, 1, 1], [], []>} : vector<8x8xf32>, vector<8x32xf32>, vector<8x32xf32> -> vector<8x32xf32>
    %64 = arith.addf %46, %63 : vector<8x32xf32>
    %65 = vector.extract_strided_slice %29 {offsets = [0, 16], sizes = [8, 8], strides = [1, 1]} : vector<16x192xf32> to vector<8x8xf32>
    %66 = vector.extract_strided_slice %29 {offsets = [0, 48], sizes = [8, 8], strides = [1, 1]} : vector<16x192xf32> to vector<8x8xf32>
    %cst_28 = arith.constant dense<0.000000e+00> : vector<8x8xf32>
    %67 = tpu.matmul %65, %66, %cst_28 {dimension_numbers = #tpu.dot_dimension_numbers<[1], [1], [0], [0], [0, 0, 1, 0], [], []>} : vector<8x8xf32>, vector<8x8xf32>, vector<8x8xf32> -> vector<8x8xf32>
    %cst_29 = arith.constant dense<0xFF800000> : vector<8xf32>
    %68 = vector.multi_reduction <maximumf>, %67, %cst_29 [1] : vector<8x8xf32> to vector<8xf32>
    %69 = vector.shape_cast %68 : vector<8xf32> to vector<8x1xf32>
    %70 = vector.broadcast %69 : vector<8x1xf32> to vector<8x8xf32>
    %71 = arith.subf %67, %70 : vector<8x8xf32>
    %72 = math.exp %71 : vector<8x8xf32>
    %cst_30 = arith.constant dense<0.000000e+00> : vector<8xf32>
    %73 = vector.multi_reduction <add>, %72, %cst_30 [1] : vector<8x8xf32> to vector<8xf32>
    %74 = vector.shape_cast %73 : vector<8xf32> to vector<8x1xf32>
    %75 = vector.broadcast %74 : vector<8x1xf32> to vector<8x8xf32>
    %76 = arith.divf %72, %75 : vector<8x8xf32>
    %c2 = arith.constant 2 : index
    %c0_31 = arith.constant 0 : index
    %c0_32 = arith.constant 0 : index
    %77 = vector.load %arg6[%c2, %c0_31, %c0_32] : memref<16x8x8xf32, #tpu.memory_space<vmem>>, vector<1x8x8xf32>
    %78 = vector.shape_cast %77 : vector<1x8x8xf32> to vector<8x8xf32>
    %79 = vector.shape_cast %76 : vector<8x8xf32> to vector<1x8x8xf32>
    tpu.vector_store %arg6[%c2, %c0_31, %c0_32], %79 {strides = array<i32>} : memref<16x8x8xf32, #tpu.memory_space<vmem>>, vector<1x8x8xf32>,
    %80 = vector.extract_strided_slice %29 {offsets = [0, 128], sizes = [8, 32], strides = [1, 1]} : vector<16x192xf32> to vector<8x32xf32>
    %cst_33 = arith.constant dense<0.000000e+00> : vector<8x32xf32>
    %81 = tpu.matmul %76, %80, %cst_33 {dimension_numbers = #tpu.dot_dimension_numbers<[1], [0], [0], [1], [0, 0, 1, 1], [], []>} : vector<8x8xf32>, vector<8x32xf32>, vector<8x32xf32> -> vector<8x32xf32>
    %82 = arith.addf %64, %81 : vector<8x32xf32>
    %83 = vector.extract_strided_slice %29 {offsets = [0, 24], sizes = [8, 8], strides = [1, 1]} : vector<16x192xf32> to vector<8x8xf32>
    %84 = vector.extract_strided_slice %29 {offsets = [0, 56], sizes = [8, 8], strides = [1, 1]} : vector<16x192xf32> to vector<8x8xf32>
    %cst_34 = arith.constant dense<0.000000e+00> : vector<8x8xf32>
    %85 = tpu.matmul %83, %84, %cst_34 {dimension_numbers = #tpu.dot_dimension_numbers<[1], [1], [0], [0], [0, 0, 1, 0], [], []>} : vector<8x8xf32>, vector<8x8xf32>, vector<8x8xf32> -> vector<8x8xf32>
    %cst_35 = arith.constant dense<0xFF800000> : vector<8xf32>
    %86 = vector.multi_reduction <maximumf>, %85, %cst_35 [1] : vector<8x8xf32> to vector<8xf32>
    %87 = vector.shape_cast %86 : vector<8xf32> to vector<8x1xf32>
    %88 = vector.broadcast %87 : vector<8x1xf32> to vector<8x8xf32>
    %89 = arith.subf %85, %88 : vector<8x8xf32>
    %90 = math.exp %89 : vector<8x8xf32>
    %cst_36 = arith.constant dense<0.000000e+00> : vector<8xf32>
    %91 = vector.multi_reduction <add>, %90, %cst_36 [1] : vector<8x8xf32> to vector<8xf32>
    %92 = vector.shape_cast %91 : vector<8xf32> to vector<8x1xf32>
    %93 = vector.broadcast %92 : vector<8x1xf32> to vector<8x8xf32>
    %94 = arith.divf %90, %93 : vector<8x8xf32>
    %c3 = arith.constant 3 : index
    %c0_37 = arith.constant 0 : index
    %c0_38 = arith.constant 0 : index
    %95 = vector.load %arg6[%c3, %c0_37, %c0_38] : memref<16x8x8xf32, #tpu.memory_space<vmem>>, vector<1x8x8xf32>
    %96 = vector.shape_cast %95 : vector<1x8x8xf32> to vector<8x8xf32>
    %97 = vector.shape_cast %94 : vector<8x8xf32> to vector<1x8x8xf32>
    tpu.vector_store %arg6[%c3, %c0_37, %c0_38], %97 {strides = array<i32>} : memref<16x8x8xf32, #tpu.memory_space<vmem>>, vector<1x8x8xf32>,
    %98 = vector.extract_strided_slice %29 {offsets = [0, 160], sizes = [8, 32], strides = [1, 1]} : vector<16x192xf32> to vector<8x32xf32>
    %cst_39 = arith.constant dense<0.000000e+00> : vector<8x32xf32>
    %99 = tpu.matmul %94, %98, %cst_39 {dimension_numbers = #tpu.dot_dimension_numbers<[1], [0], [0], [1], [0, 0, 1, 1], [], []>} : vector<8x8xf32>, vector<8x32xf32>, vector<8x32xf32> -> vector<8x32xf32>
    %100 = arith.addf %82, %99 : vector<8x32xf32>
    %101 = vector.extract_strided_slice %29 {offsets = [8, 0], sizes = [8, 8], strides = [1, 1]} : vector<16x192xf32> to vector<8x8xf32>
    %102 = vector.extract_strided_slice %29 {offsets = [8, 32], sizes = [8, 8], strides = [1, 1]} : vector<16x192xf32> to vector<8x8xf32>
    %cst_40 = arith.constant dense<0.000000e+00> : vector<8x8xf32>
    %103 = tpu.matmul %101, %102, %cst_40 {dimension_numbers = #tpu.dot_dimension_numbers<[1], [1], [0], [0], [0, 0, 1, 0], [], []>} : vector<8x8xf32>, vector<8x8xf32>, vector<8x8xf32> -> vector<8x8xf32>
    %cst_41 = arith.constant dense<0xFF800000> : vector<8xf32>
    %104 = vector.multi_reduction <maximumf>, %103, %cst_41 [1] : vector<8x8xf32> to vector<8xf32>
    %105 = vector.shape_cast %104 : vector<8xf32> to vector<8x1xf32>
    %106 = vector.broadcast %105 : vector<8x1xf32> to vector<8x8xf32>
    %107 = arith.subf %103, %106 : vector<8x8xf32>
    %108 = math.exp %107 : vector<8x8xf32>
    %cst_42 = arith.constant dense<0.000000e+00> : vector<8xf32>
    %109 = vector.multi_reduction <add>, %108, %cst_42 [1] : vector<8x8xf32> to vector<8xf32>
    %110 = vector.shape_cast %109 : vector<8xf32> to vector<8x1xf32>
    %111 = vector.broadcast %110 : vector<8x1xf32> to vector<8x8xf32>
    %112 = arith.divf %108, %111 : vector<8x8xf32>
    %c4 = arith.constant 4 : index
    %c0_43 = arith.constant 0 : index
    %c0_44 = arith.constant 0 : index
    %113 = vector.load %arg6[%c4, %c0_43, %c0_44] : memref<16x8x8xf32, #tpu.memory_space<vmem>>, vector<1x8x8xf32>
    %114 = vector.shape_cast %113 : vector<1x8x8xf32> to vector<8x8xf32>
    %115 = vector.shape_cast %112 : vector<8x8xf32> to vector<1x8x8xf32>
    tpu.vector_store %arg6[%c4, %c0_43, %c0_44], %115 {strides = array<i32>} : memref<16x8x8xf32, #tpu.memory_space<vmem>>, vector<1x8x8xf32>,
    %116 = vector.extract_strided_slice %29 {offsets = [8, 64], sizes = [8, 32], strides = [1, 1]} : vector<16x192xf32> to vector<8x32xf32>
    %cst_45 = arith.constant dense<0.000000e+00> : vector<8x32xf32>
    %117 = tpu.matmul %112, %116, %cst_45 {dimension_numbers = #tpu.dot_dimension_numbers<[1], [0], [0], [1], [0, 0, 1, 1], [], []>} : vector<8x8xf32>, vector<8x32xf32>, vector<8x32xf32> -> vector<8x32xf32>
    %118 = vector.extract_strided_slice %29 {offsets = [8, 8], sizes = [8, 8], strides = [1, 1]} : vector<16x192xf32> to vector<8x8xf32>
    %119 = vector.extract_strided_slice %29 {offsets = [8, 40], sizes = [8, 8], strides = [1, 1]} : vector<16x192xf32> to vector<8x8xf32>
    %cst_46 = arith.constant dense<0.000000e+00> : vector<8x8xf32>
    %120 = tpu.matmul %118, %119, %cst_46 {dimension_numbers = #tpu.dot_dimension_numbers<[1], [1], [0], [0], [0, 0, 1, 0], [], []>} : vector<8x8xf32>, vector<8x8xf32>, vector<8x8xf32> -> vector<8x8xf32>
    %cst_47 = arith.constant dense<0xFF800000> : vector<8xf32>
    %121 = vector.multi_reduction <maximumf>, %120, %cst_47 [1] : vector<8x8xf32> to vector<8xf32>
    %122 = vector.shape_cast %121 : vector<8xf32> to vector<8x1xf32>
    %123 = vector.broadcast %122 : vector<8x1xf32> to vector<8x8xf32>
    %124 = arith.subf %120, %123 : vector<8x8xf32>
    %125 = math.exp %124 : vector<8x8xf32>
    %cst_48 = arith.constant dense<0.000000e+00> : vector<8xf32>
    %126 = vector.multi_reduction <add>, %125, %cst_48 [1] : vector<8x8xf32> to vector<8xf32>
    %127 = vector.shape_cast %126 : vector<8xf32> to vector<8x1xf32>
    %128 = vector.broadcast %127 : vector<8x1xf32> to vector<8x8xf32>
    %129 = arith.divf %125, %128 : vector<8x8xf32>
    %c5 = arith.constant 5 : index
    %c0_49 = arith.constant 0 : index
    %c0_50 = arith.constant 0 : index
    %130 = vector.load %arg6[%c5, %c0_49, %c0_50] : memref<16x8x8xf32, #tpu.memory_space<vmem>>, vector<1x8x8xf32>
    %131 = vector.shape_cast %130 : vector<1x8x8xf32> to vector<8x8xf32>
    %132 = vector.shape_cast %129 : vector<8x8xf32> to vector<1x8x8xf32>
    tpu.vector_store %arg6[%c5, %c0_49, %c0_50], %132 {strides = array<i32>} : memref<16x8x8xf32, #tpu.memory_space<vmem>>, vector<1x8x8xf32>,
    %133 = vector.extract_strided_slice %29 {offsets = [8, 96], sizes = [8, 32], strides = [1, 1]} : vector<16x192xf32> to vector<8x32xf32>
    %cst_51 = arith.constant dense<0.000000e+00> : vector<8x32xf32>
    %134 = tpu.matmul %129, %133, %cst_51 {dimension_numbers = #tpu.dot_dimension_numbers<[1], [0], [0], [1], [0, 0, 1, 1], [], []>} : vector<8x8xf32>, vector<8x32xf32>, vector<8x32xf32> -> vector<8x32xf32>
    %135 = arith.addf %117, %134 : vector<8x32xf32>
    %136 = vector.extract_strided_slice %29 {offsets = [8, 16], sizes = [8, 8], strides = [1, 1]} : vector<16x192xf32> to vector<8x8xf32>
    %137 = vector.extract_strided_slice %29 {offsets = [8, 48], sizes = [8, 8], strides = [1, 1]} : vector<16x192xf32> to vector<8x8xf32>
    %cst_52 = arith.constant dense<0.000000e+00> : vector<8x8xf32>
    %138 = tpu.matmul %136, %137, %cst_52 {dimension_numbers = #tpu.dot_dimension_numbers<[1], [1], [0], [0], [0, 0, 1, 0], [], []>} : vector<8x8xf32>, vector<8x8xf32>, vector<8x8xf32> -> vector<8x8xf32>
    %cst_53 = arith.constant dense<0xFF800000> : vector<8xf32>
    %139 = vector.multi_reduction <maximumf>, %138, %cst_53 [1] : vector<8x8xf32> to vector<8xf32>
    %140 = vector.shape_cast %139 : vector<8xf32> to vector<8x1xf32>
    %141 = vector.broadcast %140 : vector<8x1xf32> to vector<8x8xf32>
    %142 = arith.subf %138, %141 : vector<8x8xf32>
    %143 = math.exp %142 : vector<8x8xf32>
    %cst_54 = arith.constant dense<0.000000e+00> : vector<8xf32>
    %144 = vector.multi_reduction <add>, %143, %cst_54 [1] : vector<8x8xf32> to vector<8xf32>
    %145 = vector.shape_cast %144 : vector<8xf32> to vector<8x1xf32>
    %146 = vector.broadcast %145 : vector<8x1xf32> to vector<8x8xf32>
    %147 = arith.divf %143, %146 : vector<8x8xf32>
    %c6 = arith.constant 6 : index
    %c0_55 = arith.constant 0 : index
    %c0_56 = arith.constant 0 : index
    %148 = vector.load %arg6[%c6, %c0_55, %c0_56] : memref<16x8x8xf32, #tpu.memory_space<vmem>>, vector<1x8x8xf32>
    %149 = vector.shape_cast %148 : vector<1x8x8xf32> to vector<8x8xf32>
    %150 = vector.shape_cast %147 : vector<8x8xf32> to vector<1x8x8xf32>
    tpu.vector_store %arg6[%c6, %c0_55, %c0_56], %150 {strides = array<i32>} : memref<16x8x8xf32, #tpu.memory_space<vmem>>, vector<1x8x8xf32>,
    %151 = vector.extract_strided_slice %29 {offsets = [8, 128], sizes = [8, 32], strides = [1, 1]} : vector<16x192xf32> to vector<8x32xf32>
    %cst_57 = arith.constant dense<0.000000e+00> : vector<8x32xf32>
    %152 = tpu.matmul %147, %151, %cst_57 {dimension_numbers = #tpu.dot_dimension_numbers<[1], [0], [0], [1], [0, 0, 1, 1], [], []>} : vector<8x8xf32>, vector<8x32xf32>, vector<8x32xf32> -> vector<8x32xf32>
    %153 = arith.addf %135, %152 : vector<8x32xf32>
    %154 = vector.extract_strided_slice %29 {offsets = [8, 24], sizes = [8, 8], strides = [1, 1]} : vector<16x192xf32> to vector<8x8xf32>
    %155 = vector.extract_strided_slice %29 {offsets = [8, 56], sizes = [8, 8], strides = [1, 1]} : vector<16x192xf32> to vector<8x8xf32>
    %cst_58 = arith.constant dense<0.000000e+00> : vector<8x8xf32>
    %156 = tpu.matmul %154, %155, %cst_58 {dimension_numbers = #tpu.dot_dimension_numbers<[1], [1], [0], [0], [0, 0, 1, 0], [], []>} : vector<8x8xf32>, vector<8x8xf32>, vector<8x8xf32> -> vector<8x8xf32>
    %cst_59 = arith.constant dense<0xFF800000> : vector<8xf32>
    %157 = vector.multi_reduction <maximumf>, %156, %cst_59 [1] : vector<8x8xf32> to vector<8xf32>
    %158 = vector.shape_cast %157 : vector<8xf32> to vector<8x1xf32>
    %159 = vector.broadcast %158 : vector<8x1xf32> to vector<8x8xf32>
    %160 = arith.subf %156, %159 : vector<8x8xf32>
    %161 = math.exp %160 : vector<8x8xf32>
    %cst_60 = arith.constant dense<0.000000e+00> : vector<8xf32>
    %162 = vector.multi_reduction <add>, %161, %cst_60 [1] : vector<8x8xf32> to vector<8xf32>
    %163 = vector.shape_cast %162 : vector<8xf32> to vector<8x1xf32>
    %164 = vector.broadcast %163 : vector<8x1xf32> to vector<8x8xf32>
    %165 = arith.divf %161, %164 : vector<8x8xf32>
    %c7 = arith.constant 7 : index
    %c0_61 = arith.constant 0 : index
    %c0_62 = arith.constant 0 : index
    %166 = vector.load %arg6[%c7, %c0_61, %c0_62] : memref<16x8x8xf32, #tpu.memory_space<vmem>>, vector<1x8x8xf32>
    %167 = vector.shape_cast %166 : vector<1x8x8xf32> to vector<8x8xf32>
    %168 = vector.shape_cast %165 : vector<8x8xf32> to vector<1x8x8xf32>
    tpu.vector_store %arg6[%c7, %c0_61, %c0_62], %168 {strides = array<i32>} : memref<16x8x8xf32, #tpu.memory_space<vmem>>, vector<1x8x8xf32>,
    %169 = vector.extract_strided_slice %29 {offsets = [8, 160], sizes = [8, 32], strides = [1, 1]} : vector<16x192xf32> to vector<8x32xf32>
    %cst_63 = arith.constant dense<0.000000e+00> : vector<8x32xf32>
    %170 = tpu.matmul %165, %169, %cst_63 {dimension_numbers = #tpu.dot_dimension_numbers<[1], [0], [0], [1], [0, 0, 1, 1], [], []>} : vector<8x8xf32>, vector<8x32xf32>, vector<8x32xf32> -> vector<8x32xf32>
    %171 = arith.addf %153, %170 : vector<8x32xf32>
    %172 = tpu.concatenate %100, %171 in 0 : vector<8x32xf32>, vector<8x32xf32> -> vector<16x32xf32>
    %173 = arith.addf %0, %172 : vector<16x32xf32>
    %c0_64 = arith.constant 0 : index
    %c4_65 = arith.constant 4 : index
    %c0_66 = arith.constant 0 : index
    %174 = vector.load %arg2[%c0_64, %c4_65, %c0_66] : memref<2x7x128xf32, #tpu.memory_space<vmem>>, vector<1x1x32xf32>
    %175 = vector.shape_cast %174 : vector<1x1x32xf32> to vector<1x32xf32>
    %176 = vector.broadcast %175 : vector<1x32xf32> to vector<16x32xf32>
    %177 = arith.addf %173, %176 : vector<16x32xf32>
    %c0_67 = arith.constant 0 : index
    %c2_68 = arith.constant 2 : index
    %c0_69 = arith.constant 0 : index
    %178 = vector.load %arg2[%c0_67, %c2_68, %c0_69] : memref<2x7x128xf32, #tpu.memory_space<vmem>>, vector<1x1x32xf32>
    %179 = vector.shape_cast %178 : vector<1x1x32xf32> to vector<1x32xf32>
    %c0_70 = arith.constant 0 : index
    %c3_71 = arith.constant 3 : index
    %c0_72 = arith.constant 0 : index
    %180 = vector.load %arg2[%c0_70, %c3_71, %c0_72] : memref<2x7x128xf32, #tpu.memory_space<vmem>>, vector<1x1x32xf32>
    %181 = vector.shape_cast %180 : vector<1x1x32xf32> to vector<1x32xf32>
    %cst_73 = arith.constant dense<0.000000e+00> : vector<16xf32>
    %182 = vector.multi_reduction <add>, %177, %cst_73 [1] : vector<16x32xf32> to vector<16xf32>
    %183 = vector.shape_cast %182 : vector<16xf32> to vector<16x1xf32>
    %cst_74 = arith.constant 3.200000e+01 : f32
    %184 = vector.broadcast %cst_74 : f32 to vector<16x1xf32>
    %185 = arith.divf %183, %184 : vector<16x1xf32>
    %186 = vector.broadcast %185 : vector<16x1xf32> to vector<16x32xf32>
    %187 = arith.subf %177, %186 : vector<16x32xf32>
    %188 = arith.mulf %187, %187 : vector<16x32xf32>
    %cst_75 = arith.constant dense<0.000000e+00> : vector<16xf32>
    %189 = vector.multi_reduction <add>, %188, %cst_75 [1] : vector<16x32xf32> to vector<16xf32>
    %190 = vector.shape_cast %189 : vector<16xf32> to vector<16x1xf32>
    %cst_76 = arith.constant 3.200000e+01 : f32
    %191 = vector.broadcast %cst_76 : f32 to vector<16x1xf32>
    %192 = arith.divf %190, %191 : vector<16x1xf32>
    %193 = vector.broadcast %185 : vector<16x1xf32> to vector<16x32xf32>
    %194 = arith.subf %177, %193 : vector<16x32xf32>
    %cst_77 = arith.constant 9.99999974E-6 : f32
    %195 = vector.broadcast %cst_77 : f32 to vector<16x1xf32>
    %196 = arith.addf %192, %195 : vector<16x1xf32>
    %197 = math.rsqrt %196 : vector<16x1xf32>
    %198 = vector.broadcast %197 : vector<16x1xf32> to vector<16x32xf32>
    %199 = arith.mulf %194, %198 : vector<16x32xf32>
    %200 = vector.broadcast %179 : vector<1x32xf32> to vector<16x32xf32>
    %201 = arith.mulf %199, %200 : vector<16x32xf32>
    %202 = vector.broadcast %181 : vector<1x32xf32> to vector<16x32xf32>
    %203 = arith.addf %201, %202 : vector<16x32xf32>
    %c0_78 = arith.constant 0 : index
    %c0_79 = arith.constant 0 : index
    %c0_80 = arith.constant 0 : index
    %204 = vector.load %arg4[%c0_78, %c0_79, %c0_80] : memref<2x96x64xf32, #tpu.memory_space<vmem>>, vector<1x32x64xf32>
    %205 = vector.shape_cast %204 : vector<1x32x64xf32> to vector<32x64xf32>
    %cst_81 = arith.constant dense<0.000000e+00> : vector<16x64xf32>
    %206 = tpu.matmul %203, %205, %cst_81 {dimension_numbers = #tpu.dot_dimension_numbers<[1], [0], [0], [1], [0, 0, 1, 1], [], []>} : vector<16x32xf32>, vector<32x64xf32>, vector<16x64xf32> -> vector<16x64xf32>
    %c0_82 = arith.constant 0 : index
    %c6_83 = arith.constant 6 : index
    %c0_84 = arith.constant 0 : index
    %207 = vector.load %arg2[%c0_82, %c6_83, %c0_84] : memref<2x7x128xf32, #tpu.memory_space<vmem>>, vector<1x1x64xf32>
    %208 = vector.shape_cast %207 : vector<1x1x64xf32> to vector<1x64xf32>
    %209 = vector.broadcast %208 : vector<1x64xf32> to vector<16x64xf32>
    %210 = arith.addf %206, %209 : vector<16x64xf32>
    %cst_85 = arith.constant 5.000000e-01 : f32
    %211 = vector.broadcast %cst_85 : f32 to vector<16x64xf32>
    %212 = arith.mulf %211, %210 : vector<16x64xf32>
    %cst_86 = arith.constant 0.707106769 : f32
    %213 = vector.broadcast %cst_86 : f32 to vector<16x64xf32>
    %214 = arith.mulf %210, %213 : vector<16x64xf32>
    %cst_87 = arith.constant 0.000000e+00 : f32
    %215 = vector.broadcast %cst_87 : f32 to vector<16x64xf32>
    %216 = arith.cmpf oge, %214, %215 : vector<16x64xf32>
    %cst_88 = arith.constant 0.000000e+00 : f32
    %217 = vector.broadcast %cst_88 : f32 to vector<16x64xf32>
    %218 = arith.subf %217, %214 : vector<16x64xf32>
    %219 = arith.select %216, %214, %218 : vector<16x64xi1>, vector<16x64xf32>
    %cst_89 = arith.constant 0.327591091 : f32
    %220 = vector.broadcast %cst_89 : f32 to vector<16x64xf32>
    %221 = arith.mulf %220, %219 : vector<16x64xf32>
    %cst_90 = arith.constant 1.000000e+00 : f32
    %222 = vector.broadcast %cst_90 : f32 to vector<16x64xf32>
    %223 = arith.addf %222, %221 : vector<16x64xf32>
    %cst_91 = arith.constant 1.000000e+00 : f32
    %224 = vector.broadcast %cst_91 : f32 to vector<16x64xf32>
    %225 = arith.divf %224, %223 : vector<16x64xf32>
    %cst_92 = arith.constant 1.06140542 : f32
    %226 = vector.broadcast %cst_92 : f32 to vector<16x64xf32>
    %227 = arith.mulf %226, %225 : vector<16x64xf32>
    %cst_93 = arith.constant 1.45315206 : f32
    %228 = vector.broadcast %cst_93 : f32 to vector<16x64xf32>
    %229 = arith.subf %227, %228 : vector<16x64xf32>
    %230 = arith.mulf %229, %225 : vector<16x64xf32>
    %cst_94 = arith.constant 1.42141378 : f32
    %231 = vector.broadcast %cst_94 : f32 to vector<16x64xf32>
    %232 = arith.addf %230, %231 : vector<16x64xf32>
    %233 = arith.mulf %232, %225 : vector<16x64xf32>
    %cst_95 = arith.constant 0.284496725 : f32
    %234 = vector.broadcast %cst_95 : f32 to vector<16x64xf32>
    %235 = arith.subf %233, %234 : vector<16x64xf32>
    %236 = arith.mulf %235, %225 : vector<16x64xf32>
    %cst_96 = arith.constant 0.254829586 : f32
    %237 = vector.broadcast %cst_96 : f32 to vector<16x64xf32>
    %238 = arith.addf %236, %237 : vector<16x64xf32>
    %239 = arith.mulf %238, %225 : vector<16x64xf32>
    %cst_97 = arith.constant 0.000000e+00 : f32
    %240 = vector.broadcast %cst_97 : f32 to vector<16x64xf32>
    %241 = arith.subf %240, %219 : vector<16x64xf32>
    %242 = arith.mulf %241, %219 : vector<16x64xf32>
    %243 = math.exp %242 : vector<16x64xf32>
    %244 = arith.mulf %239, %243 : vector<16x64xf32>
    %cst_98 = arith.constant 1.000000e+00 : f32
    %245 = vector.broadcast %cst_98 : f32 to vector<16x64xf32>
    %246 = arith.subf %245, %244 : vector<16x64xf32>
    %cst_99 = arith.constant 0.000000e+00 : f32
    %247 = vector.broadcast %cst_99 : f32 to vector<16x64xf32>
    %248 = arith.cmpf oge, %214, %247 : vector<16x64xf32>
    %cst_100 = arith.constant 0.000000e+00 : f32
    %249 = vector.broadcast %cst_100 : f32 to vector<16x64xf32>
    %250 = arith.subf %249, %246 : vector<16x64xf32>
    %251 = arith.select %248, %246, %250 : vector<16x64xi1>, vector<16x64xf32>
    %cst_101 = arith.constant 1.000000e+00 : f32
    %252 = vector.broadcast %cst_101 : f32 to vector<16x64xf32>
    %253 = arith.addf %252, %251 : vector<16x64xf32>
    %254 = arith.mulf %212, %253 : vector<16x64xf32>
    %c0_102 = arith.constant 0 : index
    %c32 = arith.constant 32 : index
    %c0_103 = arith.constant 0 : index
    %255 = vector.load %arg4[%c0_102, %c32, %c0_103] : memref<2x96x64xf32, #tpu.memory_space<vmem>>, vector<1x64x32xf32>
    %256 = vector.shape_cast %255 : vector<1x64x32xf32> to vector<64x32xf32>
    %cst_104 = arith.constant dense<0.000000e+00> : vector<16x32xf32>
    %257 = tpu.matmul %254, %256, %cst_104 {dimension_numbers = #tpu.dot_dimension_numbers<[1], [0], [0], [1], [0, 0, 1, 1], [], []>} : vector<16x64xf32>, vector<64x32xf32>, vector<16x32xf32> -> vector<16x32xf32>
    %c0_105 = arith.constant 0 : index
    %c5_106 = arith.constant 5 : index
    %c0_107 = arith.constant 0 : index
    %258 = vector.load %arg2[%c0_105, %c5_106, %c0_107] : memref<2x7x128xf32, #tpu.memory_space<vmem>>, vector<1x1x32xf32>
    %259 = vector.shape_cast %258 : vector<1x1x32xf32> to vector<1x32xf32>
    %260 = vector.broadcast %259 : vector<1x32xf32> to vector<16x32xf32>
    %261 = arith.addf %257, %260 : vector<16x32xf32>
    %262 = arith.addf %177, %261 : vector<16x32xf32>
    %c1_108 = arith.constant 1 : index
    %c0_109 = arith.constant 0 : index
    %c0_110 = arith.constant 0 : index
    %263 = vector.load %arg2[%c1_108, %c0_109, %c0_110] : memref<2x7x128xf32, #tpu.memory_space<vmem>>, vector<1x1x32xf32>
    %264 = vector.shape_cast %263 : vector<1x1x32xf32> to vector<1x32xf32>
    %c1_111 = arith.constant 1 : index
    %c1_112 = arith.constant 1 : index
    %c0_113 = arith.constant 0 : index
    %265 = vector.load %arg2[%c1_111, %c1_112, %c0_113] : memref<2x7x128xf32, #tpu.memory_space<vmem>>, vector<1x1x32xf32>
    %266 = vector.shape_cast %265 : vector<1x1x32xf32> to vector<1x32xf32>
    %cst_114 = arith.constant dense<0.000000e+00> : vector<16xf32>
    %267 = vector.multi_reduction <add>, %262, %cst_114 [1] : vector<16x32xf32> to vector<16xf32>
    %268 = vector.shape_cast %267 : vector<16xf32> to vector<16x1xf32>
    %cst_115 = arith.constant 3.200000e+01 : f32
    %269 = vector.broadcast %cst_115 : f32 to vector<16x1xf32>
    %270 = arith.divf %268, %269 : vector<16x1xf32>
    %271 = vector.broadcast %270 : vector<16x1xf32> to vector<16x32xf32>
    %272 = arith.subf %262, %271 : vector<16x32xf32>
    %273 = arith.mulf %272, %272 : vector<16x32xf32>
    %cst_116 = arith.constant dense<0.000000e+00> : vector<16xf32>
    %274 = vector.multi_reduction <add>, %273, %cst_116 [1] : vector<16x32xf32> to vector<16xf32>
    %275 = vector.shape_cast %274 : vector<16xf32> to vector<16x1xf32>
    %cst_117 = arith.constant 3.200000e+01 : f32
    %276 = vector.broadcast %cst_117 : f32 to vector<16x1xf32>
    %277 = arith.divf %275, %276 : vector<16x1xf32>
    %278 = vector.broadcast %270 : vector<16x1xf32> to vector<16x32xf32>
    %279 = arith.subf %262, %278 : vector<16x32xf32>
    %cst_118 = arith.constant 9.99999974E-6 : f32
    %280 = vector.broadcast %cst_118 : f32 to vector<16x1xf32>
    %281 = arith.addf %277, %280 : vector<16x1xf32>
    %282 = math.rsqrt %281 : vector<16x1xf32>
    %283 = vector.broadcast %282 : vector<16x1xf32> to vector<16x32xf32>
    %284 = arith.mulf %279, %283 : vector<16x32xf32>
    %285 = vector.broadcast %264 : vector<1x32xf32> to vector<16x32xf32>
    %286 = arith.mulf %284, %285 : vector<16x32xf32>
    %287 = vector.broadcast %266 : vector<1x32xf32> to vector<16x32xf32>
    %288 = arith.addf %286, %287 : vector<16x32xf32>
    %c1_119 = arith.constant 1 : index
    %c0_120 = arith.constant 0 : index
    %c0_121 = arith.constant 0 : index
    %289 = vector.load %arg3[%c1_119, %c0_120, %c0_121] : memref<2x32x192xf32, #tpu.memory_space<vmem>>, vector<1x32x192xf32>
    %290 = vector.shape_cast %289 : vector<1x32x192xf32> to vector<32x192xf32>
    %cst_122 = arith.constant dense<0.000000e+00> : vector<16x192xf32>
    %291 = tpu.matmul %288, %290, %cst_122 {dimension_numbers = #tpu.dot_dimension_numbers<[1], [0], [0], [1], [0, 0, 1, 1], [], []>} : vector<16x32xf32>, vector<32x192xf32>, vector<16x192xf32> -> vector<16x192xf32>
    %292 = vector.extract_strided_slice %291 {offsets = [0, 0], sizes = [8, 8], strides = [1, 1]} : vector<16x192xf32> to vector<8x8xf32>
    %293 = vector.extract_strided_slice %291 {offsets = [0, 32], sizes = [8, 8], strides = [1, 1]} : vector<16x192xf32> to vector<8x8xf32>
    %cst_123 = arith.constant dense<0.000000e+00> : vector<8x8xf32>
    %294 = tpu.matmul %292, %293, %cst_123 {dimension_numbers = #tpu.dot_dimension_numbers<[1], [1], [0], [0], [0, 0, 1, 0], [], []>} : vector<8x8xf32>, vector<8x8xf32>, vector<8x8xf32> -> vector<8x8xf32>
    %cst_124 = arith.constant dense<0xFF800000> : vector<8xf32>
    %295 = vector.multi_reduction <maximumf>, %294, %cst_124 [1] : vector<8x8xf32> to vector<8xf32>
    %296 = vector.shape_cast %295 : vector<8xf32> to vector<8x1xf32>
    %297 = vector.broadcast %296 : vector<8x1xf32> to vector<8x8xf32>
    %298 = arith.subf %294, %297 : vector<8x8xf32>
    %299 = math.exp %298 : vector<8x8xf32>
    %cst_125 = arith.constant dense<0.000000e+00> : vector<8xf32>
    %300 = vector.multi_reduction <add>, %299, %cst_125 [1] : vector<8x8xf32> to vector<8xf32>
    %301 = vector.shape_cast %300 : vector<8xf32> to vector<8x1xf32>
    %302 = vector.broadcast %301 : vector<8x1xf32> to vector<8x8xf32>
    %303 = arith.divf %299, %302 : vector<8x8xf32>
    %c8 = arith.constant 8 : index
    %c0_126 = arith.constant 0 : index
    %c0_127 = arith.constant 0 : index
    %304 = vector.load %arg6[%c8, %c0_126, %c0_127] : memref<16x8x8xf32, #tpu.memory_space<vmem>>, vector<1x8x8xf32>
    %305 = vector.shape_cast %304 : vector<1x8x8xf32> to vector<8x8xf32>
    %306 = vector.shape_cast %303 : vector<8x8xf32> to vector<1x8x8xf32>
    tpu.vector_store %arg6[%c8, %c0_126, %c0_127], %306 {strides = array<i32>} : memref<16x8x8xf32, #tpu.memory_space<vmem>>, vector<1x8x8xf32>,
    %307 = vector.extract_strided_slice %291 {offsets = [0, 64], sizes = [8, 32], strides = [1, 1]} : vector<16x192xf32> to vector<8x32xf32>
    %cst_128 = arith.constant dense<0.000000e+00> : vector<8x32xf32>
    %308 = tpu.matmul %303, %307, %cst_128 {dimension_numbers = #tpu.dot_dimension_numbers<[1], [0], [0], [1], [0, 0, 1, 1], [], []>} : vector<8x8xf32>, vector<8x32xf32>, vector<8x32xf32> -> vector<8x32xf32>
    %309 = vector.extract_strided_slice %291 {offsets = [0, 8], sizes = [8, 8], strides = [1, 1]} : vector<16x192xf32> to vector<8x8xf32>
    %310 = vector.extract_strided_slice %291 {offsets = [0, 40], sizes = [8, 8], strides = [1, 1]} : vector<16x192xf32> to vector<8x8xf32>
    %cst_129 = arith.constant dense<0.000000e+00> : vector<8x8xf32>
    %311 = tpu.matmul %309, %310, %cst_129 {dimension_numbers = #tpu.dot_dimension_numbers<[1], [1], [0], [0], [0, 0, 1, 0], [], []>} : vector<8x8xf32>, vector<8x8xf32>, vector<8x8xf32> -> vector<8x8xf32>
    %cst_130 = arith.constant dense<0xFF800000> : vector<8xf32>
    %312 = vector.multi_reduction <maximumf>, %311, %cst_130 [1] : vector<8x8xf32> to vector<8xf32>
    %313 = vector.shape_cast %312 : vector<8xf32> to vector<8x1xf32>
    %314 = vector.broadcast %313 : vector<8x1xf32> to vector<8x8xf32>
    %315 = arith.subf %311, %314 : vector<8x8xf32>
    %316 = math.exp %315 : vector<8x8xf32>
    %cst_131 = arith.constant dense<0.000000e+00> : vector<8xf32>
    %317 = vector.multi_reduction <add>, %316, %cst_131 [1] : vector<8x8xf32> to vector<8xf32>
    %318 = vector.shape_cast %317 : vector<8xf32> to vector<8x1xf32>
    %319 = vector.broadcast %318 : vector<8x1xf32> to vector<8x8xf32>
    %320 = arith.divf %316, %319 : vector<8x8xf32>
    %c9 = arith.constant 9 : index
    %c0_132 = arith.constant 0 : index
    %c0_133 = arith.constant 0 : index
    %321 = vector.load %arg6[%c9, %c0_132, %c0_133] : memref<16x8x8xf32, #tpu.memory_space<vmem>>, vector<1x8x8xf32>
    %322 = vector.shape_cast %321 : vector<1x8x8xf32> to vector<8x8xf32>
    %323 = vector.shape_cast %320 : vector<8x8xf32> to vector<1x8x8xf32>
    tpu.vector_store %arg6[%c9, %c0_132, %c0_133], %323 {strides = array<i32>} : memref<16x8x8xf32, #tpu.memory_space<vmem>>, vector<1x8x8xf32>,
    %324 = vector.extract_strided_slice %291 {offsets = [0, 96], sizes = [8, 32], strides = [1, 1]} : vector<16x192xf32> to vector<8x32xf32>
    %cst_134 = arith.constant dense<0.000000e+00> : vector<8x32xf32>
    %325 = tpu.matmul %320, %324, %cst_134 {dimension_numbers = #tpu.dot_dimension_numbers<[1], [0], [0], [1], [0, 0, 1, 1], [], []>} : vector<8x8xf32>, vector<8x32xf32>, vector<8x32xf32> -> vector<8x32xf32>
    %326 = arith.addf %308, %325 : vector<8x32xf32>
    %327 = vector.extract_strided_slice %291 {offsets = [0, 16], sizes = [8, 8], strides = [1, 1]} : vector<16x192xf32> to vector<8x8xf32>
    %328 = vector.extract_strided_slice %291 {offsets = [0, 48], sizes = [8, 8], strides = [1, 1]} : vector<16x192xf32> to vector<8x8xf32>
    %cst_135 = arith.constant dense<0.000000e+00> : vector<8x8xf32>
    %329 = tpu.matmul %327, %328, %cst_135 {dimension_numbers = #tpu.dot_dimension_numbers<[1], [1], [0], [0], [0, 0, 1, 0], [], []>} : vector<8x8xf32>, vector<8x8xf32>, vector<8x8xf32> -> vector<8x8xf32>
    %cst_136 = arith.constant dense<0xFF800000> : vector<8xf32>
    %330 = vector.multi_reduction <maximumf>, %329, %cst_136 [1] : vector<8x8xf32> to vector<8xf32>
    %331 = vector.shape_cast %330 : vector<8xf32> to vector<8x1xf32>
    %332 = vector.broadcast %331 : vector<8x1xf32> to vector<8x8xf32>
    %333 = arith.subf %329, %332 : vector<8x8xf32>
    %334 = math.exp %333 : vector<8x8xf32>
    %cst_137 = arith.constant dense<0.000000e+00> : vector<8xf32>
    %335 = vector.multi_reduction <add>, %334, %cst_137 [1] : vector<8x8xf32> to vector<8xf32>
    %336 = vector.shape_cast %335 : vector<8xf32> to vector<8x1xf32>
    %337 = vector.broadcast %336 : vector<8x1xf32> to vector<8x8xf32>
    %338 = arith.divf %334, %337 : vector<8x8xf32>
    %c10 = arith.constant 10 : index
    %c0_138 = arith.constant 0 : index
    %c0_139 = arith.constant 0 : index
    %339 = vector.load %arg6[%c10, %c0_138, %c0_139] : memref<16x8x8xf32, #tpu.memory_space<vmem>>, vector<1x8x8xf32>
    %340 = vector.shape_cast %339 : vector<1x8x8xf32> to vector<8x8xf32>
    %341 = vector.shape_cast %338 : vector<8x8xf32> to vector<1x8x8xf32>
    tpu.vector_store %arg6[%c10, %c0_138, %c0_139], %341 {strides = array<i32>} : memref<16x8x8xf32, #tpu.memory_space<vmem>>, vector<1x8x8xf32>,
    %342 = vector.extract_strided_slice %291 {offsets = [0, 128], sizes = [8, 32], strides = [1, 1]} : vector<16x192xf32> to vector<8x32xf32>
    %cst_140 = arith.constant dense<0.000000e+00> : vector<8x32xf32>
    %343 = tpu.matmul %338, %342, %cst_140 {dimension_numbers = #tpu.dot_dimension_numbers<[1], [0], [0], [1], [0, 0, 1, 1], [], []>} : vector<8x8xf32>, vector<8x32xf32>, vector<8x32xf32> -> vector<8x32xf32>
    %344 = arith.addf %326, %343 : vector<8x32xf32>
    %345 = vector.extract_strided_slice %291 {offsets = [0, 24], sizes = [8, 8], strides = [1, 1]} : vector<16x192xf32> to vector<8x8xf32>
    %346 = vector.extract_strided_slice %291 {offsets = [0, 56], sizes = [8, 8], strides = [1, 1]} : vector<16x192xf32> to vector<8x8xf32>
    %cst_141 = arith.constant dense<0.000000e+00> : vector<8x8xf32>
    %347 = tpu.matmul %345, %346, %cst_141 {dimension_numbers = #tpu.dot_dimension_numbers<[1], [1], [0], [0], [0, 0, 1, 0], [], []>} : vector<8x8xf32>, vector<8x8xf32>, vector<8x8xf32> -> vector<8x8xf32>
    %cst_142 = arith.constant dense<0xFF800000> : vector<8xf32>
    %348 = vector.multi_reduction <maximumf>, %347, %cst_142 [1] : vector<8x8xf32> to vector<8xf32>
    %349 = vector.shape_cast %348 : vector<8xf32> to vector<8x1xf32>
    %350 = vector.broadcast %349 : vector<8x1xf32> to vector<8x8xf32>
    %351 = arith.subf %347, %350 : vector<8x8xf32>
    %352 = math.exp %351 : vector<8x8xf32>
    %cst_143 = arith.constant dense<0.000000e+00> : vector<8xf32>
    %353 = vector.multi_reduction <add>, %352, %cst_143 [1] : vector<8x8xf32> to vector<8xf32>
    %354 = vector.shape_cast %353 : vector<8xf32> to vector<8x1xf32>
    %355 = vector.broadcast %354 : vector<8x1xf32> to vector<8x8xf32>
    %356 = arith.divf %352, %355 : vector<8x8xf32>
    %c11 = arith.constant 11 : index
    %c0_144 = arith.constant 0 : index
    %c0_145 = arith.constant 0 : index
    %357 = vector.load %arg6[%c11, %c0_144, %c0_145] : memref<16x8x8xf32, #tpu.memory_space<vmem>>, vector<1x8x8xf32>
    %358 = vector.shape_cast %357 : vector<1x8x8xf32> to vector<8x8xf32>
    %359 = vector.shape_cast %356 : vector<8x8xf32> to vector<1x8x8xf32>
    tpu.vector_store %arg6[%c11, %c0_144, %c0_145], %359 {strides = array<i32>} : memref<16x8x8xf32, #tpu.memory_space<vmem>>, vector<1x8x8xf32>,
    %360 = vector.extract_strided_slice %291 {offsets = [0, 160], sizes = [8, 32], strides = [1, 1]} : vector<16x192xf32> to vector<8x32xf32>
    %cst_146 = arith.constant dense<0.000000e+00> : vector<8x32xf32>
    %361 = tpu.matmul %356, %360, %cst_146 {dimension_numbers = #tpu.dot_dimension_numbers<[1], [0], [0], [1], [0, 0, 1, 1], [], []>} : vector<8x8xf32>, vector<8x32xf32>, vector<8x32xf32> -> vector<8x32xf32>
    %362 = arith.addf %344, %361 : vector<8x32xf32>
    %363 = vector.extract_strided_slice %291 {offsets = [8, 0], sizes = [8, 8], strides = [1, 1]} : vector<16x192xf32> to vector<8x8xf32>
    %364 = vector.extract_strided_slice %291 {offsets = [8, 32], sizes = [8, 8], strides = [1, 1]} : vector<16x192xf32> to vector<8x8xf32>
    %cst_147 = arith.constant dense<0.000000e+00> : vector<8x8xf32>
    %365 = tpu.matmul %363, %364, %cst_147 {dimension_numbers = #tpu.dot_dimension_numbers<[1], [1], [0], [0], [0, 0, 1, 0], [], []>} : vector<8x8xf32>, vector<8x8xf32>, vector<8x8xf32> -> vector<8x8xf32>
    %cst_148 = arith.constant dense<0xFF800000> : vector<8xf32>
    %366 = vector.multi_reduction <maximumf>, %365, %cst_148 [1] : vector<8x8xf32> to vector<8xf32>
    %367 = vector.shape_cast %366 : vector<8xf32> to vector<8x1xf32>
    %368 = vector.broadcast %367 : vector<8x1xf32> to vector<8x8xf32>
    %369 = arith.subf %365, %368 : vector<8x8xf32>
    %370 = math.exp %369 : vector<8x8xf32>
    %cst_149 = arith.constant dense<0.000000e+00> : vector<8xf32>
    %371 = vector.multi_reduction <add>, %370, %cst_149 [1] : vector<8x8xf32> to vector<8xf32>
    %372 = vector.shape_cast %371 : vector<8xf32> to vector<8x1xf32>
    %373 = vector.broadcast %372 : vector<8x1xf32> to vector<8x8xf32>
    %374 = arith.divf %370, %373 : vector<8x8xf32>
    %c12 = arith.constant 12 : index
    %c0_150 = arith.constant 0 : index
    %c0_151 = arith.constant 0 : index
    %375 = vector.load %arg6[%c12, %c0_150, %c0_151] : memref<16x8x8xf32, #tpu.memory_space<vmem>>, vector<1x8x8xf32>
    %376 = vector.shape_cast %375 : vector<1x8x8xf32> to vector<8x8xf32>
    %377 = vector.shape_cast %374 : vector<8x8xf32> to vector<1x8x8xf32>
    tpu.vector_store %arg6[%c12, %c0_150, %c0_151], %377 {strides = array<i32>} : memref<16x8x8xf32, #tpu.memory_space<vmem>>, vector<1x8x8xf32>,
    %378 = vector.extract_strided_slice %291 {offsets = [8, 64], sizes = [8, 32], strides = [1, 1]} : vector<16x192xf32> to vector<8x32xf32>
    %cst_152 = arith.constant dense<0.000000e+00> : vector<8x32xf32>
    %379 = tpu.matmul %374, %378, %cst_152 {dimension_numbers = #tpu.dot_dimension_numbers<[1], [0], [0], [1], [0, 0, 1, 1], [], []>} : vector<8x8xf32>, vector<8x32xf32>, vector<8x32xf32> -> vector<8x32xf32>
    %380 = vector.extract_strided_slice %291 {offsets = [8, 8], sizes = [8, 8], strides = [1, 1]} : vector<16x192xf32> to vector<8x8xf32>
    %381 = vector.extract_strided_slice %291 {offsets = [8, 40], sizes = [8, 8], strides = [1, 1]} : vector<16x192xf32> to vector<8x8xf32>
    %cst_153 = arith.constant dense<0.000000e+00> : vector<8x8xf32>
    %382 = tpu.matmul %380, %381, %cst_153 {dimension_numbers = #tpu.dot_dimension_numbers<[1], [1], [0], [0], [0, 0, 1, 0], [], []>} : vector<8x8xf32>, vector<8x8xf32>, vector<8x8xf32> -> vector<8x8xf32>
    %cst_154 = arith.constant dense<0xFF800000> : vector<8xf32>
    %383 = vector.multi_reduction <maximumf>, %382, %cst_154 [1] : vector<8x8xf32> to vector<8xf32>
    %384 = vector.shape_cast %383 : vector<8xf32> to vector<8x1xf32>
    %385 = vector.broadcast %384 : vector<8x1xf32> to vector<8x8xf32>
    %386 = arith.subf %382, %385 : vector<8x8xf32>
    %387 = math.exp %386 : vector<8x8xf32>
    %cst_155 = arith.constant dense<0.000000e+00> : vector<8xf32>
    %388 = vector.multi_reduction <add>, %387, %cst_155 [1] : vector<8x8xf32> to vector<8xf32>
    %389 = vector.shape_cast %388 : vector<8xf32> to vector<8x1xf32>
    %390 = vector.broadcast %389 : vector<8x1xf32> to vector<8x8xf32>
    %391 = arith.divf %387, %390 : vector<8x8xf32>
    %c13 = arith.constant 13 : index
    %c0_156 = arith.constant 0 : index
    %c0_157 = arith.constant 0 : index
    %392 = vector.load %arg6[%c13, %c0_156, %c0_157] : memref<16x8x8xf32, #tpu.memory_space<vmem>>, vector<1x8x8xf32>
    %393 = vector.shape_cast %392 : vector<1x8x8xf32> to vector<8x8xf32>
    %394 = vector.shape_cast %391 : vector<8x8xf32> to vector<1x8x8xf32>
    tpu.vector_store %arg6[%c13, %c0_156, %c0_157], %394 {strides = array<i32>} : memref<16x8x8xf32, #tpu.memory_space<vmem>>, vector<1x8x8xf32>,
    %395 = vector.extract_strided_slice %291 {offsets = [8, 96], sizes = [8, 32], strides = [1, 1]} : vector<16x192xf32> to vector<8x32xf32>
    %cst_158 = arith.constant dense<0.000000e+00> : vector<8x32xf32>
    %396 = tpu.matmul %391, %395, %cst_158 {dimension_numbers = #tpu.dot_dimension_numbers<[1], [0], [0], [1], [0, 0, 1, 1], [], []>} : vector<8x8xf32>, vector<8x32xf32>, vector<8x32xf32> -> vector<8x32xf32>
    %397 = arith.addf %379, %396 : vector<8x32xf32>
    %398 = vector.extract_strided_slice %291 {offsets = [8, 16], sizes = [8, 8], strides = [1, 1]} : vector<16x192xf32> to vector<8x8xf32>
    %399 = vector.extract_strided_slice %291 {offsets = [8, 48], sizes = [8, 8], strides = [1, 1]} : vector<16x192xf32> to vector<8x8xf32>
    %cst_159 = arith.constant dense<0.000000e+00> : vector<8x8xf32>
    %400 = tpu.matmul %398, %399, %cst_159 {dimension_numbers = #tpu.dot_dimension_numbers<[1], [1], [0], [0], [0, 0, 1, 0], [], []>} : vector<8x8xf32>, vector<8x8xf32>, vector<8x8xf32> -> vector<8x8xf32>
    %cst_160 = arith.constant dense<0xFF800000> : vector<8xf32>
    %401 = vector.multi_reduction <maximumf>, %400, %cst_160 [1] : vector<8x8xf32> to vector<8xf32>
    %402 = vector.shape_cast %401 : vector<8xf32> to vector<8x1xf32>
    %403 = vector.broadcast %402 : vector<8x1xf32> to vector<8x8xf32>
    %404 = arith.subf %400, %403 : vector<8x8xf32>
    %405 = math.exp %404 : vector<8x8xf32>
    %cst_161 = arith.constant dense<0.000000e+00> : vector<8xf32>
    %406 = vector.multi_reduction <add>, %405, %cst_161 [1] : vector<8x8xf32> to vector<8xf32>
    %407 = vector.shape_cast %406 : vector<8xf32> to vector<8x1xf32>
    %408 = vector.broadcast %407 : vector<8x1xf32> to vector<8x8xf32>
    %409 = arith.divf %405, %408 : vector<8x8xf32>
    %c14 = arith.constant 14 : index
    %c0_162 = arith.constant 0 : index
    %c0_163 = arith.constant 0 : index
    %410 = vector.load %arg6[%c14, %c0_162, %c0_163] : memref<16x8x8xf32, #tpu.memory_space<vmem>>, vector<1x8x8xf32>
    %411 = vector.shape_cast %410 : vector<1x8x8xf32> to vector<8x8xf32>
    %412 = vector.shape_cast %409 : vector<8x8xf32> to vector<1x8x8xf32>
    tpu.vector_store %arg6[%c14, %c0_162, %c0_163], %412 {strides = array<i32>} : memref<16x8x8xf32, #tpu.memory_space<vmem>>, vector<1x8x8xf32>,
    %413 = vector.extract_strided_slice %291 {offsets = [8, 128], sizes = [8, 32], strides = [1, 1]} : vector<16x192xf32> to vector<8x32xf32>
    %cst_164 = arith.constant dense<0.000000e+00> : vector<8x32xf32>
    %414 = tpu.matmul %409, %413, %cst_164 {dimension_numbers = #tpu.dot_dimension_numbers<[1], [0], [0], [1], [0, 0, 1, 1], [], []>} : vector<8x8xf32>, vector<8x32xf32>, vector<8x32xf32> -> vector<8x32xf32>
    %415 = arith.addf %397, %414 : vector<8x32xf32>
    %416 = vector.extract_strided_slice %291 {offsets = [8, 24], sizes = [8, 8], strides = [1, 1]} : vector<16x192xf32> to vector<8x8xf32>
    %417 = vector.extract_strided_slice %291 {offsets = [8, 56], sizes = [8, 8], strides = [1, 1]} : vector<16x192xf32> to vector<8x8xf32>
    %cst_165 = arith.constant dense<0.000000e+00> : vector<8x8xf32>
    %418 = tpu.matmul %416, %417, %cst_165 {dimension_numbers = #tpu.dot_dimension_numbers<[1], [1], [0], [0], [0, 0, 1, 0], [], []>} : vector<8x8xf32>, vector<8x8xf32>, vector<8x8xf32> -> vector<8x8xf32>
    %cst_166 = arith.constant dense<0xFF800000> : vector<8xf32>
    %419 = vector.multi_reduction <maximumf>, %418, %cst_166 [1] : vector<8x8xf32> to vector<8xf32>
    %420 = vector.shape_cast %419 : vector<8xf32> to vector<8x1xf32>
    %421 = vector.broadcast %420 : vector<8x1xf32> to vector<8x8xf32>
    %422 = arith.subf %418, %421 : vector<8x8xf32>
    %423 = math.exp %422 : vector<8x8xf32>
    %cst_167 = arith.constant dense<0.000000e+00> : vector<8xf32>
    %424 = vector.multi_reduction <add>, %423, %cst_167 [1] : vector<8x8xf32> to vector<8xf32>
    %425 = vector.shape_cast %424 : vector<8xf32> to vector<8x1xf32>
    %426 = vector.broadcast %425 : vector<8x1xf32> to vector<8x8xf32>
    %427 = arith.divf %423, %426 : vector<8x8xf32>
    %c15 = arith.constant 15 : index
    %c0_168 = arith.constant 0 : index
    %c0_169 = arith.constant 0 : index
    %428 = vector.load %arg6[%c15, %c0_168, %c0_169] : memref<16x8x8xf32, #tpu.memory_space<vmem>>, vector<1x8x8xf32>
    %429 = vector.shape_cast %428 : vector<1x8x8xf32> to vector<8x8xf32>
    %430 = vector.shape_cast %427 : vector<8x8xf32> to vector<1x8x8xf32>
    tpu.vector_store %arg6[%c15, %c0_168, %c0_169], %430 {strides = array<i32>} : memref<16x8x8xf32, #tpu.memory_space<vmem>>, vector<1x8x8xf32>,
    %431 = vector.extract_strided_slice %291 {offsets = [8, 160], sizes = [8, 32], strides = [1, 1]} : vector<16x192xf32> to vector<8x32xf32>
    %cst_170 = arith.constant dense<0.000000e+00> : vector<8x32xf32>
    %432 = tpu.matmul %427, %431, %cst_170 {dimension_numbers = #tpu.dot_dimension_numbers<[1], [0], [0], [1], [0, 0, 1, 1], [], []>} : vector<8x8xf32>, vector<8x32xf32>, vector<8x32xf32> -> vector<8x32xf32>
    %433 = arith.addf %415, %432 : vector<8x32xf32>
    %434 = tpu.concatenate %362, %433 in 0 : vector<8x32xf32>, vector<8x32xf32> -> vector<16x32xf32>
    %435 = arith.addf %262, %434 : vector<16x32xf32>
    %c1_171 = arith.constant 1 : index
    %c4_172 = arith.constant 4 : index
    %c0_173 = arith.constant 0 : index
    %436 = vector.load %arg2[%c1_171, %c4_172, %c0_173] : memref<2x7x128xf32, #tpu.memory_space<vmem>>, vector<1x1x32xf32>
    %437 = vector.shape_cast %436 : vector<1x1x32xf32> to vector<1x32xf32>
    %438 = vector.broadcast %437 : vector<1x32xf32> to vector<16x32xf32>
    %439 = arith.addf %435, %438 : vector<16x32xf32>
    %c1_174 = arith.constant 1 : index
    %c2_175 = arith.constant 2 : index
    %c0_176 = arith.constant 0 : index
    %440 = vector.load %arg2[%c1_174, %c2_175, %c0_176] : memref<2x7x128xf32, #tpu.memory_space<vmem>>, vector<1x1x32xf32>
    %441 = vector.shape_cast %440 : vector<1x1x32xf32> to vector<1x32xf32>
    %c1_177 = arith.constant 1 : index
    %c3_178 = arith.constant 3 : index
    %c0_179 = arith.constant 0 : index
    %442 = vector.load %arg2[%c1_177, %c3_178, %c0_179] : memref<2x7x128xf32, #tpu.memory_space<vmem>>, vector<1x1x32xf32>
    %443 = vector.shape_cast %442 : vector<1x1x32xf32> to vector<1x32xf32>
    %cst_180 = arith.constant dense<0.000000e+00> : vector<16xf32>
    %444 = vector.multi_reduction <add>, %439, %cst_180 [1] : vector<16x32xf32> to vector<16xf32>
    %445 = vector.shape_cast %444 : vector<16xf32> to vector<16x1xf32>
    %cst_181 = arith.constant 3.200000e+01 : f32
    %446 = vector.broadcast %cst_181 : f32 to vector<16x1xf32>
    %447 = arith.divf %445, %446 : vector<16x1xf32>
    %448 = vector.broadcast %447 : vector<16x1xf32> to vector<16x32xf32>
    %449 = arith.subf %439, %448 : vector<16x32xf32>
    %450 = arith.mulf %449, %449 : vector<16x32xf32>
    %cst_182 = arith.constant dense<0.000000e+00> : vector<16xf32>
    %451 = vector.multi_reduction <add>, %450, %cst_182 [1] : vector<16x32xf32> to vector<16xf32>
    %452 = vector.shape_cast %451 : vector<16xf32> to vector<16x1xf32>
    %cst_183 = arith.constant 3.200000e+01 : f32
    %453 = vector.broadcast %cst_183 : f32 to vector<16x1xf32>
    %454 = arith.divf %452, %453 : vector<16x1xf32>
    %455 = vector.broadcast %447 : vector<16x1xf32> to vector<16x32xf32>
    %456 = arith.subf %439, %455 : vector<16x32xf32>
    %cst_184 = arith.constant 9.99999974E-6 : f32
    %457 = vector.broadcast %cst_184 : f32 to vector<16x1xf32>
    %458 = arith.addf %454, %457 : vector<16x1xf32>
    %459 = math.rsqrt %458 : vector<16x1xf32>
    %460 = vector.broadcast %459 : vector<16x1xf32> to vector<16x32xf32>
    %461 = arith.mulf %456, %460 : vector<16x32xf32>
    %462 = vector.broadcast %441 : vector<1x32xf32> to vector<16x32xf32>
    %463 = arith.mulf %461, %462 : vector<16x32xf32>
    %464 = vector.broadcast %443 : vector<1x32xf32> to vector<16x32xf32>
    %465 = arith.addf %463, %464 : vector<16x32xf32>
    %c1_185 = arith.constant 1 : index
    %c0_186 = arith.constant 0 : index
    %c0_187 = arith.constant 0 : index
    %466 = vector.load %arg4[%c1_185, %c0_186, %c0_187] : memref<2x96x64xf32, #tpu.memory_space<vmem>>, vector<1x32x64xf32>
    %467 = vector.shape_cast %466 : vector<1x32x64xf32> to vector<32x64xf32>
    %cst_188 = arith.constant dense<0.000000e+00> : vector<16x64xf32>
    %468 = tpu.matmul %465, %467, %cst_188 {dimension_numbers = #tpu.dot_dimension_numbers<[1], [0], [0], [1], [0, 0, 1, 1], [], []>} : vector<16x32xf32>, vector<32x64xf32>, vector<16x64xf32> -> vector<16x64xf32>
    %c1_189 = arith.constant 1 : index
    %c6_190 = arith.constant 6 : index
    %c0_191 = arith.constant 0 : index
    %469 = vector.load %arg2[%c1_189, %c6_190, %c0_191] : memref<2x7x128xf32, #tpu.memory_space<vmem>>, vector<1x1x64xf32>
    %470 = vector.shape_cast %469 : vector<1x1x64xf32> to vector<1x64xf32>
    %471 = vector.broadcast %470 : vector<1x64xf32> to vector<16x64xf32>
    %472 = arith.addf %468, %471 : vector<16x64xf32>
    %cst_192 = arith.constant 5.000000e-01 : f32
    %473 = vector.broadcast %cst_192 : f32 to vector<16x64xf32>
    %474 = arith.mulf %473, %472 : vector<16x64xf32>
    %cst_193 = arith.constant 0.707106769 : f32
    %475 = vector.broadcast %cst_193 : f32 to vector<16x64xf32>
    %476 = arith.mulf %472, %475 : vector<16x64xf32>
    %cst_194 = arith.constant 0.000000e+00 : f32
    %477 = vector.broadcast %cst_194 : f32 to vector<16x64xf32>
    %478 = arith.cmpf oge, %476, %477 : vector<16x64xf32>
    %cst_195 = arith.constant 0.000000e+00 : f32
    %479 = vector.broadcast %cst_195 : f32 to vector<16x64xf32>
    %480 = arith.subf %479, %476 : vector<16x64xf32>
    %481 = arith.select %478, %476, %480 : vector<16x64xi1>, vector<16x64xf32>
    %cst_196 = arith.constant 0.327591091 : f32
    %482 = vector.broadcast %cst_196 : f32 to vector<16x64xf32>
    %483 = arith.mulf %482, %481 : vector<16x64xf32>
    %cst_197 = arith.constant 1.000000e+00 : f32
    %484 = vector.broadcast %cst_197 : f32 to vector<16x64xf32>
    %485 = arith.addf %484, %483 : vector<16x64xf32>
    %cst_198 = arith.constant 1.000000e+00 : f32
    %486 = vector.broadcast %cst_198 : f32 to vector<16x64xf32>
    %487 = arith.divf %486, %485 : vector<16x64xf32>
    %cst_199 = arith.constant 1.06140542 : f32
    %488 = vector.broadcast %cst_199 : f32 to vector<16x64xf32>
    %489 = arith.mulf %488, %487 : vector<16x64xf32>
    %cst_200 = arith.constant 1.45315206 : f32
    %490 = vector.broadcast %cst_200 : f32 to vector<16x64xf32>
    %491 = arith.subf %489, %490 : vector<16x64xf32>
    %492 = arith.mulf %491, %487 : vector<16x64xf32>
    %cst_201 = arith.constant 1.42141378 : f32
    %493 = vector.broadcast %cst_201 : f32 to vector<16x64xf32>
    %494 = arith.addf %492, %493 : vector<16x64xf32>
    %495 = arith.mulf %494, %487 : vector<16x64xf32>
    %cst_202 = arith.constant 0.284496725 : f32
    %496 = vector.broadcast %cst_202 : f32 to vector<16x64xf32>
    %497 = arith.subf %495, %496 : vector<16x64xf32>
    %498 = arith.mulf %497, %487 : vector<16x64xf32>
    %cst_203 = arith.constant 0.254829586 : f32
    %499 = vector.broadcast %cst_203 : f32 to vector<16x64xf32>
    %500 = arith.addf %498, %499 : vector<16x64xf32>
    %501 = arith.mulf %500, %487 : vector<16x64xf32>
    %cst_204 = arith.constant 0.000000e+00 : f32
    %502 = vector.broadcast %cst_204 : f32 to vector<16x64xf32>
    %503 = arith.subf %502, %481 : vector<16x64xf32>
    %504 = arith.mulf %503, %481 : vector<16x64xf32>
    %505 = math.exp %504 : vector<16x64xf32>
    %506 = arith.mulf %501, %505 : vector<16x64xf32>
    %cst_205 = arith.constant 1.000000e+00 : f32
    %507 = vector.broadcast %cst_205 : f32 to vector<16x64xf32>
    %508 = arith.subf %507, %506 : vector<16x64xf32>
    %cst_206 = arith.constant 0.000000e+00 : f32
    %509 = vector.broadcast %cst_206 : f32 to vector<16x64xf32>
    %510 = arith.cmpf oge, %476, %509 : vector<16x64xf32>
    %cst_207 = arith.constant 0.000000e+00 : f32
    %511 = vector.broadcast %cst_207 : f32 to vector<16x64xf32>
    %512 = arith.subf %511, %508 : vector<16x64xf32>
    %513 = arith.select %510, %508, %512 : vector<16x64xi1>, vector<16x64xf32>
    %cst_208 = arith.constant 1.000000e+00 : f32
    %514 = vector.broadcast %cst_208 : f32 to vector<16x64xf32>
    %515 = arith.addf %514, %513 : vector<16x64xf32>
    %516 = arith.mulf %474, %515 : vector<16x64xf32>
    %c1_209 = arith.constant 1 : index
    %c32_210 = arith.constant 32 : index
    %c0_211 = arith.constant 0 : index
    %517 = vector.load %arg4[%c1_209, %c32_210, %c0_211] : memref<2x96x64xf32, #tpu.memory_space<vmem>>, vector<1x64x32xf32>
    %518 = vector.shape_cast %517 : vector<1x64x32xf32> to vector<64x32xf32>
    %cst_212 = arith.constant dense<0.000000e+00> : vector<16x32xf32>
    %519 = tpu.matmul %516, %518, %cst_212 {dimension_numbers = #tpu.dot_dimension_numbers<[1], [0], [0], [1], [0, 0, 1, 1], [], []>} : vector<16x64xf32>, vector<64x32xf32>, vector<16x32xf32> -> vector<16x32xf32>
    %c1_213 = arith.constant 1 : index
    %c5_214 = arith.constant 5 : index
    %c0_215 = arith.constant 0 : index
    %520 = vector.load %arg2[%c1_213, %c5_214, %c0_215] : memref<2x7x128xf32, #tpu.memory_space<vmem>>, vector<1x1x32xf32>
    %521 = vector.shape_cast %520 : vector<1x1x32xf32> to vector<1x32xf32>
    %522 = vector.broadcast %521 : vector<1x32xf32> to vector<16x32xf32>
    %523 = arith.addf %519, %522 : vector<16x32xf32>
    %524 = arith.addf %439, %523 : vector<16x32xf32>
    %c0_216 = arith.constant 0 : index
    %c0_217 = arith.constant 0 : index
    %525 = vector.load %arg5[%c0_216, %c0_217] : memref<16x32xf32, #tpu.memory_space<vmem>>, vector<16x32xf32>
    tpu.vector_store %arg5[%c0_216, %c0_217], %524 {strides = array<i32>} : memref<16x32xf32, #tpu.memory_space<vmem>>, vector<16x32xf32>,
    return
  }
  func.func @transform_0(%arg0: i32) -> (i32, i32) {
    %c0_i32 = arith.constant 0 : i32
    %c0_i32_0 = arith.constant 0 : i32
    %c0_i32_1 = arith.constant 0 : i32
    return %c0_i32, %c0_i32_0 : i32, i32
  }
  func.func @transform_1(%arg0: i32) -> (i32, i32, i32) {
    %c0_i32 = arith.constant 0 : i32
    %c0_i32_0 = arith.constant 0 : i32
    %c0_i32_1 = arith.constant 0 : i32
    %c0_i32_2 = arith.constant 0 : i32
    return %c0_i32, %c0_i32_0, %c0_i32_1 : i32, i32, i32
  }
  func.func @transform_2(%arg0: i32) -> (i32, i32, i32) {
    %c0_i32 = arith.constant 0 : i32
    %c0_i32_0 = arith.constant 0 : i32
    %c0_i32_1 = arith.constant 0 : i32
    %c0_i32_2 = arith.constant 0 : i32
    return %c0_i32, %c0_i32_0, %c0_i32_1 : i32, i32, i32
  }
  func.func @transform_3(%arg0: i32) -> (i32, i32, i32) {
    %c0_i32 = arith.constant 0 : i32
    %c0_i32_0 = arith.constant 0 : i32
    %c0_i32_1 = arith.constant 0 : i32
    %c0_i32_2 = arith.constant 0 : i32
    return %c0_i32, %c0_i32_0, %c0_i32_1 : i32, i32, i32
  }
  func.func @transform_4(%arg0: i32) -> (i32, i32) {
    %c0_i32 = arith.constant 0 : i32
    %c0_i32_0 = arith.constant 0 : i32
    %c0_i32_1 = arith.constant 0 : i32
    return %c0_i32, %c0_i32_0 : i32, i32
  }
  func.func @transform_5(%arg0: i32) -> (i32, i32, i32) {
    %c0_i32 = arith.constant 0 : i32
    %c0_i32_0 = arith.constant 0 : i32
    %c0_i32_1 = arith.constant 0 : i32
    %c0_i32_2 = arith.constant 0 : i32
    return %c0_i32, %c0_i32_0, %c0_i32_1 : i32, i32, i32
  }
}

</mosaic_0001>

<llo_original>
// kernel: transformer_forward.1
$region0: #{transformer_forward.1}
  #allocation0 [shape = 'u32[]', space=smem, size = 0x4, offset = 0x4, fixed_abs, tag = 'smem constant byte address 0x4 - core index']
  #allocation1 [shape = 'u32[144,128]{1,0:T(1,128)}', space=vmem, size = 0x12000, scoped, tag = 'internal scratch']
  %s0 = inlined_call_operand.vmem [shape: f32[16,32], index: 0, kind: input, shape index: {}]
  %s1 = inlined_call_operand.vmem [shape: f32[2,7,128], index: 1, kind: input, shape index: {}]
  %s2 = inlined_call_operand.vmem [shape: f32[2,32,192], index: 2, kind: input, shape index: {}]
  %s3 = inlined_call_operand.vmem [shape: f32[2,96,64], index: 3, kind: input, shape index: {}]
  %s4 = inlined_call_operand.hbm [shape: f32[16,32], index: 4, kind: output, shape index: {0}]
  %s5 = inlined_call_operand.hbm [shape: f32[16,8,8], index: 5, kind: output, shape index: {1}]
  %6 = xla_tuple %s4, %s5
  %s7 = sld [smem:[#allocation0]]
  $region34: #{transformer_forward.1} parent=0
    _
  %s9 = ssub.s32 1, %s7
  %s10 = scalar_select 0, %s9, %s7
  $region1: #{transformer_forward.1} parent=0
    #allocation2 [shape = 'u8[8192]{0}', space=vmem, size = 0x2000, scoped, tag = 'output window, operand 0, single buffered']
    #allocation3 [shape = 's32[1]{0}', space=sflag, size = 0x4, scoped, tag = 'scoped memory for transformer_forward.1']
    #allocation4 [shape = 'u8[65536]{0}', space=vmem, size = 0x10000, scoped, tag = 'output window, operand 1, single buffered']
    #allocation5 [shape = 's32[1]{0}', space=sflag, size = 0x4, scoped, tag = 'scoped memory for transformer_forward.1']
    %11 = vsyncpa [#allocation3], 0
    %12 = vsyncpa [#allocation5], 0
    // Predicated region
    $region2: #{transformer_forward.1} parent=1 // pred_check
      _
    $region3: #{transformer_forward.1} parent=1 // pred_check_branch
      %14 = sbr.rel (0) target = $region5
    $region4: #{transformer_forward.1} parent=1 // pred_region
      _
    $region5: #{transformer_forward.1} parent=1 // pred_fallthru
      _
    // Predicated region
    $region6: #{transformer_forward.1} parent=1 // pred_check
      _
    $region7: #{transformer_forward.1} parent=1 // pred_check_branch
      %16 = sbr.rel (0) target = $region9
    $region8: #{transformer_forward.1} parent=1 // pred_region
      _
    $region9: #{transformer_forward.1} parent=1 // pred_fallthru
      _
    // Predicated region
    $region10: #{transformer_forward.1} parent=1 // pred_check
      _
    $region11: #{transformer_forward.1} parent=1 // pred_check_branch
      %18 = sbr.rel (0) target = $region13
    $region12: #{transformer_forward.1} parent=1 // pred_region
      _
    $region13: #{transformer_forward.1} parent=1 // pred_fallthru
      _
    // Predicated region
    $region14: #{transformer_forward.1} parent=1 // pred_check
      _
    $region15: #{transformer_forward.1} parent=1 // pred_check_branch
      %20 = sbr.rel (0) target = $region17
    $region16: #{transformer_forward.1} parent=1 // pred_region
      _
    $region17: #{transformer_forward.1} parent=1 // pred_fallthru
      _
    %v21 = vld [vmem:[%s0] sm:$0xff]
    %v22 = vld [vmem:[%s0 + $0x8] sm:$0xff]
    %v23 = vld [vmem:[%s1] sm:$0x1]
    %v24 = vld [vmem:[%s1 + $0x1] sm:$0x1]
    %vm25 = vcmask 261120
    %v26 = vsel %vm25, %v21, 0.0
    %27 = vadd.xlane.f32.xlu0 %v26
    %v28 = vpop.xlane.xlu0 %27
    %v29 = vsel %vm25, %v22, 0.0
    %30 = vadd.xlane.f32.xlu0 %v29
    %v31 = vpop.xlane.xlu0 %30
    %v32 = vrcp.pop 32.0
    %v33 = vmul.f32 %v28, %v32
    %v34 = vmul.f32 %v31, %v32
    %v35 = vsub.f32 %v21, %v33
    %v36 = vsub.f32 %v22, %v34
    %v37 = vmul.f32 %v35, %v35
    %v38 = vmul.f32 %v36, %v36
    %v39 = vsel %vm25, %v37, 0.0
    %40 = vadd.xlane.f32.xlu0 %v39
    %v41 = vpop.xlane.xlu0 %40
    %v42 = vsel %vm25, %v38, 0.0
    %43 = vadd.xlane.f32.xlu0 %v42
    %v44 = vpop.xlane.xlu0 %43
    %v45 = vmul.f32 %v41, %v32
    %v46 = vmul.f32 %v44, %v32
    %v47 = vadd.f32 %v45, 1e-05
    %v48 = vadd.f32 %v46, 1e-05
    %v49 = vrsqrt.pop %v47
    %v50 = vrsqrt.pop %v48
    %v51 = vmul.f32 %v35, %v49
    %v52 = vmul.f32 %v36, %v50
    %v53 = vlaneseq
    %v54 = vshrl.u32 %v53, 7
    %v55 = vsub.s32 0, %v54
    %v56 = vrot.slane %v23, %v55
    %v57 = vmul.f32 %v51, %v56
    %v58 = vmul.f32 %v52, %v56
    %v59 = vlaneseq
    %v60 = vshrl.u32 %v59, 7
    %v61 = vsub.s32 0, %v60
    %v62 = vrot.slane %v24, %v61
    %v63 = vadd.f32 %v57, %v62
    %v64 = vadd.f32 %v58, %v62
    %v65 = vld [vmem:[%s2] sm:$0xff]
    %v66 = vld [vmem:[%s2 + $0x8] sm:$0xff]
    %v67 = vld [vmem:[%s2 + $0x10] sm:$0xff]
    %v68 = vld [vmem:[%s2 + $0x18] sm:$0xff]
    %v69 = vld [vmem:[%s2 + $0x20] sm:$0xff]
    %v70 = vld [vmem:[%s2 + $0x28] sm:$0xff]
    %v71 = vld [vmem:[%s2 + $0x30] sm:$0xff]
    %v72 = vld [vmem:[%s2 + $0x38] sm:$0xff]
    %v74 = vsel %vm25, %v63, 0
    %v77 = vsel %vm25, %v64, 0
    %79 = vmatprep.subr.mxu0 %v66
    %80 = vmatpush1.msra.mxu0 %v65
    %81 = vmatprep.subr.mxu0 %v68
    %82 = vmatpush1.msra.mxu0 %v67
    %83 = vmatprep.subr.mxu0 %v70
    %84 = vmatpush1.msra.mxu0 %v69
    %85 = vmatprep.subr.mxu0 %v72
    %86 = vmatpush1.msra.mxu0 %v71
    %87 = vmatprep.subr.mxu0 0.0
    %88 = vmatpush1.msra.mxu0 0.0
    %89 = vmatprep.subr.mxu0 0.0
    %90 = vmatpush1.msra.mxu0 0.0
    %91 = vmatprep.subr.mxu0 0.0
    %92 = vmatpush1.msra.mxu0 0.0
    %93 = vmatprep.subr.mxu0 0.0
    %94 = vmatpush1.msra.mxu0 0.0
    %95 = vmatprep.subr.mxu0 0.0
    %96 = vmatpush1.msra.mxu0 0.0
    %97 = vmatprep.subr.mxu0 0.0
    %98 = vmatpush1.msra.mxu0 0.0
    %99 = vmatprep.subr.mxu0 0.0
    %100 = vmatpush1.msra.mxu0 0.0
    %101 = vmatprep.subr.mxu0 0.0
    %102 = vmatpush1.msra.mxu0 0.0
    %103 = vmatprep.subr.mxu0 0.0
    %104 = vmatpush1.msra.mxu0 0.0
    %105 = vmatprep.subr.mxu0 0.0
    %106 = vmatpush1.msra.mxu0 0.0
    %107 = vmatprep.subr.mxu0 0.0
    %108 = vmatpush1.msra.mxu0 0.0
    %109 = vmatprep.subr.mxu0 0.0
    %110 = vmatpush1.msra.mxu0 0.0
    %111 = vmatprep.subr.mxu0 0.0
    %112 = vmatpush1.msra.mxu0 0.0
    %113 = vmatprep.subr.mxu0 0.0
    %114 = vmatpush1.msra.mxu0 0.0
    %115 = vmatprep.subr.mxu0 0.0
    %116 = vmatpush1.msra.mxu0 0.0
    %117 = vmatprep.subr.mxu0 0.0
    %118 = vmatpush1.msra.mxu0 0.0
    %119 = vmatprep.subr.mxu0 0.0
    %120 = vmatpush1.msra.mxu0 0.0
    %121 = vmatprep.subr.mxu0 0.0
    %122 = vmatpush1.msra.mxu0 0.0
    %123 = vmatprep.subr.mxu0 0.0
    %124 = vmatpush1.msra.mxu0 0.0
    %125 = vmatprep.subr.mxu0 0.0
    %126 = vmatpush1.msra.mxu0 0.0
    %127 = vmatprep.subr.mxu0 0.0
    %128 = vmatpush1.msra.mxu0 0.0
    %129 = vmatprep.subr.mxu0 0.0
    %130 = vmatpush1.msra.mxu0 0.0
    %131 = vmatprep.subr.mxu0 0.0
    %132 = vmatpush1.msra.mxu0 0.0
    %133 = vmatprep.subr.mxu0 0.0
    %134 = vmatpush1.msra.mxu0 0.0
    %135 = vmatprep.subr.mxu0 0.0
    %136 = vmatpush1.msra.mxu0 0.0
    %137 = vmatprep.subr.mxu0 0.0
    %138 = vmatpush1.msra.mxu0 0.0
    %139 = vmatprep.subr.mxu0 0.0
    %140 = vmatpush1.msra.mxu0 0.0
    %141 = vmatprep.subr.mxu0 0.0
    %142 = vmatpush1.msra.mxu0 0.0
    %143 = vmatprep.mubr.f32.mxu0 0.0
    %144 = vmatmul.mubr.f32.gmra.mrb[0].mxu0 %v74
    %v145 = vpop.f32.mrb[0].mxu0
    %v146 = vadd.f32 0.0, %v145
    %v147 = vpop.f32.mrb[0].mxu0
    %v148 = vadd.f32 0.0, %v147
    %149 = vmatprep.mubr.f32.mxu0 0.0
    %150 = vmatmul.mubr.f32.gmra.mrb[0].mxu0 %v77
    %v151 = vpop.f32.mrb[0].mxu0
    %v152 = vadd.f32 0.0, %v151
    %v153 = vpop.f32.mrb[0].mxu0
    %v154 = vadd.f32 0.0, %v153
    %155 = vdwg.mxu0
    %157 = vrot.lane.b32.xlu0 %v146, 96
    %v158 = vpop.permute.xlu0 %157
    %vm159 = vcmask 64512
    %v160 = vsel %vm159, %v146, 0
    %v162 = vsel %vm159, %v158, 0
    %164 = vmatprep.subr.mxu0 0.0
    %165 = vmatpush1.xpose.msra.mxu0 %v162
    %166 = vmatprep.subr.mxu0 0.0
    %167 = vmatpush1.xpose.msra.mxu0 0.0
    %168 = vmatprep.subr.mxu0 0.0
    %169 = vmatpush1.xpose.msra.mxu0 0.0
    %170 = vmatprep.subr.mxu0 0.0
    %171 = vmatpush1.xpose.msra.mxu0 0.0
    %172 = vmatprep.subr.mxu0 0.0
    %173 = vmatpush1.xpose.msra.mxu0 0.0
    %174 = vmatprep.subr.mxu0 0.0
    %175 = vmatpush1.xpose.msra.mxu0 0.0
    %176 = vmatprep.subr.mxu0 0.0
    %177 = vmatpush1.xpose.msra.mxu0 0.0
    %178 = vmatprep.subr.mxu0 0.0
    %179 = vmatpush1.xpose.msra.mxu0 0.0
    %180 = vmatprep.subr.mxu0 0.0
    %181 = vmatpush1.xpose.msra.mxu0 0.0
    %182 = vmatprep.subr.mxu0 0.0
    %183 = vmatpush1.xpose.msra.mxu0 0.0
    %184 = vmatprep.subr.mxu0 0.0
    %185 = vmatpush1.xpose.msra.mxu0 0.0
    %186 = vmatprep.subr.mxu0 0.0
    %187 = vmatpush1.xpose.msra.mxu0 0.0
    %188 = vmatprep.subr.mxu0 0.0
    %189 = vmatpush1.xpose.msra.mxu0 0.0
    %190 = vmatprep.subr.mxu0 0.0
    %191 = vmatpush1.xpose.msra.mxu0 0.0
    %192 = vmatprep.subr.mxu0 0.0
    %193 = vmatpush1.xpose.msra.mxu0 0.0
    %194 = vmatprep.subr.mxu0 0.0
    %195 = vmatpush1.xpose.msra.mxu0 0.0
    %196 = vmatprep.subr.mxu0 0.0
    %197 = vmatpush1.xpose.msra.mxu0 0.0
    %198 = vmatprep.subr.mxu0 0.0
    %199 = vmatpush1.xpose.msra.mxu0 0.0
    %200 = vmatprep.subr.mxu0 0.0
    %201 = vmatpush1.xpose.msra.mxu0 0.0
    %202 = vmatprep.subr.mxu0 0.0
    %203 = vmatpush1.xpose.msra.mxu0 0.0
    %204 = vmatprep.subr.mxu0 0.0
    %205 = vmatpush1.xpose.msra.mxu0 0.0
    %206 = vmatprep.subr.mxu0 0.0
    %207 = vmatpush1.xpose.msra.mxu0 0.0
    %208 = vmatprep.subr.mxu0 0.0
    %209 = vmatpush1.xpose.msra.mxu0 0.0
    %210 = vmatprep.subr.mxu0 0.0
    %211 = vmatpush1.xpose.msra.mxu0 0.0
    %212 = vmatprep.subr.mxu0 0.0
    %213 = vmatpush1.xpose.msra.mxu0 0.0
    %214 = vmatprep.subr.mxu0 0.0
    %215 = vmatpush1.xpose.msra.mxu0 0.0
    %216 = vmatprep.subr.mxu0 0.0
    %217 = vmatpush1.xpose.msra.mxu0 0.0
    %218 = vmatprep.subr.mxu0 0.0
    %219 = vmatpush1.xpose.msra.mxu0 0.0
    %220 = vmatprep.subr.mxu0 0.0
    %221 = vmatpush1.xpose.msra.mxu0 0.0
    %222 = vmatprep.subr.mxu0 0.0
    %223 = vmatpush1.xpose.msra.mxu0 0.0
    %224 = vmatprep.subr.mxu0 0.0
    %225 = vmatpush1.xpose.msra.mxu0 0.0
    %226 = vmatprep.subr.mxu0 0.0
    %227 = vmatpush1.xpose.msra.mxu0 0.0
    %228 = vmatprep.mubr.f32.mxu0 0.0
    %229 = vmatmul.mubr.f32.gmra.mrb[0].mxu0 %v160
    %v230 = vpop.f32.mrb[0].mxu0
    %v231 = vadd.f32 0.0, %v230
    %v232 = vpop.f32.mrb[0].mxu0
    %233 = vdwg.mxu0
    %v234 = vsel %vm159, %v231, -inf
    %235 = vmax.xlane.f32.xlu0 %v234
    %v236 = vpop.xlane.xlu0 %235
    %v237 = vsub.f32 %v231, %v236
    %v238 = vmul.f32 %v237, 1.442695
    %v239 = vpow.pop %v238
    %v240 = vsel %vm159, %v239, 0.0
    %241 = vadd.xlane.f32.xlu0 %v240
    %v242 = vpop.xlane.xlu0 %241
    %v243 = vrcp.pop %v242
    %v244 = vmul.f32 %v239, %v243
    %245 = vst.msk [vmem:[#allocation4] sm:$0xff] %vm159, %v244
    %246 = vrot.lane.b32.xlu0 %v146, 120
    %v247 = vpop.permute.xlu0 %246
    %248 = vrot.lane.b32.xlu0 %v146, 88
    %v249 = vpop.permute.xlu0 %248
    %v250 = vsel %vm159, %v247, 0
    %v252 = vsel %vm159, %v249, 0
    %254 = vmatprep.subr.mxu0 0.0
    %255 = vmatpush1.xpose.msra.mxu0 %v252
    %256 = vmatprep.subr.mxu0 0.0
    %257 = vmatpush1.xpose.msra.mxu0 0.0
    %258 = vmatprep.subr.mxu0 0.0
    %259 = vmatpush1.xpose.msra.mxu0 0.0
    %260 = vmatprep.subr.mxu0 0.0
    %261 = vmatpush1.xpose.msra.mxu0 0.0
    %262 = vmatprep.subr.mxu0 0.0
    %263 = vmatpush1.xpose.msra.mxu0 0.0
    %264 = vmatprep.subr.mxu0 0.0
    %265 = vmatpush1.xpose.msra.mxu0 0.0
    %266 = vmatprep.subr.mxu0 0.0
    %267 = vmatpush1.xpose.msra.mxu0 0.0
    %268 = vmatprep.subr.mxu0 0.0
    %269 = vmatpush1.xpose.msra.mxu0 0.0
    %270 = vmatprep.subr.mxu0 0.0
    %271 = vmatpush1.xpose.msra.mxu0 0.0
    %272 = vmatprep.subr.mxu0 0.0
    %273 = vmatpush1.xpose.msra.mxu0 0.0
    %274 = vmatprep.subr.mxu0 0.0
    %275 = vmatpush1.xpose.msra.mxu0 0.0
    %276 = vmatprep.subr.mxu0 0.0
    %277 = vmatpush1.xpose.msra.mxu0 0.0
    %278 = vmatprep.subr.mxu0 0.0
    %279 = vmatpush1.xpose.msra.mxu0 0.0
    %280 = vmatprep.subr.mxu0 0.0
    %281 = vmatpush1.xpose.msra.mxu0 0.0
    %282 = vmatprep.subr.mxu0 0.0
    %283 = vmatpush1.xpose.msra.mxu0 0.0
    %284 = vmatprep.subr.mxu0 0.0
    %285 = vmatpush1.xpose.msra.mxu0 0.0
    %286 = vmatprep.subr.mxu0 0.0
    %287 = vmatpush1.xpose.msra.mxu0 0.0
    %288 = vmatprep.subr.mxu0 0.0
    %289 = vmatpush1.xpose.msra.mxu0 0.0
    %290 = vmatprep.subr.mxu0 0.0
    %291 = vmatpush1.xpose.msra.mxu0 0.0
    %292 = vmatprep.subr.mxu0 0.0
    %293 = vmatpush1.xpose.msra.mxu0 0.0
    %294 = vmatprep.subr.mxu0 0.0
    %295 = vmatpush1.xpose.msra.mxu0 0.0
    %296 = vmatprep.subr.mxu0 0.0
    %297 = vmatpush1.xpose.msra.mxu0 0.0
    %298 = vmatprep.subr.mxu0 0.0
    %299 = vmatpush1.xpose.msra.mxu0 0.0
    %300 = vmatprep.subr.mxu0 0.0
    %301 = vmatpush1.xpose.msra.mxu0 0.0
    %302 = vmatprep.subr.mxu0 0.0
    %303 = vmatpush1.xpose.msra.mxu0 0.0
    %304 = vmatprep.subr.mxu0 0.0
    %305 = vmatpush1.xpose.msra.mxu0 0.0
    %306 = vmatprep.subr.mxu0 0.0
    %307 = vmatpush1.xpose.msra.mxu0 0.0
    %308 = vmatprep.subr.mxu0 0.0
    %309 = vmatpush1.xpose.msra.mxu0 0.0
    %310 = vmatprep.subr.mxu0 0.0
    %311 = vmatpush1.xpose.msra.mxu0 0.0
    %312 = vmatprep.subr.mxu0 0.0
    %313 = vmatpush1.xpose.msra.mxu0 0.0
    %314 = vmatprep.subr.mxu0 0.0
    %315 = vmatpush1.xpose.msra.mxu0 0.0
    %316 = vmatprep.subr.mxu0 0.0
    %317 = vmatpush1.xpose.msra.mxu0 0.0
    %318 = vmatprep.mubr.f32.mxu0 0.0
    %319 = vmatmul.mubr.f32.gmra.mrb[0].mxu0 %v250
    %v320 = vpop.f32.mrb[0].mxu0
    %v321 = vadd.f32 0.0, %v320
    %v322 = vpop.f32.mrb[0].mxu0
    %323 = vdwg.mxu0
    %v324 = vsel %vm159, %v321, -inf
    %325 = vmax.xlane.f32.xlu0 %v324
    %v326 = vpop.xlane.xlu0 %325
    %v327 = vsub.f32 %v321, %v326
    %v328 = vmul.f32 %v327, 1.442695
    %v329 = vpow.pop %v328
    %v330 = vsel %vm159, %v329, 0.0
    %331 = vadd.xlane.f32.xlu0 %v330
    %v332 = vpop.xlane.xlu0 %331
    %v333 = vrcp.pop %v332
    %v334 = vmul.f32 %v329, %v333
    %s335 = scalar_lea.vmem [#allocation4], 8
    %336 = vst.msk [vmem:[%s335] sm:$0xff] %vm159, %v334
    %337 = vrot.lane.b32.xlu0 %v146, 32
    %v338 = vpop.permute.xlu0 %337
    %v341 = vsel %vm159, %v334, 0
    %343 = vmatprep.subr.mxu0 0.0
    %344 = vmatpush1.msra.mxu0 %v338
    %345 = vmatprep.subr.mxu0 0.0
    %346 = vmatpush1.msra.mxu0 0.0
    %347 = vmatprep.subr.mxu0 0.0
    %348 = vmatpush1.msra.mxu0 0.0
    %349 = vmatprep.subr.mxu0 0.0
    %350 = vmatpush1.msra.mxu0 0.0
    %351 = vmatprep.subr.mxu0 0.0
    %352 = vmatpush1.msra.mxu0 0.0
    %353 = vmatprep.subr.mxu0 0.0
    %354 = vmatpush1.msra.mxu0 0.0
    %355 = vmatprep.subr.mxu0 0.0
    %356 = vmatpush1.msra.mxu0 0.0
    %357 = vmatprep.subr.mxu0 0.0
    %358 = vmatpush1.msra.mxu0 0.0
    %359 = vmatprep.subr.mxu0 0.0
    %360 = vmatpush1.msra.mxu0 0.0
    %361 = vmatprep.subr.mxu0 0.0
    %362 = vmatpush1.msra.mxu0 0.0
    %363 = vmatprep.subr.mxu0 0.0
    %364 = vmatpush1.msra.mxu0 0.0
    %365 = vmatprep.subr.mxu0 0.0
    %366 = vmatpush1.msra.mxu0 0.0
    %367 = vmatprep.subr.mxu0 0.0
    %368 = vmatpush1.msra.mxu0 0.0
    %369 = vmatprep.subr.mxu0 0.0
    %370 = vmatpush1.msra.mxu0 0.0
    %371 = vmatprep.subr.mxu0 0.0
    %372 = vmatpush1.msra.mxu0 0.0
    %373 = vmatprep.subr.mxu0 0.0
    %374 = vmatpush1.msra.mxu0 0.0
    %375 = vmatprep.subr.mxu0 0.0
    %376 = vmatpush1.msra.mxu0 0.0
    %377 = vmatprep.subr.mxu0 0.0
    %378 = vmatpush1.msra.mxu0 0.0
    %379 = vmatprep.subr.mxu0 0.0
    %380 = vmatpush1.msra.mxu0 0.0
    %381 = vmatprep.subr.mxu0 0.0
    %382 = vmatpush1.msra.mxu0 0.0
    %383 = vmatprep.subr.mxu0 0.0
    %384 = vmatpush1.msra.mxu0 0.0
    %385 = vmatprep.subr.mxu0 0.0
    %386 = vmatpush1.msra.mxu0 0.0
    %387 = vmatprep.subr.mxu0 0.0
    %388 = vmatpush1.msra.mxu0 0.0
    %389 = vmatprep.subr.mxu0 0.0
    %390 = vmatpush1.msra.mxu0 0.0
    %391 = vmatprep.subr.mxu0 0.0
    %392 = vmatpush1.msra.mxu0 0.0
    %393 = vmatprep.subr.mxu0 0.0
    %394 = vmatpush1.msra.mxu0 0.0
    %395 = vmatprep.subr.mxu0 0.0
    %396 = vmatpush1.msra.mxu0 0.0
    %397 = vmatprep.subr.mxu0 0.0
    %398 = vmatpush1.msra.mxu0 0.0
    %399 = vmatprep.subr.mxu0 0.0
    %400 = vmatpush1.msra.mxu0 0.0
    %401 = vmatprep.subr.mxu0 0.0
    %402 = vmatpush1.msra.mxu0 0.0
    %403 = vmatprep.subr.mxu0 0.0
    %404 = vmatpush1.msra.mxu0 0.0
    %405 = vmatprep.subr.mxu0 0.0
    %406 = vmatpush1.msra.mxu0 0.0
    %407 = vmatprep.mubr.f32.mxu0 0.0
    %408 = vmatmul.mubr.f32.gmra.mrb[0].mxu0 %v341
    %v409 = vpop.f32.mrb[0].mxu0
    %v410 = vadd.f32 0.0, %v409
    %v411 = vpop.f32.mrb[0].mxu0
    %412 = vdwg.mxu0
    %413 = vrot.lane.b32.xlu0 %v146, 64
    %v414 = vpop.permute.xlu0 %413
    %v417 = vsel %vm159, %v244, 0
    %419 = vmatprep.subr.mxu0 0.0
    %420 = vmatpush1.msra.mxu0 %v414
    %421 = vmatprep.subr.mxu0 0.0
    %422 = vmatpush1.msra.mxu0 0.0
    %423 = vmatprep.subr.mxu0 0.0
    %424 = vmatpush1.msra.mxu0 0.0
    %425 = vmatprep.subr.mxu0 0.0
    %426 = vmatpush1.msra.mxu0 0.0
    %427 = vmatprep.subr.mxu0 0.0
    %428 = vmatpush1.msra.mxu0 0.0
    %429 = vmatprep.subr.mxu0 0.0
    %430 = vmatpush1.msra.mxu0 0.0
    %431 = vmatprep.subr.mxu0 0.0
    %432 = vmatpush1.msra.mxu0 0.0
    %433 = vmatprep.subr.mxu0 0.0
    %434 = vmatpush1.msra.mxu0 0.0
    %435 = vmatprep.subr.mxu0 0.0
    %436 = vmatpush1.msra.mxu0 0.0
    %437 = vmatprep.subr.mxu0 0.0
    %438 = vmatpush1.msra.mxu0 0.0
    %439 = vmatprep.subr.mxu0 0.0
    %440 = vmatpush1.msra.mxu0 0.0
    %441 = vmatprep.subr.mxu0 0.0
    %442 = vmatpush1.msra.mxu0 0.0
    %443 = vmatprep.subr.mxu0 0.0
    %444 = vmatpush1.msra.mxu0 0.0
    %445 = vmatprep.subr.mxu0 0.0
    %446 = vmatpush1.msra.mxu0 0.0
    %447 = vmatprep.subr.mxu0 0.0
    %448 = vmatpush1.msra.mxu0 0.0
    %449 = vmatprep.subr.mxu0 0.0
    %450 = vmatpush1.msra.mxu0 0.0
    %451 = vmatprep.subr.mxu0 0.0
    %452 = vmatpush1.msra.mxu0 0.0
    %453 = vmatprep.subr.mxu0 0.0
    %454 = vmatpush1.msra.mxu0 0.0
    %455 = vmatprep.subr.mxu0 0.0
    %456 = vmatpush1.msra.mxu0 0.0
    %457 = vmatprep.subr.mxu0 0.0
    %458 = vmatpush1.msra.mxu0 0.0
    %459 = vmatprep.subr.mxu0 0.0
    %460 = vmatpush1.msra.mxu0 0.0
    %461 = vmatprep.subr.mxu0 0.0
    %462 = vmatpush1.msra.mxu0 0.0
    %463 = vmatprep.subr.mxu0 0.0
    %464 = vmatpush1.msra.mxu0 0.0
    %465 = vmatprep.subr.mxu0 0.0
    %466 = vmatpush1.msra.mxu0 0.0
    %467 = vmatprep.subr.mxu0 0.0
    %468 = vmatpush1.msra.mxu0 0.0
    %469 = vmatprep.subr.mxu0 0.0
    %470 = vmatpush1.msra.mxu0 0.0
    %471 = vmatprep.subr.mxu0 0.0
    %472 = vmatpush1.msra.mxu0 0.0
    %473 = vmatprep.subr.mxu0 0.0
    %474 = vmatpush1.msra.mxu0 0.0
    %475 = vmatprep.subr.mxu0 0.0
    %476 = vmatpush1.msra.mxu0 0.0
    %477 = vmatprep.subr.mxu0 0.0
    %478 = vmatpush1.msra.mxu0 0.0
    %479 = vmatprep.subr.mxu0 0.0
    %480 = vmatpush1.msra.mxu0 0.0
    %481 = vmatprep.subr.mxu0 0.0
    %482 = vmatpush1.msra.mxu0 0.0
    %483 = vmatprep.mubr.f32.mxu0 0.0
    %484 = vmatmul.mubr.f32.gmra.mrb[0].mxu0 %v417
    %v485 = vpop.f32.mrb[0].mxu0
    %v486 = vadd.f32 %v410, %v485
    %v487 = vpop.f32.mrb[0].mxu0
    %488 = vdwg.mxu0
    %489 = vrot.lane.b32.xlu0 %v146, 112
    %v490 = vpop.permute.xlu0 %489
    %491 = vrot.lane.b32.xlu0 %v146, 80
    %v492 = vpop.permute.xlu0 %491
    %v493 = vsel %vm159, %v490, 0
    %v495 = vsel %vm159, %v492, 0
    %497 = vmatprep.subr.mxu0 0.0
    %498 = vmatpush1.xpose.msra.mxu0 %v495
    %499 = vmatprep.subr.mxu0 0.0
    %500 = vmatpush1.xpose.msra.mxu0 0.0
    %501 = vmatprep.subr.mxu0 0.0
    %502 = vmatpush1.xpose.msra.mxu0 0.0
    %503 = vmatprep.subr.mxu0 0.0
    %504 = vmatpush1.xpose.msra.mxu0 0.0
    %505 = vmatprep.subr.mxu0 0.0
    %506 = vmatpush1.xpose.msra.mxu0 0.0
    %507 = vmatprep.subr.mxu0 0.0
    %508 = vmatpush1.xpose.msra.mxu0 0.0
    %509 = vmatprep.subr.mxu0 0.0
    %510 = vmatpush1.xpose.msra.mxu0 0.0
    %511 = vmatprep.subr.mxu0 0.0
    %512 = vmatpush1.xpose.msra.mxu0 0.0
    %513 = vmatprep.subr.mxu0 0.0
    %514 = vmatpush1.xpose.msra.mxu0 0.0
    %515 = vmatprep.subr.mxu0 0.0
    %516 = vmatpush1.xpose.msra.mxu0 0.0
    %517 = vmatprep.subr.mxu0 0.0
    %518 = vmatpush1.xpose.msra.mxu0 0.0
    %519 = vmatprep.subr.mxu0 0.0
    %520 = vmatpush1.xpose.msra.mxu0 0.0
    %521 = vmatprep.subr.mxu0 0.0
    %522 = vmatpush1.xpose.msra.mxu0 0.0
    %523 = vmatprep.subr.mxu0 0.0
    %524 = vmatpush1.xpose.msra.mxu0 0.0
    %525 = vmatprep.subr.mxu0 0.0
    %526 = vmatpush1.xpose.msra.mxu0 0.0
    %527 = vmatprep.subr.mxu0 0.0
    %528 = vmatpush1.xpose.msra.mxu0 0.0
    %529 = vmatprep.subr.mxu0 0.0
    %530 = vmatpush1.xpose.msra.mxu0 0.0
    %531 = vmatprep.subr.mxu0 0.0
    %532 = vmatpush1.xpose.msra.mxu0 0.0
    %533 = vmatprep.subr.mxu0 0.0
    %534 = vmatpush1.xpose.msra.mxu0 0.0
    %535 = vmatprep.subr.mxu0 0.0
    %536 = vmatpush1.xpose.msra.mxu0 0.0
    %537 = vmatprep.subr.mxu0 0.0
    %538 = vmatpush1.xpose.msra.mxu0 0.0
    %539 = vmatprep.subr.mxu0 0.0
    %540 = vmatpush1.xpose.msra.mxu0 0.0
    %541 = vmatprep.subr.mxu0 0.0
    %542 = vmatpush1.xpose.msra.mxu0 0.0
    %543 = vmatprep.subr.mxu0 0.0
    %544 = vmatpush1.xpose.msra.mxu0 0.0
    %545 = vmatprep.subr.mxu0 0.0
    %546 = vmatpush1.xpose.msra.mxu0 0.0
    %547 = vmatprep.subr.mxu0 0.0
    %548 = vmatpush1.xpose.msra.mxu0 0.0
    %549 = vmatprep.subr.mxu0 0.0
    %550 = vmatpush1.xpose.msra.mxu0 0.0
    %551 = vmatprep.subr.mxu0 0.0
    %552 = vmatpush1.xpose.msra.mxu0 0.0
    %553 = vmatprep.subr.mxu0 0.0
    %554 = vmatpush1.xpose.msra.mxu0 0.0
    %555 = vmatprep.subr.mxu0 0.0
    %556 = vmatpush1.xpose.msra.mxu0 0.0
    %557 = vmatprep.subr.mxu0 0.0
    %558 = vmatpush1.xpose.msra.mxu0 0.0
    %559 = vmatprep.subr.mxu0 0.0
    %560 = vmatpush1.xpose.msra.mxu0 0.0
    %561 = vmatprep.mubr.f32.mxu0 0.0
    %562 = vmatmul.mubr.f32.gmra.mrb[0].mxu0 %v493
    %v563 = vpop.f32.mrb[0].mxu0
    %v564 = vadd.f32 0.0, %v563
    %v565 = vpop.f32.mrb[0].mxu0
    %566 = vdwg.mxu0
    %v567 = vsel %vm159, %v564, -inf
    %568 = vmax.xlane.f32.xlu0 %v567
    %v569 = vpop.xlane.xlu0 %568
    %v570 = vsub.f32 %v564, %v569
    %v571 = vmul.f32 %v570, 1.442695
    %v572 = vpow.pop %v571
    %v573 = vsel %vm159, %v572, 0.0
    %574 = vadd.xlane.f32.xlu0 %v573
    %v575 = vpop.xlane.xlu0 %574
    %v576 = vrcp.pop %v575
    %v577 = vmul.f32 %v572, %v576
    %s578 = scalar_lea.vmem [#allocation4], 16
    %579 = vst.msk [vmem:[%s578] sm:$0xff] %vm159, %v577
    %v581 = vsel %vm159, %v577, 0
    %583 = vmatprep.subr.mxu0 0.0
    %584 = vmatpush1.msra.mxu0 %v148
    %585 = vmatprep.subr.mxu0 0.0
    %586 = vmatpush1.msra.mxu0 0.0
    %587 = vmatprep.subr.mxu0 0.0
    %588 = vmatpush1.msra.mxu0 0.0
    %589 = vmatprep.subr.mxu0 0.0
    %590 = vmatpush1.msra.mxu0 0.0
    %591 = vmatprep.subr.mxu0 0.0
    %592 = vmatpush1.msra.mxu0 0.0
    %593 = vmatprep.subr.mxu0 0.0
    %594 = vmatpush1.msra.mxu0 0.0
    %595 = vmatprep.subr.mxu0 0.0
    %596 = vmatpush1.msra.mxu0 0.0
    %597 = vmatprep.subr.mxu0 0.0
    %598 = vmatpush1.msra.mxu0 0.0
    %599 = vmatprep.subr.mxu0 0.0
    %600 = vmatpush1.msra.mxu0 0.0
    %601 = vmatprep.subr.mxu0 0.0
    %602 = vmatpush1.msra.mxu0 0.0
    %603 = vmatprep.subr.mxu0 0.0
    %604 = vmatpush1.msra.mxu0 0.0
    %605 = vmatprep.subr.mxu0 0.0
    %606 = vmatpush1.msra.mxu0 0.0
    %607 = vmatprep.subr.mxu0 0.0
    %608 = vmatpush1.msra.mxu0 0.0
    %609 = vmatprep.subr.mxu0 0.0
    %610 = vmatpush1.msra.mxu0 0.0
    %611 = vmatprep.subr.mxu0 0.0
    %612 = vmatpush1.msra.mxu0 0.0
    %613 = vmatprep.subr.mxu0 0.0
    %614 = vmatpush1.msra.mxu0 0.0
    %615 = vmatprep.subr.mxu0 0.0
    %616 = vmatpush1.msra.mxu0 0.0
    %617 = vmatprep.subr.mxu0 0.0
    %618 = vmatpush1.msra.mxu0 0.0
    %619 = vmatprep.subr.mxu0 0.0
    %620 = vmatpush1.msra.mxu0 0.0
    %621 = vmatprep.subr.mxu0 0.0
    %622 = vmatpush1.msra.mxu0 0.0
    %623 = vmatprep.subr.mxu0 0.0
    %624 = vmatpush1.msra.mxu0 0.0
    %625 = vmatprep.subr.mxu0 0.0
    %626 = vmatpush1.msra.mxu0 0.0
    %627 = vmatprep.subr.mxu0 0.0
    %628 = vmatpush1.msra.mxu0 0.0
    %629 = vmatprep.subr.mxu0 0.0
    %630 = vmatpush1.msra.mxu0 0.0
    %631 = vmatprep.subr.mxu0 0.0
    %632 = vmatpush1.msra.mxu0 0.0
    %633 = vmatprep.subr.mxu0 0.0
    %634 = vmatpush1.msra.mxu0 0.0
    %635 = vmatprep.subr.mxu0 0.0
    %636 = vmatpush1.msra.mxu0 0.0
    %637 = vmatprep.subr.mxu0 0.0
    %638 = vmatpush1.msra.mxu0 0.0
    %639 = vmatprep.subr.mxu0 0.0
    %640 = vmatpush1.msra.mxu0 0.0
    %641 = vmatprep.subr.mxu0 0.0
    %642 = vmatpush1.msra.mxu0 0.0
    %643 = vmatprep.subr.mxu0 0.0
    %644 = vmatpush1.msra.mxu0 0.0
    %645 = vmatprep.subr.mxu0 0.0
    %646 = vmatpush1.msra.mxu0 0.0
    %647 = vmatprep.mubr.f32.mxu0 0.0
    %648 = vmatmul.mubr.f32.gmra.mrb[0].mxu0 %v581
    %v649 = vpop.f32.mrb[0].mxu0
    %v650 = vadd.f32 0.0, %v649
    %v651 = vpop.f32.mrb[0].mxu0
    %652 = vdwg.mxu0
    %v653 = vadd.f32 %v486, %v650
    %654 = vrot.lane.b32.xlu0 %v146, 104
    %v655 = vpop.permute.xlu0 %654
    %656 = vrot.lane.b32.xlu0 %v146, 72
    %v657 = vpop.permute.xlu0 %656
    %v658 = vsel %vm159, %v655, 0
    %v660 = vsel %vm159, %v657, 0
    %662 = vmatprep.subr.mxu0 0.0
    %663 = vmatpush1.xpose.msra.mxu0 %v660
    %664 = vmatprep.subr.mxu0 0.0
    %665 = vmatpush1.xpose.msra.mxu0 0.0
    %666 = vmatprep.subr.mxu0 0.0
    %667 = vmatpush1.xpose.msra.mxu0 0.0
    %668 = vmatprep.subr.mxu0 0.0
    %669 = vmatpush1.xpose.msra.mxu0 0.0
    %670 = vmatprep.subr.mxu0 0.0
    %671 = vmatpush1.xpose.msra.mxu0 0.0
    %672 = vmatprep.subr.mxu0 0.0
    %673 = vmatpush1.xpose.msra.mxu0 0.0
    %674 = vmatprep.subr.mxu0 0.0
    %675 = vmatpush1.xpose.msra.mxu0 0.0
    %676 = vmatprep.subr.mxu0 0.0
    %677 = vmatpush1.xpose.msra.mxu0 0.0
    %678 = vmatprep.subr.mxu0 0.0
    %679 = vmatpush1.xpose.msra.mxu0 0.0
    %680 = vmatprep.subr.mxu0 0.0
    %681 = vmatpush1.xpose.msra.mxu0 0.0
    %682 = vmatprep.subr.mxu0 0.0
    %683 = vmatpush1.xpose.msra.mxu0 0.0
    %684 = vmatprep.subr.mxu0 0.0
    %685 = vmatpush1.xpose.msra.mxu0 0.0
    %686 = vmatprep.subr.mxu0 0.0
    %687 = vmatpush1.xpose.msra.mxu0 0.0
    %688 = vmatprep.subr.mxu0 0.0
    %689 = vmatpush1.xpose.msra.mxu0 0.0
    %690 = vmatprep.subr.mxu0 0.0
    %691 = vmatpush1.xpose.msra.mxu0 0.0
    %692 = vmatprep.subr.mxu0 0.0
    %693 = vmatpush1.xpose.msra.mxu0 0.0
    %694 = vmatprep.subr.mxu0 0.0
    %695 = vmatpush1.xpose.msra.mxu0 0.0
    %696 = vmatprep.subr.mxu0 0.0
    %697 = vmatpush1.xpose.msra.mxu0 0.0
    %698 = vmatprep.subr.mxu0 0.0
    %699 = vmatpush1.xpose.msra.mxu0 0.0
    %700 = vmatprep.subr.mxu0 0.0
    %701 = vmatpush1.xpose.msra.mxu0 0.0
    %702 = vmatprep.subr.mxu0 0.0
    %703 = vmatpush1.xpose.msra.mxu0 0.0
    %704 = vmatprep.subr.mxu0 0.0
    %705 = vmatpush1.xpose.msra.mxu0 0.0
    %706 = vmatprep.subr.mxu0 0.0
    %707 = vmatpush1.xpose.msra.mxu0 0.0
    %708 = vmatprep.subr.mxu0 0.0
    %709 = vmatpush1.xpose.msra.mxu0 0.0
    %710 = vmatprep.subr.mxu0 0.0
    %711 = vmatpush1.xpose.msra.mxu0 0.0
    %712 = vmatprep.subr.mxu0 0.0
    %713 = vmatpush1.xpose.msra.mxu0 0.0
    %714 = vmatprep.subr.mxu0 0.0
    %715 = vmatpush1.xpose.msra.mxu0 0.0
    %716 = vmatprep.subr.mxu0 0.0
    %717 = vmatpush1.xpose.msra.mxu0 0.0
    %718 = vmatprep.subr.mxu0 0.0
    %719 = vmatpush1.xpose.msra.mxu0 0.0
    %720 = vmatprep.subr.mxu0 0.0
    %721 = vmatpush1.xpose.msra.mxu0 0.0
    %722 = vmatprep.subr.mxu0 0.0
    %723 = vmatpush1.xpose.msra.mxu0 0.0
    %724 = vmatprep.subr.mxu0 0.0
    %725 = vmatpush1.xpose.msra.mxu0 0.0
    %726 = vmatprep.mubr.f32.mxu0 0.0
    %727 = vmatmul.mubr.f32.gmra.mrb[0].mxu0 %v658
    %v728 = vpop.f32.mrb[0].mxu0
    %v729 = vadd.f32 0.0, %v728
    %v730 = vpop.f32.mrb[0].mxu0
    %731 = vdwg.mxu0
    %v732 = vsel %vm159, %v729, -inf
    %733 = vmax.xlane.f32.xlu0 %v732
    %v734 = vpop.xlane.xlu0 %733
    %v735 = vsub.f32 %v729, %v734
    %v736 = vmul.f32 %v735, 1.442695
    %v737 = vpow.pop %v736
    %v738 = vsel %vm159, %v737, 0.0
    %739 = vadd.xlane.f32.xlu0 %v738
    %v740 = vpop.xlane.xlu0 %739
    %v741 = vrcp.pop %v740
    %v742 = vmul.f32 %v737, %v741
    %s743 = scalar_lea.vmem [#allocation4], 24
    %744 = vst.msk [vmem:[%s743] sm:$0xff] %vm159, %v742
    %746 = vrot.lane.b32.xlu0 %v148, 96
    %v747 = vpop.permute.xlu0 %746
    %v750 = vsel %vm159, %v742, 0
    %752 = vmatprep.subr.mxu0 0.0
    %753 = vmatpush1.msra.mxu0 %v747
    %754 = vmatprep.subr.mxu0 0.0
    %755 = vmatpush1.msra.mxu0 0.0
    %756 = vmatprep.subr.mxu0 0.0
    %757 = vmatpush1.msra.mxu0 0.0
    %758 = vmatprep.subr.mxu0 0.0
    %759 = vmatpush1.msra.mxu0 0.0
    %760 = vmatprep.subr.mxu0 0.0
    %761 = vmatpush1.msra.mxu0 0.0
    %762 = vmatprep.subr.mxu0 0.0
    %763 = vmatpush1.msra.mxu0 0.0
    %764 = vmatprep.subr.mxu0 0.0
    %765 = vmatpush1.msra.mxu0 0.0
    %766 = vmatprep.subr.mxu0 0.0
    %767 = vmatpush1.msra.mxu0 0.0
    %768 = vmatprep.subr.mxu0 0.0
    %769 = vmatpush1.msra.mxu0 0.0
    %770 = vmatprep.subr.mxu0 0.0
    %771 = vmatpush1.msra.mxu0 0.0
    %772 = vmatprep.subr.mxu0 0.0
    %773 = vmatpush1.msra.mxu0 0.0
    %774 = vmatprep.subr.mxu0 0.0
    %775 = vmatpush1.msra.mxu0 0.0
    %776 = vmatprep.subr.mxu0 0.0
    %777 = vmatpush1.msra.mxu0 0.0
    %778 = vmatprep.subr.mxu0 0.0
    %779 = vmatpush1.msra.mxu0 0.0
    %780 = vmatprep.subr.mxu0 0.0
    %781 = vmatpush1.msra.mxu0 0.0
    %782 = vmatprep.subr.mxu0 0.0
    %783 = vmatpush1.msra.mxu0 0.0
    %784 = vmatprep.subr.mxu0 0.0
    %785 = vmatpush1.msra.mxu0 0.0
    %786 = vmatprep.subr.mxu0 0.0
    %787 = vmatpush1.msra.mxu0 0.0
    %788 = vmatprep.subr.mxu0 0.0
    %789 = vmatpush1.msra.mxu0 0.0
    %790 = vmatprep.subr.mxu0 0.0
    %791 = vmatpush1.msra.mxu0 0.0
    %792 = vmatprep.subr.mxu0 0.0
    %793 = vmatpush1.msra.mxu0 0.0
    %794 = vmatprep.subr.mxu0 0.0
    %795 = vmatpush1.msra.mxu0 0.0
    %796 = vmatprep.subr.mxu0 0.0
    %797 = vmatpush1.msra.mxu0 0.0
    %798 = vmatprep.subr.mxu0 0.0
    %799 = vmatpush1.msra.mxu0 0.0
    %800 = vmatprep.subr.mxu0 0.0
    %801 = vmatpush1.msra.mxu0 0.0
    %802 = vmatprep.subr.mxu0 0.0
    %803 = vmatpush1.msra.mxu0 0.0
    %804 = vmatprep.subr.mxu0 0.0
    %805 = vmatpush1.msra.mxu0 0.0
    %806 = vmatprep.subr.mxu0 0.0
    %807 = vmatpush1.msra.mxu0 0.0
    %808 = vmatprep.subr.mxu0 0.0
    %809 = vmatpush1.msra.mxu0 0.0
    %810 = vmatprep.subr.mxu0 0.0
    %811 = vmatpush1.msra.mxu0 0.0
    %812 = vmatprep.subr.mxu0 0.0
    %813 = vmatpush1.msra.mxu0 0.0
    %814 = vmatprep.subr.mxu0 0.0
    %815 = vmatpush1.msra.mxu0 0.0
    %816 = vmatprep.mubr.f32.mxu0 0.0
    %817 = vmatmul.mubr.f32.gmra.mrb[0].mxu0 %v750
    %v818 = vpop.f32.mrb[0].mxu0
    %v819 = vadd.f32 0.0, %v818
    %v820 = vpop.f32.mrb[0].mxu0
    %821 = vdwg.mxu0
    %v822 = vadd.f32 %v653, %v819
    %824 = vrot.lane.b32.xlu0 %v152, 96
    %v825 = vpop.permute.xlu0 %824
    %v826 = vsel %vm159, %v152, 0
    %v828 = vsel %vm159, %v825, 0
    %830 = vmatprep.subr.mxu0 0.0
    %831 = vmatpush1.xpose.msra.mxu0 %v828
    %832 = vmatprep.subr.mxu0 0.0
    %833 = vmatpush1.xpose.msra.mxu0 0.0
    %834 = vmatprep.subr.mxu0 0.0
    %835 = vmatpush1.xpose.msra.mxu0 0.0
    %836 = vmatprep.subr.mxu0 0.0
    %837 = vmatpush1.xpose.msra.mxu0 0.0
    %838 = vmatprep.subr.mxu0 0.0
    %839 = vmatpush1.xpose.msra.mxu0 0.0
    %840 = vmatprep.subr.mxu0 0.0
    %841 = vmatpush1.xpose.msra.mxu0 0.0
    %842 = vmatprep.subr.mxu0 0.0
    %843 = vmatpush1.xpose.msra.mxu0 0.0
    %844 = vmatprep.subr.mxu0 0.0
    %845 = vmatpush1.xpose.msra.mxu0 0.0
    %846 = vmatprep.subr.mxu0 0.0
    %847 = vmatpush1.xpose.msra.mxu0 0.0
    %848 = vmatprep.subr.mxu0 0.0
    %849 = vmatpush1.xpose.msra.mxu0 0.0
    %850 = vmatprep.subr.mxu0 0.0
    %851 = vmatpush1.xpose.msra.mxu0 0.0
    %852 = vmatprep.subr.mxu0 0.0
    %853 = vmatpush1.xpose.msra.mxu0 0.0
    %854 = vmatprep.subr.mxu0 0.0
    %855 = vmatpush1.xpose.msra.mxu0 0.0
    %856 = vmatprep.subr.mxu0 0.0
    %857 = vmatpush1.xpose.msra.mxu0 0.0
    %858 = vmatprep.subr.mxu0 0.0
    %859 = vmatpush1.xpose.msra.mxu0 0.0
    %860 = vmatprep.subr.mxu0 0.0
    %861 = vmatpush1.xpose.msra.mxu0 0.0
    %862 = vmatprep.subr.mxu0 0.0
    %863 = vmatpush1.xpose.msra.mxu0 0.0
    %864 = vmatprep.subr.mxu0 0.0
    %865 = vmatpush1.xpose.msra.mxu0 0.0
    %866 = vmatprep.subr.mxu0 0.0
    %867 = vmatpush1.xpose.msra.mxu0 0.0
    %868 = vmatprep.subr.mxu0 0.0
    %869 = vmatpush1.xpose.msra.mxu0 0.0
    %870 = vmatprep.subr.mxu0 0.0
    %871 = vmatpush1.xpose.msra.mxu0 0.0
    %872 = vmatprep.subr.mxu0 0.0
    %873 = vmatpush1.xpose.msra.mxu0 0.0
    %874 = vmatprep.subr.mxu0 0.0
    %875 = vmatpush1.xpose.msra.mxu0 0.0
    %876 = vmatprep.subr.mxu0 0.0
    %877 = vmatpush1.xpose.msra.mxu0 0.0
    %878 = vmatprep.subr.mxu0 0.0
    %879 = vmatpush1.xpose.msra.mxu0 0.0
    %880 = vmatprep.subr.mxu0 0.0
    %881 = vmatpush1.xpose.msra.mxu0 0.0
    %882 = vmatprep.subr.mxu0 0.0
    %883 = vmatpush1.xpose.msra.mxu0 0.0
    %884 = vmatprep.subr.mxu0 0.0
    %885 = vmatpush1.xpose.msra.mxu0 0.0
    %886 = vmatprep.subr.mxu0 0.0
    %887 = vmatpush1.xpose.msra.mxu0 0.0
    %888 = vmatprep.subr.mxu0 0.0
    %889 = vmatpush1.xpose.msra.mxu0 0.0
    %890 = vmatprep.subr.mxu0 0.0
    %891 = vmatpush1.xpose.msra.mxu0 0.0
    %892 = vmatprep.subr.mxu0 0.0
    %893 = vmatpush1.xpose.msra.mxu0 0.0
    %894 = vmatprep.mubr.f32.mxu0 0.0
    %895 = vmatmul.mubr.f32.gmra.mrb[0].mxu0 %v826
    %v896 = vpop.f32.mrb[0].mxu0
    %v897 = vadd.f32 0.0, %v896
    %v898 = vpop.f32.mrb[0].mxu0
    %899 = vdwg.mxu0
    %v900 = vsel %vm159, %v897, -inf
    %901 = vmax.xlane.f32.xlu0 %v900
    %v902 = vpop.xlane.xlu0 %901
    %v903 = vsub.f32 %v897, %v902
    %v904 = vmul.f32 %v903, 1.442695
    %v905 = vpow.pop %v904
    %v906 = vsel %vm159, %v905, 0.0
    %907 = vadd.xlane.f32.xlu0 %v906
    %v908 = vpop.xlane.xlu0 %907
    %v909 = vrcp.pop %v908
    %v910 = vmul.f32 %v905, %v909
    %s911 = scalar_lea.vmem [#allocation4], 32
    %912 = vst.msk [vmem:[%s911] sm:$0xff] %vm159, %v910
    %913 = vrot.lane.b32.xlu0 %v152, 120
    %v914 = vpop.permute.xlu0 %913
    %915 = vrot.lane.b32.xlu0 %v152, 88
    %v916 = vpop.permute.xlu0 %915
    %v917 = vsel %vm159, %v914, 0
    %v919 = vsel %vm159, %v916, 0
    %921 = vmatprep.subr.mxu0 0.0
    %922 = vmatpush1.xpose.msra.mxu0 %v919
    %923 = vmatprep.subr.mxu0 0.0
    %924 = vmatpush1.xpose.msra.mxu0 0.0
    %925 = vmatprep.subr.mxu0 0.0
    %926 = vmatpush1.xpose.msra.mxu0 0.0
    %927 = vmatprep.subr.mxu0 0.0
    %928 = vmatpush1.xpose.msra.mxu0 0.0
    %929 = vmatprep.subr.mxu0 0.0
    %930 = vmatpush1.xpose.msra.mxu0 0.0
    %931 = vmatprep.subr.mxu0 0.0
    %932 = vmatpush1.xpose.msra.mxu0 0.0
    %933 = vmatprep.subr.mxu0 0.0
    %934 = vmatpush1.xpose.msra.mxu0 0.0
    %935 = vmatprep.subr.mxu0 0.0
    %936 = vmatpush1.xpose.msra.mxu0 0.0
    %937 = vmatprep.subr.mxu0 0.0
    %938 = vmatpush1.xpose.msra.mxu0 0.0
    %939 = vmatprep.subr.mxu0 0.0
    %940 = vmatpush1.xpose.msra.mxu0 0.0
    %941 = vmatprep.subr.mxu0 0.0
    %942 = vmatpush1.xpose.msra.mxu0 0.0
    %943 = vmatprep.subr.mxu0 0.0
    %944 = vmatpush1.xpose.msra.mxu0 0.0
    %945 = vmatprep.subr.mxu0 0.0
    %946 = vmatpush1.xpose.msra.mxu0 0.0
    %947 = vmatprep.subr.mxu0 0.0
    %948 = vmatpush1.xpose.msra.mxu0 0.0
    %949 = vmatprep.subr.mxu0 0.0
    %950 = vmatpush1.xpose.msra.mxu0 0.0
    %951 = vmatprep.subr.mxu0 0.0
    %952 = vmatpush1.xpose.msra.mxu0 0.0
    %953 = vmatprep.subr.mxu0 0.0
    %954 = vmatpush1.xpose.msra.mxu0 0.0
    %955 = vmatprep.subr.mxu0 0.0
    %956 = vmatpush1.xpose.msra.mxu0 0.0
    %957 = vmatprep.subr.mxu0 0.0
    %958 = vmatpush1.xpose.msra.mxu0 0.0
    %959 = vmatprep.subr.mxu0 0.0
    %960 = vmatpush1.xpose.msra.mxu0 0.0
    %961 = vmatprep.subr.mxu0 0.0
    %962 = vmatpush1.xpose.msra.mxu0 0.0
    %963 = vmatprep.subr.mxu0 0.0
    %964 = vmatpush1.xpose.msra.mxu0 0.0
    %965 = vmatprep.subr.mxu0 0.0
    %966 = vmatpush1.xpose.msra.mxu0 0.0
    %967 = vmatprep.subr.mxu0 0.0
    %968 = vmatpush1.xpose.msra.mxu0 0.0
    %969 = vmatprep.subr.mxu0 0.0
    %970 = vmatpush1.xpose.msra.mxu0 0.0
    %971 = vmatprep.subr.mxu0 0.0
    %972 = vmatpush1.xpose.msra.mxu0 0.0
    %973 = vmatprep.subr.mxu0 0.0
    %974 = vmatpush1.xpose.msra.mxu0 0.0
    %975 = vmatprep.subr.mxu0 0.0
    %976 = vmatpush1.xpose.msra.mxu0 0.0
    %977 = vmatprep.subr.mxu0 0.0
    %978 = vmatpush1.xpose.msra.mxu0 0.0
    %979 = vmatprep.subr.mxu0 0.0
    %980 = vmatpush1.xpose.msra.mxu0 0.0
    %981 = vmatprep.subr.mxu0 0.0
    %982 = vmatpush1.xpose.msra.mxu0 0.0
    %983 = vmatprep.subr.mxu0 0.0
    %984 = vmatpush1.xpose.msra.mxu0 0.0
    %985 = vmatprep.mubr.f32.mxu0 0.0
    %986 = vmatmul.mubr.f32.gmra.mrb[0].mxu0 %v917
    %v987 = vpop.f32.mrb[0].mxu0
    %v988 = vadd.f32 0.0, %v987
    %v989 = vpop.f32.mrb[0].mxu0
    %990 = vdwg.mxu0
    %v991 = vsel %vm159, %v988, -inf
    %992 = vmax.xlane.f32.xlu0 %v991
    %v993 = vpop.xlane.xlu0 %992
    %v994 = vsub.f32 %v988, %v993
    %v995 = vmul.f32 %v994, 1.442695
    %v996 = vpow.pop %v995
    %v997 = vsel %vm159, %v996, 0.0
    %998 = vadd.xlane.f32.xlu0 %v997
    %v999 = vpop.xlane.xlu0 %998
    %v1000 = vrcp.pop %v999
    %v1001 = vmul.f32 %v996, %v1000
    %s1002 = scalar_lea.vmem [#allocation4], 40
    %1003 = vst.msk [vmem:[%s1002] sm:$0xff] %vm159, %v1001
    %1004 = vrot.lane.b32.xlu0 %v152, 32
    %v1005 = vpop.permute.xlu0 %1004
    %v1008 = vsel %vm159, %v1001, 0
    %1010 = vmatprep.subr.mxu0 0.0
    %1011 = vmatpush1.msra.mxu0 %v1005
    %1012 = vmatprep.subr.mxu0 0.0
    %1013 = vmatpush1.msra.mxu0 0.0
    %1014 = vmatprep.subr.mxu0 0.0
    %1015 = vmatpush1.msra.mxu0 0.0
    %1016 = vmatprep.subr.mxu0 0.0
    %1017 = vmatpush1.msra.mxu0 0.0
    %1018 = vmatprep.subr.mxu0 0.0
    %1019 = vmatpush1.msra.mxu0 0.0
    %1020 = vmatprep.subr.mxu0 0.0
    %1021 = vmatpush1.msra.mxu0 0.0
    %1022 = vmatprep.subr.mxu0 0.0
    %1023 = vmatpush1.msra.mxu0 0.0
    %1024 = vmatprep.subr.mxu0 0.0
    %1025 = vmatpush1.msra.mxu0 0.0
    %1026 = vmatprep.subr.mxu0 0.0
    %1027 = vmatpush1.msra.mxu0 0.0
    %1028 = vmatprep.subr.mxu0 0.0
    %1029 = vmatpush1.msra.mxu0 0.0
    %1030 = vmatprep.subr.mxu0 0.0
    %1031 = vmatpush1.msra.mxu0 0.0
    %1032 = vmatprep.subr.mxu0 0.0
    %1033 = vmatpush1.msra.mxu0 0.0
    %1034 = vmatprep.subr.mxu0 0.0
    %1035 = vmatpush1.msra.mxu0 0.0
    %1036 = vmatprep.subr.mxu0 0.0
    %1037 = vmatpush1.msra.mxu0 0.0
    %1038 = vmatprep.subr.mxu0 0.0
    %1039 = vmatpush1.msra.mxu0 0.0
    %1040 = vmatprep.subr.mxu0 0.0
    %1041 = vmatpush1.msra.mxu0 0.0
    %1042 = vmatprep.subr.mxu0 0.0
    %1043 = vmatpush1.msra.mxu0 0.0
    %1044 = vmatprep.subr.mxu0 0.0
    %1045 = vmatpush1.msra.mxu0 0.0
    %1046 = vmatprep.subr.mxu0 0.0
    %1047 = vmatpush1.msra.mxu0 0.0
    %1048 = vmatprep.subr.mxu0 0.0
    %1049 = vmatpush1.msra.mxu0 0.0
    %1050 = vmatprep.subr.mxu0 0.0
    %1051 = vmatpush1.msra.mxu0 0.0
    %1052 = vmatprep.subr.mxu0 0.0
    %1053 = vmatpush1.msra.mxu0 0.0
    %1054 = vmatprep.subr.mxu0 0.0
    %1055 = vmatpush1.msra.mxu0 0.0
    %1056 = vmatprep.subr.mxu0 0.0
    %1057 = vmatpush1.msra.mxu0 0.0
    %1058 = vmatprep.subr.mxu0 0.0
    %1059 = vmatpush1.msra.mxu0 0.0
    %1060 = vmatprep.subr.mxu0 0.0
    %1061 = vmatpush1.msra.mxu0 0.0
    %1062 = vmatprep.subr.mxu0 0.0
    %1063 = vmatpush1.msra.mxu0 0.0
    %1064 = vmatprep.subr.mxu0 0.0
    %1065 = vmatpush1.msra.mxu0 0.0
    %1066 = vmatprep.subr.mxu0 0.0
    %1067 = vmatpush1.msra.mxu0 0.0
    %1068 = vmatprep.subr.mxu0 0.0
    %1069 = vmatpush1.msra.mxu0 0.0
    %1070 = vmatprep.subr.mxu0 0.0
    %1071 = vmatpush1.msra.mxu0 0.0
    %1072 = vmatprep.subr.mxu0 0.0
    %1073 = vmatpush1.msra.mxu0 0.0
    %1074 = vmatprep.mubr.f32.mxu0 0.0
    %1075 = vmatmul.mubr.f32.gmra.mrb[0].mxu0 %v1008
    %v1076 = vpop.f32.mrb[0].mxu0
    %v1077 = vadd.f32 0.0, %v1076
    %v1078 = vpop.f32.mrb[0].mxu0
    %1079 = vdwg.mxu0
    %1080 = vrot.lane.b32.xlu0 %v152, 64
    %v1081 = vpop.permute.xlu0 %1080
    %v1084 = vsel %vm159, %v910, 0
    %1086 = vmatprep.subr.mxu0 0.0
    %1087 = vmatpush1.msra.mxu0 %v1081
    %1088 = vmatprep.subr.mxu0 0.0
    %1089 = vmatpush1.msra.mxu0 0.0
    %1090 = vmatprep.subr.mxu0 0.0
    %1091 = vmatpush1.msra.mxu0 0.0
    %1092 = vmatprep.subr.mxu0 0.0
    %1093 = vmatpush1.msra.mxu0 0.0
    %1094 = vmatprep.subr.mxu0 0.0
    %1095 = vmatpush1.msra.mxu0 0.0
    %1096 = vmatprep.subr.mxu0 0.0
    %1097 = vmatpush1.msra.mxu0 0.0
    %1098 = vmatprep.subr.mxu0 0.0
    %1099 = vmatpush1.msra.mxu0 0.0
    %1100 = vmatprep.subr.mxu0 0.0
    %1101 = vmatpush1.msra.mxu0 0.0
    %1102 = vmatprep.subr.mxu0 0.0
    %1103 = vmatpush1.msra.mxu0 0.0
    %1104 = vmatprep.subr.mxu0 0.0
    %1105 = vmatpush1.msra.mxu0 0.0
    %1106 = vmatprep.subr.mxu0 0.0
    %1107 = vmatpush1.msra.mxu0 0.0
    %1108 = vmatprep.subr.mxu0 0.0
    %1109 = vmatpush1.msra.mxu0 0.0
    %1110 = vmatprep.subr.mxu0 0.0
    %1111 = vmatpush1.msra.mxu0 0.0
    %1112 = vmatprep.subr.mxu0 0.0
    %1113 = vmatpush1.msra.mxu0 0.0
    %1114 = vmatprep.subr.mxu0 0.0
    %1115 = vmatpush1.msra.mxu0 0.0
    %1116 = vmatprep.subr.mxu0 0.0
    %1117 = vmatpush1.msra.mxu0 0.0
    %1118 = vmatprep.subr.mxu0 0.0
    %1119 = vmatpush1.msra.mxu0 0.0
    %1120 = vmatprep.subr.mxu0 0.0
    %1121 = vmatpush1.msra.mxu0 0.0
    %1122 = vmatprep.subr.mxu0 0.0
    %1123 = vmatpush1.msra.mxu0 0.0
    %1124 = vmatprep.subr.mxu0 0.0
    %1125 = vmatpush1.msra.mxu0 0.0
    %1126 = vmatprep.subr.mxu0 0.0
    %1127 = vmatpush1.msra.mxu0 0.0
    %1128 = vmatprep.subr.mxu0 0.0
    %1129 = vmatpush1.msra.mxu0 0.0
    %1130 = vmatprep.subr.mxu0 0.0
    %1131 = vmatpush1.msra.mxu0 0.0
    %1132 = vmatprep.subr.mxu0 0.0
    %1133 = vmatpush1.msra.mxu0 0.0
    %1134 = vmatprep.subr.mxu0 0.0
    %1135 = vmatpush1.msra.mxu0 0.0
    %1136 = vmatprep.subr.mxu0 0.0
    %1137 = vmatpush1.msra.mxu0 0.0
    %1138 = vmatprep.subr.mxu0 0.0
    %1139 = vmatpush1.msra.mxu0 0.0
    %1140 = vmatprep.subr.mxu0 0.0
    %1141 = vmatpush1.msra.mxu0 0.0
    %1142 = vmatprep.subr.mxu0 0.0
    %1143 = vmatpush1.msra.mxu0 0.0
    %1144 = vmatprep.subr.mxu0 0.0
    %1145 = vmatpush1.msra.mxu0 0.0
    %1146 = vmatprep.subr.mxu0 0.0
    %1147 = vmatpush1.msra.mxu0 0.0
    %1148 = vmatprep.subr.mxu0 0.0
    %1149 = vmatpush1.msra.mxu0 0.0
    %1150 = vmatprep.mubr.f32.mxu0 0.0
    %1151 = vmatmul.mubr.f32.gmra.mrb[0].mxu0 %v1084
    %v1152 = vpop.f32.mrb[0].mxu0
    %v1153 = vadd.f32 %v1077, %v1152
    %v1154 = vpop.f32.mrb[0].mxu0
    %1155 = vdwg.mxu0
    %1156 = vrot.lane.b32.xlu0 %v152, 112
    %v1157 = vpop.permute.xlu0 %1156
    %1158 = vrot.lane.b32.xlu0 %v152, 80
    %v1159 = vpop.permute.xlu0 %1158
    %v1160 = vsel %vm159, %v1157, 0
    %v1162 = vsel %vm159, %v1159, 0
    %1164 = vmatprep.subr.mxu0 0.0
    %1165 = vmatpush1.xpose.msra.mxu0 %v1162
    %1166 = vmatprep.subr.mxu0 0.0
    %1167 = vmatpush1.xpose.msra.mxu0 0.0
    %1168 = vmatprep.subr.mxu0 0.0
    %1169 = vmatpush1.xpose.msra.mxu0 0.0
    %1170 = vmatprep.subr.mxu0 0.0
    %1171 = vmatpush1.xpose.msra.mxu0 0.0
    %1172 = vmatprep.subr.mxu0 0.0
    %1173 = vmatpush1.xpose.msra.mxu0 0.0
    %1174 = vmatprep.subr.mxu0 0.0
    %1175 = vmatpush1.xpose.msra.mxu0 0.0
    %1176 = vmatprep.subr.mxu0 0.0
    %1177 = vmatpush1.xpose.msra.mxu0 0.0
    %1178 = vmatprep.subr.mxu0 0.0
    %1179 = vmatpush1.xpose.msra.mxu0 0.0
    %1180 = vmatprep.subr.mxu0 0.0
    %1181 = vmatpush1.xpose.msra.mxu0 0.0
    %1182 = vmatprep.subr.mxu0 0.0
    %1183 = vmatpush1.xpose.msra.mxu0 0.0
    %1184 = vmatprep.subr.mxu0 0.0
    %1185 = vmatpush1.xpose.msra.mxu0 0.0
    %1186 = vmatprep.subr.mxu0 0.0
    %1187 = vmatpush1.xpose.msra.mxu0 0.0
    %1188 = vmatprep.subr.mxu0 0.0
    %1189 = vmatpush1.xpose.msra.mxu0 0.0
    %1190 = vmatprep.subr.mxu0 0.0
    %1191 = vmatpush1.xpose.msra.mxu0 0.0
    %1192 = vmatprep.subr.mxu0 0.0
    %1193 = vmatpush1.xpose.msra.mxu0 0.0
    %1194 = vmatprep.subr.mxu0 0.0
    %1195 = vmatpush1.xpose.msra.mxu0 0.0
    %1196 = vmatprep.subr.mxu0 0.0
    %1197 = vmatpush1.xpose.msra.mxu0 0.0
    %1198 = vmatprep.subr.mxu0 0.0
    %1199 = vmatpush1.xpose.msra.mxu0 0.0
    %1200 = vmatprep.subr.mxu0 0.0
    %1201 = vmatpush1.xpose.msra.mxu0 0.0
    %1202 = vmatprep.subr.mxu0 0.0
    %1203 = vmatpush1.xpose.msra.mxu0 0.0
    %1204 = vmatprep.subr.mxu0 0.0
    %1205 = vmatpush1.xpose.msra.mxu0 0.0
    %1206 = vmatprep.subr.mxu0 0.0
    %1207 = vmatpush1.xpose.msra.mxu0 0.0
    %1208 = vmatprep.subr.mxu0 0.0
    %1209 = vmatpush1.xpose.msra.mxu0 0.0
    %1210 = vmatprep.subr.mxu0 0.0
    %1211 = vmatpush1.xpose.msra.mxu0 0.0
    %1212 = vmatprep.subr.mxu0 0.0
    %1213 = vmatpush1.xpose.msra.mxu0 0.0
    %1214 = vmatprep.subr.mxu0 0.0
    %1215 = vmatpush1.xpose.msra.mxu0 0.0
    %1216 = vmatprep.subr.mxu0 0.0
    %1217 = vmatpush1.xpose.msra.mxu0 0.0
    %1218 = vmatprep.subr.mxu0 0.0
    %1219 = vmatpush1.xpose.msra.mxu0 0.0
    %1220 = vmatprep.subr.mxu0 0.0
    %1221 = vmatpush1.xpose.msra.mxu0 0.0
    %1222 = vmatprep.subr.mxu0 0.0
    %1223 = vmatpush1.xpose.msra.mxu0 0.0
    %1224 = vmatprep.subr.mxu0 0.0
    %1225 = vmatpush1.xpose.msra.mxu0 0.0
    %1226 = vmatprep.subr.mxu0 0.0
    %1227 = vmatpush1.xpose.msra.mxu0 0.0
    %1228 = vmatprep.mubr.f32.mxu0 0.0
    %1229 = vmatmul.mubr.f32.gmra.mrb[0].mxu0 %v1160
    %v1230 = vpop.f32.mrb[0].mxu0
    %v1231 = vadd.f32 0.0, %v1230
    %v1232 = vpop.f32.mrb[0].mxu0
    %1233 = vdwg.mxu0
    %v1234 = vsel %vm159, %v1231, -inf
    %1235 = vmax.xlane.f32.xlu0 %v1234
    %v1236 = vpop.xlane.xlu0 %1235
    %v1237 = vsub.f32 %v1231, %v1236
    %v1238 = vmul.f32 %v1237, 1.442695
    %v1239 = vpow.pop %v1238
    %v1240 = vsel %vm159, %v1239, 0.0
    %1241 = vadd.xlane.f32.xlu0 %v1240
    %v1242 = vpop.xlane.xlu0 %1241
    %v1243 = vrcp.pop %v1242
    %v1244 = vmul.f32 %v1239, %v1243
    %s1245 = scalar_lea.vmem [#allocation4], 48
    %1246 = vst.msk [vmem:[%s1245] sm:$0xff] %vm159, %v1244
    %v1248 = vsel %vm159, %v1244, 0
    %1250 = vmatprep.subr.mxu0 0.0
    %1251 = vmatpush1.msra.mxu0 %v154
    %1252 = vmatprep.subr.mxu0 0.0
    %1253 = vmatpush1.msra.mxu0 0.0
    %1254 = vmatprep.subr.mxu0 0.0
    %1255 = vmatpush1.msra.mxu0 0.0
    %1256 = vmatprep.subr.mxu0 0.0
    %1257 = vmatpush1.msra.mxu0 0.0
    %1258 = vmatprep.subr.mxu0 0.0
    %1259 = vmatpush1.msra.mxu0 0.0
    %1260 = vmatprep.subr.mxu0 0.0
    %1261 = vmatpush1.msra.mxu0 0.0
    %1262 = vmatprep.subr.mxu0 0.0
    %1263 = vmatpush1.msra.mxu0 0.0
    %1264 = vmatprep.subr.mxu0 0.0
    %1265 = vmatpush1.msra.mxu0 0.0
    %1266 = vmatprep.subr.mxu0 0.0
    %1267 = vmatpush1.msra.mxu0 0.0
    %1268 = vmatprep.subr.mxu0 0.0
    %1269 = vmatpush1.msra.mxu0 0.0
    %1270 = vmatprep.subr.mxu0 0.0
    %1271 = vmatpush1.msra.mxu0 0.0
    %1272 = vmatprep.subr.mxu0 0.0
    %1273 = vmatpush1.msra.mxu0 0.0
    %1274 = vmatprep.subr.mxu0 0.0
    %1275 = vmatpush1.msra.mxu0 0.0
    %1276 = vmatprep.subr.mxu0 0.0
    %1277 = vmatpush1.msra.mxu0 0.0
    %1278 = vmatprep.subr.mxu0 0.0
    %1279 = vmatpush1.msra.mxu0 0.0
    %1280 = vmatprep.subr.mxu0 0.0
    %1281 = vmatpush1.msra.mxu0 0.0
    %1282 = vmatprep.subr.mxu0 0.0
    %1283 = vmatpush1.msra.mxu0 0.0
    %1284 = vmatprep.subr.mxu0 0.0
    %1285 = vmatpush1.msra.mxu0 0.0
    %1286 = vmatprep.subr.mxu0 0.0
    %1287 = vmatpush1.msra.mxu0 0.0
    %1288 = vmatprep.subr.mxu0 0.0
    %1289 = vmatpush1.msra.mxu0 0.0
    %1290 = vmatprep.subr.mxu0 0.0
    %1291 = vmatpush1.msra.mxu0 0.0
    %1292 = vmatprep.subr.mxu0 0.0
    %1293 = vmatpush1.msra.mxu0 0.0
    %1294 = vmatprep.subr.mxu0 0.0
    %1295 = vmatpush1.msra.mxu0 0.0
    %1296 = vmatprep.subr.mxu0 0.0
    %1297 = vmatpush1.msra.mxu0 0.0
    %1298 = vmatprep.subr.mxu0 0.0
    %1299 = vmatpush1.msra.mxu0 0.0
    %1300 = vmatprep.subr.mxu0 0.0
    %1301 = vmatpush1.msra.mxu0 0.0
    %1302 = vmatprep.subr.mxu0 0.0
    %1303 = vmatpush1.msra.mxu0 0.0
    %1304 = vmatprep.subr.mxu0 0.0
    %1305 = vmatpush1.msra.mxu0 0.0
    %1306 = vmatprep.subr.mxu0 0.0
    %1307 = vmatpush1.msra.mxu0 0.0
    %1308 = vmatprep.subr.mxu0 0.0
    %1309 = vmatpush1.msra.mxu0 0.0
    %1310 = vmatprep.subr.mxu0 0.0
    %1311 = vmatpush1.msra.mxu0 0.0
    %1312 = vmatprep.subr.mxu0 0.0
    %1313 = vmatpush1.msra.mxu0 0.0
    %1314 = vmatprep.mubr.f32.mxu0 0.0
    %1315 = vmatmul.mubr.f32.gmra.mrb[0].mxu0 %v1248
    %v1316 = vpop.f32.mrb[0].mxu0
    %v1317 = vadd.f32 0.0, %v1316
    %v1318 = vpop.f32.mrb[0].mxu0
    %1319 = vdwg.mxu0
    %v1320 = vadd.f32 %v1153, %v1317
    %1321 = vrot.lane.b32.xlu0 %v152, 104
    %v1322 = vpop.permute.xlu0 %1321
    %1323 = vrot.lane.b32.xlu0 %v152, 72
    %v1324 = vpop.permute.xlu0 %1323
    %v1325 = vsel %vm159, %v1322, 0
    %v1327 = vsel %vm159, %v1324, 0
    %1329 = vmatprep.subr.mxu0 0.0
    %1330 = vmatpush1.xpose.msra.mxu0 %v1327
    %1331 = vmatprep.subr.mxu0 0.0
    %1332 = vmatpush1.xpose.msra.mxu0 0.0
    %1333 = vmatprep.subr.mxu0 0.0
    %1334 = vmatpush1.xpose.msra.mxu0 0.0
    %1335 = vmatprep.subr.mxu0 0.0
    %1336 = vmatpush1.xpose.msra.mxu0 0.0
    %1337 = vmatprep.subr.mxu0 0.0
    %1338 = vmatpush1.xpose.msra.mxu0 0.0
    %1339 = vmatprep.subr.mxu0 0.0
    %1340 = vmatpush1.xpose.msra.mxu0 0.0
    %1341 = vmatprep.subr.mxu0 0.0
    %1342 = vmatpush1.xpose.msra.mxu0 0.0
    %1343 = vmatprep.subr.mxu0 0.0
    %1344 = vmatpush1.xpose.msra.mxu0 0.0
    %1345 = vmatprep.subr.mxu0 0.0
    %1346 = vmatpush1.xpose.msra.mxu0 0.0
    %1347 = vmatprep.subr.mxu0 0.0
    %1348 = vmatpush1.xpose.msra.mxu0 0.0
    %1349 = vmatprep.subr.mxu0 0.0
    %1350 = vmatpush1.xpose.msra.mxu0 0.0
    %1351 = vmatprep.subr.mxu0 0.0
    %1352 = vmatpush1.xpose.msra.mxu0 0.0
    %1353 = vmatprep.subr.mxu0 0.0
    %1354 = vmatpush1.xpose.msra.mxu0 0.0
    %1355 = vmatprep.subr.mxu0 0.0
    %1356 = vmatpush1.xpose.msra.mxu0 0.0
    %1357 = vmatprep.subr.mxu0 0.0
    %1358 = vmatpush1.xpose.msra.mxu0 0.0
    %1359 = vmatprep.subr.mxu0 0.0
    %1360 = vmatpush1.xpose.msra.mxu0 0.0
    %1361 = vmatprep.subr.mxu0 0.0
    %1362 = vmatpush1.xpose.msra.mxu0 0.0
    %1363 = vmatprep.subr.mxu0 0.0
    %1364 = vmatpush1.xpose.msra.mxu0 0.0
    %1365 = vmatprep.subr.mxu0 0.0
    %1366 = vmatpush1.xpose.msra.mxu0 0.0
    %1367 = vmatprep.subr.mxu0 0.0
    %1368 = vmatpush1.xpose.msra.mxu0 0.0
    %1369 = vmatprep.subr.mxu0 0.0
    %1370 = vmatpush1.xpose.msra.mxu0 0.0
    %1371 = vmatprep.subr.mxu0 0.0
    %1372 = vmatpush1.xpose.msra.mxu0 0.0
    %1373 = vmatprep.subr.mxu0 0.0
    %1374 = vmatpush1.xpose.msra.mxu0 0.0
    %1375 = vmatprep.subr.mxu0 0.0
    %1376 = vmatpush1.xpose.msra.mxu0 0.0
    %1377 = vmatprep.subr.mxu0 0.0
    %1378 = vmatpush1.xpose.msra.mxu0 0.0
    %1379 = vmatprep.subr.mxu0 0.0
    %1380 = vmatpush1.xpose.msra.mxu0 0.0
    %1381 = vmatprep.subr.mxu0 0.0
    %1382 = vmatpush1.xpose.msra.mxu0 0.0
    %1383 = vmatprep.subr.mxu0 0.0
    %1384 = vmatpush1.xpose.msra.mxu0 0.0
    %1385 = vmatprep.subr.mxu0 0.0
    %1386 = vmatpush1.xpose.msra.mxu0 0.0
    %1387 = vmatprep.subr.mxu0 0.0
    %1388 = vmatpush1.xpose.msra.mxu0 0.0
    %1389 = vmatprep.subr.mxu0 0.0
    %1390 = vmatpush1.xpose.msra.mxu0 0.0
    %1391 = vmatprep.subr.mxu0 0.0
    %1392 = vmatpush1.xpose.msra.mxu0 0.0
    %1393 = vmatprep.mubr.f32.mxu0 0.0
    %1394 = vmatmul.mubr.f32.gmra.mrb[0].mxu0 %v1325
    %v1395 = vpop.f32.mrb[0].mxu0
    %v1396 = vadd.f32 0.0, %v1395
    %v1397 = vpop.f32.mrb[0].mxu0
    %1398 = vdwg.mxu0
    %v1399 = vsel %vm159, %v1396, -inf
    %1400 = vmax.xlane.f32.xlu0 %v1399
    %v1401 = vpop.xlane.xlu0 %1400
    %v1402 = vsub.f32 %v1396, %v1401
    %v1403 = vmul.f32 %v1402, 1.442695
    %v1404 = vpow.pop %v1403
    %v1405 = vsel %vm159, %v1404, 0.0
    %1406 = vadd.xlane.f32.xlu0 %v1405
    %v1407 = vpop.xlane.xlu0 %1406
    %v1408 = vrcp.pop %v1407
    %v1409 = vmul.f32 %v1404, %v1408
    %s1410 = scalar_lea.vmem [#allocation4], 56
    %1411 = vst.msk [vmem:[%s1410] sm:$0xff] %vm159, %v1409
    %1413 = vrot.lane.b32.xlu0 %v154, 96
    %v1414 = vpop.permute.xlu0 %1413
    %v1417 = vsel %vm159, %v1409, 0
    %1419 = vmatprep.subr.mxu0 0.0
    %1420 = vmatpush1.msra.mxu0 %v1414
    %1421 = vmatprep.subr.mxu0 0.0
    %1422 = vmatpush1.msra.mxu0 0.0
    %1423 = vmatprep.subr.mxu0 0.0
    %1424 = vmatpush1.msra.mxu0 0.0
    %1425 = vmatprep.subr.mxu0 0.0
    %1426 = vmatpush1.msra.mxu0 0.0
    %1427 = vmatprep.subr.mxu0 0.0
    %1428 = vmatpush1.msra.mxu0 0.0
    %1429 = vmatprep.subr.mxu0 0.0
    %1430 = vmatpush1.msra.mxu0 0.0
    %1431 = vmatprep.subr.mxu0 0.0
    %1432 = vmatpush1.msra.mxu0 0.0
    %1433 = vmatprep.subr.mxu0 0.0
    %1434 = vmatpush1.msra.mxu0 0.0
    %1435 = vmatprep.subr.mxu0 0.0
    %1436 = vmatpush1.msra.mxu0 0.0
    %1437 = vmatprep.subr.mxu0 0.0
    %1438 = vmatpush1.msra.mxu0 0.0
    %1439 = vmatprep.subr.mxu0 0.0
    %1440 = vmatpush1.msra.mxu0 0.0
    %1441 = vmatprep.subr.mxu0 0.0
    %1442 = vmatpush1.msra.mxu0 0.0
    %1443 = vmatprep.subr.mxu0 0.0
    %1444 = vmatpush1.msra.mxu0 0.0
    %1445 = vmatprep.subr.mxu0 0.0
    %1446 = vmatpush1.msra.mxu0 0.0
    %1447 = vmatprep.subr.mxu0 0.0
    %1448 = vmatpush1.msra.mxu0 0.0
    %1449 = vmatprep.subr.mxu0 0.0
    %1450 = vmatpush1.msra.mxu0 0.0
    %1451 = vmatprep.subr.mxu0 0.0
    %1452 = vmatpush1.msra.mxu0 0.0
    %1453 = vmatprep.subr.mxu0 0.0
    %1454 = vmatpush1.msra.mxu0 0.0
    %1455 = vmatprep.subr.mxu0 0.0
    %1456 = vmatpush1.msra.mxu0 0.0
    %1457 = vmatprep.subr.mxu0 0.0
    %1458 = vmatpush1.msra.mxu0 0.0
    %1459 = vmatprep.subr.mxu0 0.0
    %1460 = vmatpush1.msra.mxu0 0.0
    %1461 = vmatprep.subr.mxu0 0.0
    %1462 = vmatpush1.msra.mxu0 0.0
    %1463 = vmatprep.subr.mxu0 0.0
    %1464 = vmatpush1.msra.mxu0 0.0
    %1465 = vmatprep.subr.mxu0 0.0
    %1466 = vmatpush1.msra.mxu0 0.0
    %1467 = vmatprep.subr.mxu0 0.0
    %1468 = vmatpush1.msra.mxu0 0.0
    %1469 = vmatprep.subr.mxu0 0.0
    %1470 = vmatpush1.msra.mxu0 0.0
    %1471 = vmatprep.subr.mxu0 0.0
    %1472 = vmatpush1.msra.mxu0 0.0
    %1473 = vmatprep.subr.mxu0 0.0
    %1474 = vmatpush1.msra.mxu0 0.0
    %1475 = vmatprep.subr.mxu0 0.0
    %1476 = vmatpush1.msra.mxu0 0.0
    %1477 = vmatprep.subr.mxu0 0.0
    %1478 = vmatpush1.msra.mxu0 0.0
    %1479 = vmatprep.subr.mxu0 0.0
    %1480 = vmatpush1.msra.mxu0 0.0
    %1481 = vmatprep.subr.mxu0 0.0
    %1482 = vmatpush1.msra.mxu0 0.0
    %1483 = vmatprep.mubr.f32.mxu0 0.0
    %1484 = vmatmul.mubr.f32.gmra.mrb[0].mxu0 %v1417
    %v1485 = vpop.f32.mrb[0].mxu0
    %v1486 = vadd.f32 0.0, %v1485
    %v1487 = vpop.f32.mrb[0].mxu0
    %1488 = vdwg.mxu0
    %v1489 = vadd.f32 %v1320, %v1486
    %v1490 = vadd.f32 %v21, %v822
    %v1491 = vadd.f32 %v22, %v1489
    %v1492 = vld [vmem:[%s1 + $0x4] sm:$0x1]
    %v1493 = vlaneseq
    %v1494 = vshrl.u32 %v1493, 7
    %v1495 = vsub.s32 0, %v1494
    %v1496 = vrot.slane %v1492, %v1495
    %v1497 = vadd.f32 %v1490, %v1496
    %v1498 = vadd.f32 %v1491, %v1496
    %v1499 = vld [vmem:[%s1 + $0x2] sm:$0x1]
    %v1500 = vld [vmem:[%s1 + $0x3] sm:$0x1]
    %v1501 = vsel %vm25, %v1497, 0.0
    %1502 = vadd.xlane.f32.xlu0 %v1501
    %v1503 = vpop.xlane.xlu0 %1502
    %v1504 = vsel %vm25, %v1498, 0.0
    %1505 = vadd.xlane.f32.xlu0 %v1504
    %v1506 = vpop.xlane.xlu0 %1505
    %v1507 = vmul.f32 %v1503, %v32
    %v1508 = vmul.f32 %v1506, %v32
    %v1509 = vsub.f32 %v1497, %v1507
    %v1510 = vsub.f32 %v1498, %v1508
    %v1511 = vmul.f32 %v1509, %v1509
    %v1512 = vmul.f32 %v1510, %v1510
    %v1513 = vsel %vm25, %v1511, 0.0
    %1514 = vadd.xlane.f32.xlu0 %v1513
    %v1515 = vpop.xlane.xlu0 %1514
    %v1516 = vsel %vm25, %v1512, 0.0
    %1517 = vadd.xlane.f32.xlu0 %v1516
    %v1518 = vpop.xlane.xlu0 %1517
    %v1519 = vmul.f32 %v1515, %v32
    %v1520 = vmul.f32 %v1518, %v32
    %v1521 = vadd.f32 %v1519, 1e-05
    %v1522 = vadd.f32 %v1520, 1e-05
    %v1523 = vrsqrt.pop %v1521
    %v1524 = vrsqrt.pop %v1522
    %v1525 = vmul.f32 %v1509, %v1523
    %v1526 = vmul.f32 %v1510, %v1524
    %v1527 = vlaneseq
    %v1528 = vshrl.u32 %v1527, 7
    %v1529 = vsub.s32 0, %v1528
    %v1530 = vrot.slane %v1499, %v1529
    %v1531 = vmul.f32 %v1525, %v1530
    %v1532 = vmul.f32 %v1526, %v1530
    %v1533 = vlaneseq
    %v1534 = vshrl.u32 %v1533, 7
    %v1535 = vsub.s32 0, %v1534
    %v1536 = vrot.slane %v1500, %v1535
    %v1537 = vadd.f32 %v1531, %v1536
    %v1538 = vadd.f32 %v1532, %v1536
    %v1539 = vld [vmem:[%s3] sm:$0xff]
    %v1540 = vld [vmem:[%s3 + $0x8] sm:$0xff]
    %v1541 = vld [vmem:[%s3 + $0x10] sm:$0xff]
    %v1542 = vld [vmem:[%s3 + $0x18] sm:$0xff]
    %v1543 = vld [vmem:[%s1 + $0x6] sm:$0x1]
    %v1544 = vlaneseq
    %v1545 = vshrl.u32 %v1544, 7
    %v1546 = vsub.s32 0, %v1545
    %v1547 = vrot.slane %v1543, %v1546
    %v1549 = vsel %vm25, %v1537, 0
    %v1552 = vsel %vm25, %v1538, 0
    %1554 = vmatprep.subr.mxu0 0.0
    %1555 = vmatpush1.msra.mxu0 %v1539
    %1556 = vmatprep.subr.mxu0 0.0
    %1557 = vmatpush1.msra.mxu0 %v1540
    %1558 = vmatprep.subr.mxu0 0.0
    %1559 = vmatpush1.msra.mxu0 %v1541
    %1560 = vmatprep.subr.mxu0 0.0
    %1561 = vmatpush1.msra.mxu0 %v1542
    %1562 = vmatprep.subr.mxu0 0.0
    %1563 = vmatpush1.msra.mxu0 0.0
    %1564 = vmatprep.subr.mxu0 0.0
    %1565 = vmatpush1.msra.mxu0 0.0
    %1566 = vmatprep.subr.mxu0 0.0
    %1567 = vmatpush1.msra.mxu0 0.0
    %1568 = vmatprep.subr.mxu0 0.0
    %1569 = vmatpush1.msra.mxu0 0.0
    %1570 = vmatprep.subr.mxu0 0.0
    %1571 = vmatpush1.msra.mxu0 0.0
    %1572 = vmatprep.subr.mxu0 0.0
    %1573 = vmatpush1.msra.mxu0 0.0
    %1574 = vmatprep.subr.mxu0 0.0
    %1575 = vmatpush1.msra.mxu0 0.0
    %1576 = vmatprep.subr.mxu0 0.0
    %1577 = vmatpush1.msra.mxu0 0.0
    %1578 = vmatprep.subr.mxu0 0.0
    %1579 = vmatpush1.msra.mxu0 0.0
    %1580 = vmatprep.subr.mxu0 0.0
    %1581 = vmatpush1.msra.mxu0 0.0
    %1582 = vmatprep.subr.mxu0 0.0
    %1583 = vmatpush1.msra.mxu0 0.0
    %1584 = vmatprep.subr.mxu0 0.0
    %1585 = vmatpush1.msra.mxu0 0.0
    %1586 = vmatprep.subr.mxu0 0.0
    %1587 = vmatpush1.msra.mxu0 0.0
    %1588 = vmatprep.subr.mxu0 0.0
    %1589 = vmatpush1.msra.mxu0 0.0
    %1590 = vmatprep.subr.mxu0 0.0
    %1591 = vmatpush1.msra.mxu0 0.0
    %1592 = vmatprep.subr.mxu0 0.0
    %1593 = vmatpush1.msra.mxu0 0.0
    %1594 = vmatprep.subr.mxu0 0.0
    %1595 = vmatpush1.msra.mxu0 0.0
    %1596 = vmatprep.subr.mxu0 0.0
    %1597 = vmatpush1.msra.mxu0 0.0
    %1598 = vmatprep.subr.mxu0 0.0
    %1599 = vmatpush1.msra.mxu0 0.0
    %1600 = vmatprep.subr.mxu0 0.0
    %1601 = vmatpush1.msra.mxu0 0.0
    %1602 = vmatprep.subr.mxu0 0.0
    %1603 = vmatpush1.msra.mxu0 0.0
    %1604 = vmatprep.subr.mxu0 0.0
    %1605 = vmatpush1.msra.mxu0 0.0
    %1606 = vmatprep.subr.mxu0 0.0
    %1607 = vmatpush1.msra.mxu0 0.0
    %1608 = vmatprep.subr.mxu0 0.0
    %1609 = vmatpush1.msra.mxu0 0.0
    %1610 = vmatprep.subr.mxu0 0.0
    %1611 = vmatpush1.msra.mxu0 0.0
    %1612 = vmatprep.subr.mxu0 0.0
    %1613 = vmatpush1.msra.mxu0 0.0
    %1614 = vmatprep.subr.mxu0 0.0
    %1615 = vmatpush1.msra.mxu0 0.0
    %1616 = vmatprep.subr.mxu0 0.0
    %1617 = vmatpush1.msra.mxu0 0.0
    %1618 = vmatprep.mubr.f32.mxu0 0.0
    %1619 = vmatmul.mubr.f32.gmra.mrb[0].mxu0 %v1549
    %v1620 = vpop.f32.mrb[0].mxu0
    %v1621 = vadd.f32 %v1547, %v1620
    %v1622 = vpop.f32.mrb[0].mxu0
    %1623 = vmatprep.mubr.f32.mxu0 0.0
    %1624 = vmatmul.mubr.f32.gmra.mrb[0].mxu0 %v1552
    %v1625 = vpop.f32.mrb[0].mxu0
    %v1626 = vadd.f32 %v1547, %v1625
    %v1627 = vpop.f32.mrb[0].mxu0
    %1628 = vdwg.mxu0
    %v1629 = vmul.f32 %v1621, 0.5
    %v1630 = vmul.f32 %v1626, 0.5
    %v1631 = vmul.f32 %v1621, 0.70710677
    %v1632 = vmul.f32 %v1626, 0.70710677
    %vm1633 = vcmp.ge.f32.partialorder %v1631, 0.0
    %vm1634 = vcmp.ge.f32.partialorder %v1632, 0.0
    %v1635 = vsub.f32 0.0, %v1631
    %v1636 = vsub.f32 0.0, %v1632
    %v1637 = vsel %vm1633, %v1631, %v1635
    %v1638 = vsel %vm1634, %v1632, %v1636
    %v1639 = vmul.f32 %v1637, 0.3275911
    %v1640 = vmul.f32 %v1638, 0.3275911
    %v1641 = vadd.f32 %v1639, 1.0
    %v1642 = vadd.f32 %v1640, 1.0
    %v1643 = vrcp.pop %v1641
    %v1644 = vmul.f32 1.0, %v1643
    %v1645 = vrcp.pop %v1642
    %v1646 = vmul.f32 1.0, %v1645
    %v1647 = vmul.f32 %v1644, 1.0614054
    %v1648 = vmul.f32 %v1646, 1.0614054
    %v1649 = vsub.f32 %v1647, 1.4531521
    %v1650 = vsub.f32 %v1648, 1.4531521
    %v1651 = vmul.f32 %v1649, %v1644
    %v1652 = vmul.f32 %v1650, %v1646
    %v1653 = vadd.f32 %v1651, 1.4214138
    %v1654 = vadd.f32 %v1652, 1.4214138
    %v1655 = vmul.f32 %v1653, %v1644
    %v1656 = vmul.f32 %v1654, %v1646
    %v1657 = vsub.f32 %v1655, 0.28449672
    %v1658 = vsub.f32 %v1656, 0.28449672
    %v1659 = vmul.f32 %v1657, %v1644
    %v1660 = vmul.f32 %v1658, %v1646
    %v1661 = vadd.f32 %v1659, 0.2548296
    %v1662 = vadd.f32 %v1660, 0.2548296
    %v1663 = vmul.f32 %v1661, %v1644
    %v1664 = vmul.f32 %v1662, %v1646
    %v1665 = vsub.f32 0.0, %v1637
    %v1666 = vsub.f32 0.0, %v1638
    %v1667 = vmul.f32 %v1665, %v1637
    %v1668 = vmul.f32 %v1666, %v1638
    %v1669 = vmul.f32 %v1667, 1.442695
    %v1670 = vpow.pop %v1669
    %v1671 = vmul.f32 %v1668, 1.442695
    %v1672 = vpow.pop %v1671
    %v1673 = vmul.f32 %v1663, %v1670
    %v1674 = vmul.f32 %v1664, %v1672
    %v1675 = vsub.f32 1.0, %v1673
    %v1676 = vsub.f32 1.0, %v1674
    %v1677 = vsub.f32 0.0, %v1675
    %v1678 = vsub.f32 0.0, %v1676
    %v1679 = vsel %vm1633, %v1675, %v1677
    %v1680 = vsel %vm1634, %v1676, %v1678
    %v1681 = vadd.f32 %v1679, 1.0
    %v1682 = vadd.f32 %v1680, 1.0
    %v1683 = vmul.f32 %v1629, %v1681
    %v1684 = vmul.f32 %v1630, %v1682
    %v1685 = vld [vmem:[%s3 + $0x20] sm:$0xff]
    %v1686 = vld [vmem:[%s3 + $0x28] sm:$0xff]
    %v1687 = vld [vmem:[%s3 + $0x30] sm:$0xff]
    %v1688 = vld [vmem:[%s3 + $0x38] sm:$0xff]
    %v1689 = vld [vmem:[%s3 + $0x40] sm:$0xff]
    %v1690 = vld [vmem:[%s3 + $0x48] sm:$0xff]
    %v1691 = vld [vmem:[%s3 + $0x50] sm:$0xff]
    %v1692 = vld [vmem:[%s3 + $0x58] sm:$0xff]
    %v1693 = vld [vmem:[%s1 + $0x5] sm:$0x1]
    %v1694 = vlaneseq
    %v1695 = vshrl.u32 %v1694, 7
    %v1696 = vsub.s32 0, %v1695
    %v1697 = vrot.slane %v1693, %v1696
    %vm1698 = vcmask 523264
    %v1700 = vsel %vm1698, %v1683, 0
    %v1703 = vsel %vm1698, %v1684, 0
    %1705 = vmatprep.subr.mxu0 0.0
    %1706 = vmatpush1.msra.mxu0 %v1685
    %1707 = vmatprep.subr.mxu0 0.0
    %1708 = vmatpush1.msra.mxu0 %v1686
    %1709 = vmatprep.subr.mxu0 0.0
    %1710 = vmatpush1.msra.mxu0 %v1687
    %1711 = vmatprep.subr.mxu0 0.0
    %1712 = vmatpush1.msra.mxu0 %v1688
    %1713 = vmatprep.subr.mxu0 0.0
    %1714 = vmatpush1.msra.mxu0 %v1689
    %1715 = vmatprep.subr.mxu0 0.0
    %1716 = vmatpush1.msra.mxu0 %v1690
    %1717 = vmatprep.subr.mxu0 0.0
    %1718 = vmatpush1.msra.mxu0 %v1691
    %1719 = vmatprep.subr.mxu0 0.0
    %1720 = vmatpush1.msra.mxu0 %v1692
    %1721 = vmatprep.subr.mxu0 0.0
    %1722 = vmatpush1.msra.mxu0 0.0
    %1723 = vmatprep.subr.mxu0 0.0
    %1724 = vmatpush1.msra.mxu0 0.0
    %1725 = vmatprep.subr.mxu0 0.0
    %1726 = vmatpush1.msra.mxu0 0.0
    %1727 = vmatprep.subr.mxu0 0.0
    %1728 = vmatpush1.msra.mxu0 0.0
    %1729 = vmatprep.subr.mxu0 0.0
    %1730 = vmatpush1.msra.mxu0 0.0
    %1731 = vmatprep.subr.mxu0 0.0
    %1732 = vmatpush1.msra.mxu0 0.0
    %1733 = vmatprep.subr.mxu0 0.0
    %1734 = vmatpush1.msra.mxu0 0.0
    %1735 = vmatprep.subr.mxu0 0.0
    %1736 = vmatpush1.msra.mxu0 0.0
    %1737 = vmatprep.subr.mxu0 0.0
    %1738 = vmatpush1.msra.mxu0 0.0
    %1739 = vmatprep.subr.mxu0 0.0
    %1740 = vmatpush1.msra.mxu0 0.0
    %1741 = vmatprep.subr.mxu0 0.0
    %1742 = vmatpush1.msra.mxu0 0.0
    %1743 = vmatprep.subr.mxu0 0.0
    %1744 = vmatpush1.msra.mxu0 0.0
    %1745 = vmatprep.subr.mxu0 0.0
    %1746 = vmatpush1.msra.mxu0 0.0
    %1747 = vmatprep.subr.mxu0 0.0
    %1748 = vmatpush1.msra.mxu0 0.0
    %1749 = vmatprep.subr.mxu0 0.0
    %1750 = vmatpush1.msra.mxu0 0.0
    %1751 = vmatprep.subr.mxu0 0.0
    %1752 = vmatpush1.msra.mxu0 0.0
    %1753 = vmatprep.subr.mxu0 0.0
    %1754 = vmatpush1.msra.mxu0 0.0
    %1755 = vmatprep.subr.mxu0 0.0
    %1756 = vmatpush1.msra.mxu0 0.0
    %1757 = vmatprep.subr.mxu0 0.0
    %1758 = vmatpush1.msra.mxu0 0.0
    %1759 = vmatprep.subr.mxu0 0.0
    %1760 = vmatpush1.msra.mxu0 0.0
    %1761 = vmatprep.subr.mxu0 0.0
    %1762 = vmatpush1.msra.mxu0 0.0
    %1763 = vmatprep.subr.mxu0 0.0
    %1764 = vmatpush1.msra.mxu0 0.0
    %1765 = vmatprep.subr.mxu0 0.0
    %1766 = vmatpush1.msra.mxu0 0.0
    %1767 = vmatprep.subr.mxu0 0.0
    %1768 = vmatpush1.msra.mxu0 0.0
    %1769 = vmatprep.mubr.f32.mxu0 0.0
    %1770 = vmatmul.mubr.f32.gmra.mrb[0].mxu0 %v1700
    %v1771 = vpop.f32.mrb[0].mxu0
    %v1772 = vadd.f32 %v1697, %v1771
    %v1773 = vpop.f32.mrb[0].mxu0
    %1774 = vmatprep.mubr.f32.mxu0 0.0
    %1775 = vmatmul.mubr.f32.gmra.mrb[0].mxu0 %v1703
    %v1776 = vpop.f32.mrb[0].mxu0
    %v1777 = vadd.f32 %v1697, %v1776
    %v1778 = vpop.f32.mrb[0].mxu0
    %1779 = vdwg.mxu0
    %v1780 = vadd.f32 %v1497, %v1772
    %v1781 = vadd.f32 %v1498, %v1777
    %s1782 = scalar_lea.vmem %s1, 8
    %v1783 = vld [vmem:[%s1782] sm:$0x1]
    %v1784 = vld [vmem:[%s1782 + $0x1] sm:$0x1]
    %v1785 = vsel %vm25, %v1780, 0.0
    %1786 = vadd.xlane.f32.xlu0 %v1785
    %v1787 = vpop.xlane.xlu0 %1786
    %v1788 = vsel %vm25, %v1781, 0.0
    %1789 = vadd.xlane.f32.xlu0 %v1788
    %v1790 = vpop.xlane.xlu0 %1789
    %v1791 = vmul.f32 %v1787, %v32
    %v1792 = vmul.f32 %v1790, %v32
    %v1793 = vsub.f32 %v1780, %v1791
    %v1794 = vsub.f32 %v1781, %v1792
    %v1795 = vmul.f32 %v1793, %v1793
    %v1796 = vmul.f32 %v1794, %v1794
    %v1797 = vsel %vm25, %v1795, 0.0
    %1798 = vadd.xlane.f32.xlu0 %v1797
    %v1799 = vpop.xlane.xlu0 %1798
    %v1800 = vsel %vm25, %v1796, 0.0
    %1801 = vadd.xlane.f32.xlu0 %v1800
    %v1802 = vpop.xlane.xlu0 %1801
    %v1803 = vmul.f32 %v1799, %v32
    %v1804 = vmul.f32 %v1802, %v32
    %v1805 = vadd.f32 %v1803, 1e-05
    %v1806 = vadd.f32 %v1804, 1e-05
    %v1807 = vrsqrt.pop %v1805
    %v1808 = vrsqrt.pop %v1806
    %v1809 = vmul.f32 %v1793, %v1807
    %v1810 = vmul.f32 %v1794, %v1808
    %v1811 = vlaneseq
    %v1812 = vshrl.u32 %v1811, 7
    %v1813 = vsub.s32 0, %v1812
    %v1814 = vrot.slane %v1783, %v1813
    %v1815 = vmul.f32 %v1809, %v1814
    %v1816 = vmul.f32 %v1810, %v1814
    %v1817 = vlaneseq
    %v1818 = vshrl.u32 %v1817, 7
    %v1819 = vsub.s32 0, %v1818
    %v1820 = vrot.slane %v1784, %v1819
    %v1821 = vadd.f32 %v1815, %v1820
    %v1822 = vadd.f32 %v1816, %v1820
    %s1823 = scalar_lea.vmem %s2, 64
    %v1824 = vld [vmem:[%s1823] sm:$0xff]
    %v1825 = vld [vmem:[%s1823 + $0x8] sm:$0xff]
    %v1826 = vld [vmem:[%s1823 + $0x10] sm:$0xff]
    %v1827 = vld [vmem:[%s1823 + $0x18] sm:$0xff]
    %v1828 = vld [vmem:[%s1823 + $0x20] sm:$0xff]
    %v1829 = vld [vmem:[%s1823 + $0x28] sm:$0xff]
    %v1830 = vld [vmem:[%s1823 + $0x30] sm:$0xff]
    %v1831 = vld [vmem:[%s1823 + $0x38] sm:$0xff]
    %v1833 = vsel %vm25, %v1821, 0
    %v1836 = vsel %vm25, %v1822, 0
    %1838 = vmatprep.subr.mxu0 %v1825
    %1839 = vmatpush1.msra.mxu0 %v1824
    %1840 = vmatprep.subr.mxu0 %v1827
    %1841 = vmatpush1.msra.mxu0 %v1826
    %1842 = vmatprep.subr.mxu0 %v1829
    %1843 = vmatpush1.msra.mxu0 %v1828
    %1844 = vmatprep.subr.mxu0 %v1831
    %1845 = vmatpush1.msra.mxu0 %v1830
    %1846 = vmatprep.subr.mxu0 0.0
    %1847 = vmatpush1.msra.mxu0 0.0
    %1848 = vmatprep.subr.mxu0 0.0
    %1849 = vmatpush1.msra.mxu0 0.0
    %1850 = vmatprep.subr.mxu0 0.0
    %1851 = vmatpush1.msra.mxu0 0.0
    %1852 = vmatprep.subr.mxu0 0.0
    %1853 = vmatpush1.msra.mxu0 0.0
    %1854 = vmatprep.subr.mxu0 0.0
    %1855 = vmatpush1.msra.mxu0 0.0
    %1856 = vmatprep.subr.mxu0 0.0
    %1857 = vmatpush1.msra.mxu0 0.0
    %1858 = vmatprep.subr.mxu0 0.0
    %1859 = vmatpush1.msra.mxu0 0.0
    %1860 = vmatprep.subr.mxu0 0.0
    %1861 = vmatpush1.msra.mxu0 0.0
    %1862 = vmatprep.subr.mxu0 0.0
    %1863 = vmatpush1.msra.mxu0 0.0
    %1864 = vmatprep.subr.mxu0 0.0
    %1865 = vmatpush1.msra.mxu0 0.0
    %1866 = vmatprep.subr.mxu0 0.0
    %1867 = vmatpush1.msra.mxu0 0.0
    %1868 = vmatprep.subr.mxu0 0.0
    %1869 = vmatpush1.msra.mxu0 0.0
    %1870 = vmatprep.subr.mxu0 0.0
    %1871 = vmatpush1.msra.mxu0 0.0
    %1872 = vmatprep.subr.mxu0 0.0
    %1873 = vmatpush1.msra.mxu0 0.0
    %1874 = vmatprep.subr.mxu0 0.0
    %1875 = vmatpush1.msra.mxu0 0.0
    %1876 = vmatprep.subr.mxu0 0.0
    %1877 = vmatpush1.msra.mxu0 0.0
    %1878 = vmatprep.subr.mxu0 0.0
    %1879 = vmatpush1.msra.mxu0 0.0
    %1880 = vmatprep.subr.mxu0 0.0
    %1881 = vmatpush1.msra.mxu0 0.0
    %1882 = vmatprep.subr.mxu0 0.0
    %1883 = vmatpush1.msra.mxu0 0.0
    %1884 = vmatprep.subr.mxu0 0.0
    %1885 = vmatpush1.msra.mxu0 0.0
    %1886 = vmatprep.subr.mxu0 0.0
    %1887 = vmatpush1.msra.mxu0 0.0
    %1888 = vmatprep.subr.mxu0 0.0
    %1889 = vmatpush1.msra.mxu0 0.0
    %1890 = vmatprep.subr.mxu0 0.0
    %1891 = vmatpush1.msra.mxu0 0.0
    %1892 = vmatprep.subr.mxu0 0.0
    %1893 = vmatpush1.msra.mxu0 0.0
    %1894 = vmatprep.subr.mxu0 0.0
    %1895 = vmatpush1.msra.mxu0 0.0
    %1896 = vmatprep.subr.mxu0 0.0
    %1897 = vmatpush1.msra.mxu0 0.0
    %1898 = vmatprep.subr.mxu0 0.0
    %1899 = vmatpush1.msra.mxu0 0.0
    %1900 = vmatprep.subr.mxu0 0.0
    %1901 = vmatpush1.msra.mxu0 0.0
    %1902 = vmatprep.mubr.f32.mxu0 0.0
    %1903 = vmatmul.mubr.f32.gmra.mrb[0].mxu0 %v1833
    %v1904 = vpop.f32.mrb[0].mxu0
    %v1905 = vadd.f32 0.0, %v1904
    %v1906 = vpop.f32.mrb[0].mxu0
    %v1907 = vadd.f32 0.0, %v1906
    %1908 = vmatprep.mubr.f32.mxu0 0.0
    %1909 = vmatmul.mubr.f32.gmra.mrb[0].mxu0 %v1836
    %v1910 = vpop.f32.mrb[0].mxu0
    %v1911 = vadd.f32 0.0, %v1910
    %v1912 = vpop.f32.mrb[0].mxu0
    %v1913 = vadd.f32 0.0, %v1912
    %1914 = vdwg.mxu0
    %1916 = vrot.lane.b32.xlu0 %v1905, 96
    %v1917 = vpop.permute.xlu0 %1916
    %v1918 = vsel %vm159, %v1905, 0
    %v1920 = vsel %vm159, %v1917, 0
    %1922 = vmatprep.subr.mxu0 0.0
    %1923 = vmatpush1.xpose.msra.mxu0 %v1920
    %1924 = vmatprep.subr.mxu0 0.0
    %1925 = vmatpush1.xpose.msra.mxu0 0.0
    %1926 = vmatprep.subr.mxu0 0.0
    %1927 = vmatpush1.xpose.msra.mxu0 0.0
    %1928 = vmatprep.subr.mxu0 0.0
    %1929 = vmatpush1.xpose.msra.mxu0 0.0
    %1930 = vmatprep.subr.mxu0 0.0
    %1931 = vmatpush1.xpose.msra.mxu0 0.0
    %1932 = vmatprep.subr.mxu0 0.0
    %1933 = vmatpush1.xpose.msra.mxu0 0.0
    %1934 = vmatprep.subr.mxu0 0.0
    %1935 = vmatpush1.xpose.msra.mxu0 0.0
    %1936 = vmatprep.subr.mxu0 0.0
    %1937 = vmatpush1.xpose.msra.mxu0 0.0
    %1938 = vmatprep.subr.mxu0 0.0
    %1939 = vmatpush1.xpose.msra.mxu0 0.0
    %1940 = vmatprep.subr.mxu0 0.0
    %1941 = vmatpush1.xpose.msra.mxu0 0.0
    %1942 = vmatprep.subr.mxu0 0.0
    %1943 = vmatpush1.xpose.msra.mxu0 0.0
    %1944 = vmatprep.subr.mxu0 0.0
    %1945 = vmatpush1.xpose.msra.mxu0 0.0
    %1946 = vmatprep.subr.mxu0 0.0
    %1947 = vmatpush1.xpose.msra.mxu0 0.0
    %1948 = vmatprep.subr.mxu0 0.0
    %1949 = vmatpush1.xpose.msra.mxu0 0.0
    %1950 = vmatprep.subr.mxu0 0.0
    %1951 = vmatpush1.xpose.msra.mxu0 0.0
    %1952 = vmatprep.subr.mxu0 0.0
    %1953 = vmatpush1.xpose.msra.mxu0 0.0
    %1954 = vmatprep.subr.mxu0 0.0
    %1955 = vmatpush1.xpose.msra.mxu0 0.0
    %1956 = vmatprep.subr.mxu0 0.0
    %1957 = vmatpush1.xpose.msra.mxu0 0.0
    %1958 = vmatprep.subr.mxu0 0.0
    %1959 = vmatpush1.xpose.msra.mxu0 0.0
    %1960 = vmatprep.subr.mxu0 0.0
    %1961 = vmatpush1.xpose.msra.mxu0 0.0
    %1962 = vmatprep.subr.mxu0 0.0
    %1963 = vmatpush1.xpose.msra.mxu0 0.0
    %1964 = vmatprep.subr.mxu0 0.0
    %1965 = vmatpush1.xpose.msra.mxu0 0.0
    %1966 = vmatprep.subr.mxu0 0.0
    %1967 = vmatpush1.xpose.msra.mxu0 0.0
    %1968 = vmatprep.subr.mxu0 0.0
    %1969 = vmatpush1.xpose.msra.mxu0 0.0
    %1970 = vmatprep.subr.mxu0 0.0
    %1971 = vmatpush1.xpose.msra.mxu0 0.0
    %1972 = vmatprep.subr.mxu0 0.0
    %1973 = vmatpush1.xpose.msra.mxu0 0.0
    %1974 = vmatprep.subr.mxu0 0.0
    %1975 = vmatpush1.xpose.msra.mxu0 0.0
    %1976 = vmatprep.subr.mxu0 0.0
    %1977 = vmatpush1.xpose.msra.mxu0 0.0
    %1978 = vmatprep.subr.mxu0 0.0
    %1979 = vmatpush1.xpose.msra.mxu0 0.0
    %1980 = vmatprep.subr.mxu0 0.0
    %1981 = vmatpush1.xpose.msra.mxu0 0.0
    %1982 = vmatprep.subr.mxu0 0.0
    %1983 = vmatpush1.xpose.msra.mxu0 0.0
    %1984 = vmatprep.subr.mxu0 0.0
    %1985 = vmatpush1.xpose.msra.mxu0 0.0
    %1986 = vmatprep.mubr.f32.mxu0 0.0
    %1987 = vmatmul.mubr.f32.gmra.mrb[0].mxu0 %v1918
    %v1988 = vpop.f32.mrb[0].mxu0
    %v1989 = vadd.f32 0.0, %v1988
    %v1990 = vpop.f32.mrb[0].mxu0
    %1991 = vdwg.mxu0
    %v1992 = vsel %vm159, %v1989, -inf
    %1993 = vmax.xlane.f32.xlu0 %v1992
    %v1994 = vpop.xlane.xlu0 %1993
    %v1995 = vsub.f32 %v1989, %v1994
    %v1996 = vmul.f32 %v1995, 1.442695
    %v1997 = vpow.pop %v1996
    %v1998 = vsel %vm159, %v1997, 0.0
    %1999 = vadd.xlane.f32.xlu0 %v1998
    %v2000 = vpop.xlane.xlu0 %1999
    %v2001 = vrcp.pop %v2000
    %v2002 = vmul.f32 %v1997, %v2001
    %s2003 = scalar_lea.vmem [#allocation4], 64
    %2004 = vst.msk [vmem:[%s2003] sm:$0xff] %vm159, %v2002
    %2005 = vrot.lane.b32.xlu0 %v1905, 120
    %v2006 = vpop.permute.xlu0 %2005
    %2007 = vrot.lane.b32.xlu0 %v1905, 88
    %v2008 = vpop.permute.xlu0 %2007
    %v2009 = vsel %vm159, %v2006, 0
    %v2011 = vsel %vm159, %v2008, 0
    %2013 = vmatprep.subr.mxu0 0.0
    %2014 = vmatpush1.xpose.msra.mxu0 %v2011
    %2015 = vmatprep.subr.mxu0 0.0
    %2016 = vmatpush1.xpose.msra.mxu0 0.0
    %2017 = vmatprep.subr.mxu0 0.0
    %2018 = vmatpush1.xpose.msra.mxu0 0.0
    %2019 = vmatprep.subr.mxu0 0.0
    %2020 = vmatpush1.xpose.msra.mxu0 0.0
    %2021 = vmatprep.subr.mxu0 0.0
    %2022 = vmatpush1.xpose.msra.mxu0 0.0
    %2023 = vmatprep.subr.mxu0 0.0
    %2024 = vmatpush1.xpose.msra.mxu0 0.0
    %2025 = vmatprep.subr.mxu0 0.0
    %2026 = vmatpush1.xpose.msra.mxu0 0.0
    %2027 = vmatprep.subr.mxu0 0.0
    %2028 = vmatpush1.xpose.msra.mxu0 0.0
    %2029 = vmatprep.subr.mxu0 0.0
    %2030 = vmatpush1.xpose.msra.mxu0 0.0
    %2031 = vmatprep.subr.mxu0 0.0
    %2032 = vmatpush1.xpose.msra.mxu0 0.0
    %2033 = vmatprep.subr.mxu0 0.0
    %2034 = vmatpush1.xpose.msra.mxu0 0.0
    %2035 = vmatprep.subr.mxu0 0.0
    %2036 = vmatpush1.xpose.msra.mxu0 0.0
    %2037 = vmatprep.subr.mxu0 0.0
    %2038 = vmatpush1.xpose.msra.mxu0 0.0
    %2039 = vmatprep.subr.mxu0 0.0
    %2040 = vmatpush1.xpose.msra.mxu0 0.0
    %2041 = vmatprep.subr.mxu0 0.0
    %2042 = vmatpush1.xpose.msra.mxu0 0.0
    %2043 = vmatprep.subr.mxu0 0.0
    %2044 = vmatpush1.xpose.msra.mxu0 0.0
    %2045 = vmatprep.subr.mxu0 0.0
    %2046 = vmatpush1.xpose.msra.mxu0 0.0
    %2047 = vmatprep.subr.mxu0 0.0
    %2048 = vmatpush1.xpose.msra.mxu0 0.0
    %2049 = vmatprep.subr.mxu0 0.0
    %2050 = vmatpush1.xpose.msra.mxu0 0.0
    %2051 = vmatprep.subr.mxu0 0.0
    %2052 = vmatpush1.xpose.msra.mxu0 0.0
    %2053 = vmatprep.subr.mxu0 0.0
    %2054 = vmatpush1.xpose.msra.mxu0 0.0
    %2055 = vmatprep.subr.mxu0 0.0
    %2056 = vmatpush1.xpose.msra.mxu0 0.0
    %2057 = vmatprep.subr.mxu0 0.0
    %2058 = vmatpush1.xpose.msra.mxu0 0.0
    %2059 = vmatprep.subr.mxu0 0.0
    %2060 = vmatpush1.xpose.msra.mxu0 0.0
    %2061 = vmatprep.subr.mxu0 0.0
    %2062 = vmatpush1.xpose.msra.mxu0 0.0
    %2063 = vmatprep.subr.mxu0 0.0
    %2064 = vmatpush1.xpose.msra.mxu0 0.0
    %2065 = vmatprep.subr.mxu0 0.0
    %2066 = vmatpush1.xpose.msra.mxu0 0.0
    %2067 = vmatprep.subr.mxu0 0.0
    %2068 = vmatpush1.xpose.msra.mxu0 0.0
    %2069 = vmatprep.subr.mxu0 0.0
    %2070 = vmatpush1.xpose.msra.mxu0 0.0
    %2071 = vmatprep.subr.mxu0 0.0
    %2072 = vmatpush1.xpose.msra.mxu0 0.0
    %2073 = vmatprep.subr.mxu0 0.0
    %2074 = vmatpush1.xpose.msra.mxu0 0.0
    %2075 = vmatprep.subr.mxu0 0.0
    %2076 = vmatpush1.xpose.msra.mxu0 0.0
    %2077 = vmatprep.mubr.f32.mxu0 0.0
    %2078 = vmatmul.mubr.f32.gmra.mrb[0].mxu0 %v2009
    %v2079 = vpop.f32.mrb[0].mxu0
    %v2080 = vadd.f32 0.0, %v2079
    %v2081 = vpop.f32.mrb[0].mxu0
    %2082 = vdwg.mxu0
    %v2083 = vsel %vm159, %v2080, -inf
    %2084 = vmax.xlane.f32.xlu0 %v2083
    %v2085 = vpop.xlane.xlu0 %2084
    %v2086 = vsub.f32 %v2080, %v2085
    %v2087 = vmul.f32 %v2086, 1.442695
    %v2088 = vpow.pop %v2087
    %v2089 = vsel %vm159, %v2088, 0.0
    %2090 = vadd.xlane.f32.xlu0 %v2089
    %v2091 = vpop.xlane.xlu0 %2090
    %v2092 = vrcp.pop %v2091
    %v2093 = vmul.f32 %v2088, %v2092
    %s2094 = scalar_lea.vmem [#allocation4], 72
    %2095 = vst.msk [vmem:[%s2094] sm:$0xff] %vm159, %v2093
    %2096 = vrot.lane.b32.xlu0 %v1905, 32
    %v2097 = vpop.permute.xlu0 %2096
    %v2100 = vsel %vm159, %v2093, 0
    %2102 = vmatprep.subr.mxu0 0.0
    %2103 = vmatpush1.msra.mxu0 %v2097
    %2104 = vmatprep.subr.mxu0 0.0
    %2105 = vmatpush1.msra.mxu0 0.0
    %2106 = vmatprep.subr.mxu0 0.0
    %2107 = vmatpush1.msra.mxu0 0.0
    %2108 = vmatprep.subr.mxu0 0.0
    %2109 = vmatpush1.msra.mxu0 0.0
    %2110 = vmatprep.subr.mxu0 0.0
    %2111 = vmatpush1.msra.mxu0 0.0
    %2112 = vmatprep.subr.mxu0 0.0
    %2113 = vmatpush1.msra.mxu0 0.0
    %2114 = vmatprep.subr.mxu0 0.0
    %2115 = vmatpush1.msra.mxu0 0.0
    %2116 = vmatprep.subr.mxu0 0.0
    %2117 = vmatpush1.msra.mxu0 0.0
    %2118 = vmatprep.subr.mxu0 0.0
    %2119 = vmatpush1.msra.mxu0 0.0
    %2120 = vmatprep.subr.mxu0 0.0
    %2121 = vmatpush1.msra.mxu0 0.0
    %2122 = vmatprep.subr.mxu0 0.0
    %2123 = vmatpush1.msra.mxu0 0.0
    %2124 = vmatprep.subr.mxu0 0.0
    %2125 = vmatpush1.msra.mxu0 0.0
    %2126 = vmatprep.subr.mxu0 0.0
    %2127 = vmatpush1.msra.mxu0 0.0
    %2128 = vmatprep.subr.mxu0 0.0
    %2129 = vmatpush1.msra.mxu0 0.0
    %2130 = vmatprep.subr.mxu0 0.0
    %2131 = vmatpush1.msra.mxu0 0.0
    %2132 = vmatprep.subr.mxu0 0.0
    %2133 = vmatpush1.msra.mxu0 0.0
    %2134 = vmatprep.subr.mxu0 0.0
    %2135 = vmatpush1.msra.mxu0 0.0
    %2136 = vmatprep.subr.mxu0 0.0
    %2137 = vmatpush1.msra.mxu0 0.0
    %2138 = vmatprep.subr.mxu0 0.0
    %2139 = vmatpush1.msra.mxu0 0.0
    %2140 = vmatprep.subr.mxu0 0.0
    %2141 = vmatpush1.msra.mxu0 0.0
    %2142 = vmatprep.subr.mxu0 0.0
    %2143 = vmatpush1.msra.mxu0 0.0
    %2144 = vmatprep.subr.mxu0 0.0
    %2145 = vmatpush1.msra.mxu0 0.0
    %2146 = vmatprep.subr.mxu0 0.0
    %2147 = vmatpush1.msra.mxu0 0.0
    %2148 = vmatprep.subr.mxu0 0.0
    %2149 = vmatpush1.msra.mxu0 0.0
    %2150 = vmatprep.subr.mxu0 0.0
    %2151 = vmatpush1.msra.mxu0 0.0
    %2152 = vmatprep.subr.mxu0 0.0
    %2153 = vmatpush1.msra.mxu0 0.0
    %2154 = vmatprep.subr.mxu0 0.0
    %2155 = vmatpush1.msra.mxu0 0.0
    %2156 = vmatprep.subr.mxu0 0.0
    %2157 = vmatpush1.msra.mxu0 0.0
    %2158 = vmatprep.subr.mxu0 0.0
    %2159 = vmatpush1.msra.mxu0 0.0
    %2160 = vmatprep.subr.mxu0 0.0
    %2161 = vmatpush1.msra.mxu0 0.0
    %2162 = vmatprep.subr.mxu0 0.0
    %2163 = vmatpush1.msra.mxu0 0.0
    %2164 = vmatprep.subr.mxu0 0.0
    %2165 = vmatpush1.msra.mxu0 0.0
    %2166 = vmatprep.mubr.f32.mxu0 0.0
    %2167 = vmatmul.mubr.f32.gmra.mrb[0].mxu0 %v2100
    %v2168 = vpop.f32.mrb[0].mxu0
    %v2169 = vadd.f32 0.0, %v2168
    %v2170 = vpop.f32.mrb[0].mxu0
    %2171 = vdwg.mxu0
    %2172 = vrot.lane.b32.xlu0 %v1905, 64
    %v2173 = vpop.permute.xlu0 %2172
    %v2176 = vsel %vm159, %v2002, 0
    %2178 = vmatprep.subr.mxu0 0.0
    %2179 = vmatpush1.msra.mxu0 %v2173
    %2180 = vmatprep.subr.mxu0 0.0
    %2181 = vmatpush1.msra.mxu0 0.0
    %2182 = vmatprep.subr.mxu0 0.0
    %2183 = vmatpush1.msra.mxu0 0.0
    %2184 = vmatprep.subr.mxu0 0.0
    %2185 = vmatpush1.msra.mxu0 0.0
    %2186 = vmatprep.subr.mxu0 0.0
    %2187 = vmatpush1.msra.mxu0 0.0
    %2188 = vmatprep.subr.mxu0 0.0
    %2189 = vmatpush1.msra.mxu0 0.0
    %2190 = vmatprep.subr.mxu0 0.0
    %2191 = vmatpush1.msra.mxu0 0.0
    %2192 = vmatprep.subr.mxu0 0.0
    %2193 = vmatpush1.msra.mxu0 0.0
    %2194 = vmatprep.subr.mxu0 0.0
    %2195 = vmatpush1.msra.mxu0 0.0
    %2196 = vmatprep.subr.mxu0 0.0
    %2197 = vmatpush1.msra.mxu0 0.0
    %2198 = vmatprep.subr.mxu0 0.0
    %2199 = vmatpush1.msra.mxu0 0.0
    %2200 = vmatprep.subr.mxu0 0.0
    %2201 = vmatpush1.msra.mxu0 0.0
    %2202 = vmatprep.subr.mxu0 0.0
    %2203 = vmatpush1.msra.mxu0 0.0
    %2204 = vmatprep.subr.mxu0 0.0
    %2205 = vmatpush1.msra.mxu0 0.0
    %2206 = vmatprep.subr.mxu0 0.0
    %2207 = vmatpush1.msra.mxu0 0.0
    %2208 = vmatprep.subr.mxu0 0.0
    %2209 = vmatpush1.msra.mxu0 0.0
    %2210 = vmatprep.subr.mxu0 0.0
    %2211 = vmatpush1.msra.mxu0 0.0
    %2212 = vmatprep.subr.mxu0 0.0
    %2213 = vmatpush1.msra.mxu0 0.0
    %2214 = vmatprep.subr.mxu0 0.0
    %2215 = vmatpush1.msra.mxu0 0.0
    %2216 = vmatprep.subr.mxu0 0.0
    %2217 = vmatpush1.msra.mxu0 0.0
    %2218 = vmatprep.subr.mxu0 0.0
    %2219 = vmatpush1.msra.mxu0 0.0
    %2220 = vmatprep.subr.mxu0 0.0
    %2221 = vmatpush1.msra.mxu0 0.0
    %2222 = vmatprep.subr.mxu0 0.0
    %2223 = vmatpush1.msra.mxu0 0.0
    %2224 = vmatprep.subr.mxu0 0.0
    %2225 = vmatpush1.msra.mxu0 0.0
    %2226 = vmatprep.subr.mxu0 0.0
    %2227 = vmatpush1.msra.mxu0 0.0
    %2228 = vmatprep.subr.mxu0 0.0
    %2229 = vmatpush1.msra.mxu0 0.0
    %2230 = vmatprep.subr.mxu0 0.0
    %2231 = vmatpush1.msra.mxu0 0.0
    %2232 = vmatprep.subr.mxu0 0.0
    %2233 = vmatpush1.msra.mxu0 0.0
    %2234 = vmatprep.subr.mxu0 0.0
    %2235 = vmatpush1.msra.mxu0 0.0
    %2236 = vmatprep.subr.mxu0 0.0
    %2237 = vmatpush1.msra.mxu0 0.0
    %2238 = vmatprep.subr.mxu0 0.0
    %2239 = vmatpush1.msra.mxu0 0.0
    %2240 = vmatprep.subr.mxu0 0.0
    %2241 = vmatpush1.msra.mxu0 0.0
    %2242 = vmatprep.mubr.f32.mxu0 0.0
    %2243 = vmatmul.mubr.f32.gmra.mrb[0].mxu0 %v2176
    %v2244 = vpop.f32.mrb[0].mxu0
    %v2245 = vadd.f32 %v2169, %v2244
    %v2246 = vpop.f32.mrb[0].mxu0
    %2247 = vdwg.mxu0
    %2248 = vrot.lane.b32.xlu0 %v1905, 112
    %v2249 = vpop.permute.xlu0 %2248
    %2250 = vrot.lane.b32.xlu0 %v1905, 80
    %v2251 = vpop.permute.xlu0 %2250
    %v2252 = vsel %vm159, %v2249, 0
    %v2254 = vsel %vm159, %v2251, 0
    %2256 = vmatprep.subr.mxu0 0.0
    %2257 = vmatpush1.xpose.msra.mxu0 %v2254
    %2258 = vmatprep.subr.mxu0 0.0
    %2259 = vmatpush1.xpose.msra.mxu0 0.0
    %2260 = vmatprep.subr.mxu0 0.0
    %2261 = vmatpush1.xpose.msra.mxu0 0.0
    %2262 = vmatprep.subr.mxu0 0.0
    %2263 = vmatpush1.xpose.msra.mxu0 0.0
    %2264 = vmatprep.subr.mxu0 0.0
    %2265 = vmatpush1.xpose.msra.mxu0 0.0
    %2266 = vmatprep.subr.mxu0 0.0
    %2267 = vmatpush1.xpose.msra.mxu0 0.0
    %2268 = vmatprep.subr.mxu0 0.0
    %2269 = vmatpush1.xpose.msra.mxu0 0.0
    %2270 = vmatprep.subr.mxu0 0.0
    %2271 = vmatpush1.xpose.msra.mxu0 0.0
    %2272 = vmatprep.subr.mxu0 0.0
    %2273 = vmatpush1.xpose.msra.mxu0 0.0
    %2274 = vmatprep.subr.mxu0 0.0
    %2275 = vmatpush1.xpose.msra.mxu0 0.0
    %2276 = vmatprep.subr.mxu0 0.0
    %2277 = vmatpush1.xpose.msra.mxu0 0.0
    %2278 = vmatprep.subr.mxu0 0.0
    %2279 = vmatpush1.xpose.msra.mxu0 0.0
    %2280 = vmatprep.subr.mxu0 0.0
    %2281 = vmatpush1.xpose.msra.mxu0 0.0
    %2282 = vmatprep.subr.mxu0 0.0
    %2283 = vmatpush1.xpose.msra.mxu0 0.0
    %2284 = vmatprep.subr.mxu0 0.0
    %2285 = vmatpush1.xpose.msra.mxu0 0.0
    %2286 = vmatprep.subr.mxu0 0.0
    %2287 = vmatpush1.xpose.msra.mxu0 0.0
    %2288 = vmatprep.subr.mxu0 0.0
    %2289 = vmatpush1.xpose.msra.mxu0 0.0
    %2290 = vmatprep.subr.mxu0 0.0
    %2291 = vmatpush1.xpose.msra.mxu0 0.0
    %2292 = vmatprep.subr.mxu0 0.0
    %2293 = vmatpush1.xpose.msra.mxu0 0.0
    %2294 = vmatprep.subr.mxu0 0.0
    %2295 = vmatpush1.xpose.msra.mxu0 0.0
    %2296 = vmatprep.subr.mxu0 0.0
    %2297 = vmatpush1.xpose.msra.mxu0 0.0
    %2298 = vmatprep.subr.mxu0 0.0
    %2299 = vmatpush1.xpose.msra.mxu0 0.0
    %2300 = vmatprep.subr.mxu0 0.0
    %2301 = vmatpush1.xpose.msra.mxu0 0.0
    %2302 = vmatprep.subr.mxu0 0.0
    %2303 = vmatpush1.xpose.msra.mxu0 0.0
    %2304 = vmatprep.subr.mxu0 0.0
    %2305 = vmatpush1.xpose.msra.mxu0 0.0
    %2306 = vmatprep.subr.mxu0 0.0
    %2307 = vmatpush1.xpose.msra.mxu0 0.0
    %2308 = vmatprep.subr.mxu0 0.0
    %2309 = vmatpush1.xpose.msra.mxu0 0.0
    %2310 = vmatprep.subr.mxu0 0.0
    %2311 = vmatpush1.xpose.msra.mxu0 0.0
    %2312 = vmatprep.subr.mxu0 0.0
    %2313 = vmatpush1.xpose.msra.mxu0 0.0
    %2314 = vmatprep.subr.mxu0 0.0
    %2315 = vmatpush1.xpose.msra.mxu0 0.0
    %2316 = vmatprep.subr.mxu0 0.0
    %2317 = vmatpush1.xpose.msra.mxu0 0.0
    %2318 = vmatprep.subr.mxu0 0.0
    %2319 = vmatpush1.xpose.msra.mxu0 0.0
    %2320 = vmatprep.mubr.f32.mxu0 0.0
    %2321 = vmatmul.mubr.f32.gmra.mrb[0].mxu0 %v2252
    %v2322 = vpop.f32.mrb[0].mxu0
    %v2323 = vadd.f32 0.0, %v2322
    %v2324 = vpop.f32.mrb[0].mxu0
    %2325 = vdwg.mxu0
    %v2326 = vsel %vm159, %v2323, -inf
    %2327 = vmax.xlane.f32.xlu0 %v2326
    %v2328 = vpop.xlane.xlu0 %2327
    %v2329 = vsub.f32 %v2323, %v2328
    %v2330 = vmul.f32 %v2329, 1.442695
    %v2331 = vpow.pop %v2330
    %v2332 = vsel %vm159, %v2331, 0.0
    %2333 = vadd.xlane.f32.xlu0 %v2332
    %v2334 = vpop.xlane.xlu0 %2333
    %v2335 = vrcp.pop %v2334
    %v2336 = vmul.f32 %v2331, %v2335
    %s2337 = scalar_lea.vmem [#allocation4], 80
    %2338 = vst.msk [vmem:[%s2337] sm:$0xff] %vm159, %v2336
    %v2340 = vsel %vm159, %v2336, 0
    %2342 = vmatprep.subr.mxu0 0.0
    %2343 = vmatpush1.msra.mxu0 %v1907
    %2344 = vmatprep.subr.mxu0 0.0
    %2345 = vmatpush1.msra.mxu0 0.0
    %2346 = vmatprep.subr.mxu0 0.0
    %2347 = vmatpush1.msra.mxu0 0.0
    %2348 = vmatprep.subr.mxu0 0.0
    %2349 = vmatpush1.msra.mxu0 0.0
    %2350 = vmatprep.subr.mxu0 0.0
    %2351 = vmatpush1.msra.mxu0 0.0
    %2352 = vmatprep.subr.mxu0 0.0
    %2353 = vmatpush1.msra.mxu0 0.0
    %2354 = vmatprep.subr.mxu0 0.0
    %2355 = vmatpush1.msra.mxu0 0.0
    %2356 = vmatprep.subr.mxu0 0.0
    %2357 = vmatpush1.msra.mxu0 0.0
    %2358 = vmatprep.subr.mxu0 0.0
    %2359 = vmatpush1.msra.mxu0 0.0
    %2360 = vmatprep.subr.mxu0 0.0
    %2361 = vmatpush1.msra.mxu0 0.0
    %2362 = vmatprep.subr.mxu0 0.0
    %2363 = vmatpush1.msra.mxu0 0.0
    %2364 = vmatprep.subr.mxu0 0.0
    %2365 = vmatpush1.msra.mxu0 0.0
    %2366 = vmatprep.subr.mxu0 0.0
    %2367 = vmatpush1.msra.mxu0 0.0
    %2368 = vmatprep.subr.mxu0 0.0
    %2369 = vmatpush1.msra.mxu0 0.0
    %2370 = vmatprep.subr.mxu0 0.0
    %2371 = vmatpush1.msra.mxu0 0.0
    %2372 = vmatprep.subr.mxu0 0.0
    %2373 = vmatpush1.msra.mxu0 0.0
    %2374 = vmatprep.subr.mxu0 0.0
    %2375 = vmatpush1.msra.mxu0 0.0
    %2376 = vmatprep.subr.mxu0 0.0
    %2377 = vmatpush1.msra.mxu0 0.0
    %2378 = vmatprep.subr.mxu0 0.0
    %2379 = vmatpush1.msra.mxu0 0.0
    %2380 = vmatprep.subr.mxu0 0.0
    %2381 = vmatpush1.msra.mxu0 0.0
    %2382 = vmatprep.subr.mxu0 0.0
    %2383 = vmatpush1.msra.mxu0 0.0
    %2384 = vmatprep.subr.mxu0 0.0
    %2385 = vmatpush1.msra.mxu0 0.0
    %2386 = vmatprep.subr.mxu0 0.0
    %2387 = vmatpush1.msra.mxu0 0.0
    %2388 = vmatprep.subr.mxu0 0.0
    %2389 = vmatpush1.msra.mxu0 0.0
    %2390 = vmatprep.subr.mxu0 0.0
    %2391 = vmatpush1.msra.mxu0 0.0
    %2392 = vmatprep.subr.mxu0 0.0
    %2393 = vmatpush1.msra.mxu0 0.0
    %2394 = vmatprep.subr.mxu0 0.0
    %2395 = vmatpush1.msra.mxu0 0.0
    %2396 = vmatprep.subr.mxu0 0.0
    %2397 = vmatpush1.msra.mxu0 0.0
    %2398 = vmatprep.subr.mxu0 0.0
    %2399 = vmatpush1.msra.mxu0 0.0
    %2400 = vmatprep.subr.mxu0 0.0
    %2401 = vmatpush1.msra.mxu0 0.0
    %2402 = vmatprep.subr.mxu0 0.0
    %2403 = vmatpush1.msra.mxu0 0.0
    %2404 = vmatprep.subr.mxu0 0.0
    %2405 = vmatpush1.msra.mxu0 0.0
    %2406 = vmatprep.mubr.f32.mxu0 0.0
    %2407 = vmatmul.mubr.f32.gmra.mrb[0].mxu0 %v2340
    %v2408 = vpop.f32.mrb[0].mxu0
    %v2409 = vadd.f32 0.0, %v2408
    %v2410 = vpop.f32.mrb[0].mxu0
    %2411 = vdwg.mxu0
    %v2412 = vadd.f32 %v2245, %v2409
    %2413 = vrot.lane.b32.xlu0 %v1905, 104
    %v2414 = vpop.permute.xlu0 %2413
    %2415 = vrot.lane.b32.xlu0 %v1905, 72
    %v2416 = vpop.permute.xlu0 %2415
    %v2417 = vsel %vm159, %v2414, 0
    %v2419 = vsel %vm159, %v2416, 0
    %2421 = vmatprep.subr.mxu0 0.0
    %2422 = vmatpush1.xpose.msra.mxu0 %v2419
    %2423 = vmatprep.subr.mxu0 0.0
    %2424 = vmatpush1.xpose.msra.mxu0 0.0
    %2425 = vmatprep.subr.mxu0 0.0
    %2426 = vmatpush1.xpose.msra.mxu0 0.0
    %2427 = vmatprep.subr.mxu0 0.0
    %2428 = vmatpush1.xpose.msra.mxu0 0.0
    %2429 = vmatprep.subr.mxu0 0.0
    %2430 = vmatpush1.xpose.msra.mxu0 0.0
    %2431 = vmatprep.subr.mxu0 0.0
    %2432 = vmatpush1.xpose.msra.mxu0 0.0
    %2433 = vmatprep.subr.mxu0 0.0
    %2434 = vmatpush1.xpose.msra.mxu0 0.0
    %2435 = vmatprep.subr.mxu0 0.0
    %2436 = vmatpush1.xpose.msra.mxu0 0.0
    %2437 = vmatprep.subr.mxu0 0.0
    %2438 = vmatpush1.xpose.msra.mxu0 0.0
    %2439 = vmatprep.subr.mxu0 0.0
    %2440 = vmatpush1.xpose.msra.mxu0 0.0
    %2441 = vmatprep.subr.mxu0 0.0
    %2442 = vmatpush1.xpose.msra.mxu0 0.0
    %2443 = vmatprep.subr.mxu0 0.0
    %2444 = vmatpush1.xpose.msra.mxu0 0.0
    %2445 = vmatprep.subr.mxu0 0.0
    %2446 = vmatpush1.xpose.msra.mxu0 0.0
    %2447 = vmatprep.subr.mxu0 0.0
    %2448 = vmatpush1.xpose.msra.mxu0 0.0
    %2449 = vmatprep.subr.mxu0 0.0
    %2450 = vmatpush1.xpose.msra.mxu0 0.0
    %2451 = vmatprep.subr.mxu0 0.0
    %2452 = vmatpush1.xpose.msra.mxu0 0.0
    %2453 = vmatprep.subr.mxu0 0.0
    %2454 = vmatpush1.xpose.msra.mxu0 0.0
    %2455 = vmatprep.subr.mxu0 0.0
    %2456 = vmatpush1.xpose.msra.mxu0 0.0
    %2457 = vmatprep.subr.mxu0 0.0
    %2458 = vmatpush1.xpose.msra.mxu0 0.0
    %2459 = vmatprep.subr.mxu0 0.0
    %2460 = vmatpush1.xpose.msra.mxu0 0.0
    %2461 = vmatprep.subr.mxu0 0.0
    %2462 = vmatpush1.xpose.msra.mxu0 0.0
    %2463 = vmatprep.subr.mxu0 0.0
    %2464 = vmatpush1.xpose.msra.mxu0 0.0
    %2465 = vmatprep.subr.mxu0 0.0
    %2466 = vmatpush1.xpose.msra.mxu0 0.0
    %2467 = vmatprep.subr.mxu0 0.0
    %2468 = vmatpush1.xpose.msra.mxu0 0.0
    %2469 = vmatprep.subr.mxu0 0.0
    %2470 = vmatpush1.xpose.msra.mxu0 0.0
    %2471 = vmatprep.subr.mxu0 0.0
    %2472 = vmatpush1.xpose.msra.mxu0 0.0
    %2473 = vmatprep.subr.mxu0 0.0
    %2474 = vmatpush1.xpose.msra.mxu0 0.0
    %2475 = vmatprep.subr.mxu0 0.0
    %2476 = vmatpush1.xpose.msra.mxu0 0.0
    %2477 = vmatprep.subr.mxu0 0.0
    %2478 = vmatpush1.xpose.msra.mxu0 0.0
    %2479 = vmatprep.subr.mxu0 0.0
    %2480 = vmatpush1.xpose.msra.mxu0 0.0
    %2481 = vmatprep.subr.mxu0 0.0
    %2482 = vmatpush1.xpose.msra.mxu0 0.0
    %2483 = vmatprep.subr.mxu0 0.0
    %2484 = vmatpush1.xpose.msra.mxu0 0.0
    %2485 = vmatprep.mubr.f32.mxu0 0.0
    %2486 = vmatmul.mubr.f32.gmra.mrb[0].mxu0 %v2417
    %v2487 = vpop.f32.mrb[0].mxu0
    %v2488 = vadd.f32 0.0, %v2487
    %v2489 = vpop.f32.mrb[0].mxu0
    %2490 = vdwg.mxu0
    %v2491 = vsel %vm159, %v2488, -inf
    %2492 = vmax.xlane.f32.xlu0 %v2491
    %v2493 = vpop.xlane.xlu0 %2492
    %v2494 = vsub.f32 %v2488, %v2493
    %v2495 = vmul.f32 %v2494, 1.442695
    %v2496 = vpow.pop %v2495
    %v2497 = vsel %vm159, %v2496, 0.0
    %2498 = vadd.xlane.f32.xlu0 %v2497
    %v2499 = vpop.xlane.xlu0 %2498
    %v2500 = vrcp.pop %v2499
    %v2501 = vmul.f32 %v2496, %v2500
    %s2502 = scalar_lea.vmem [#allocation4], 88
    %2503 = vst.msk [vmem:[%s2502] sm:$0xff] %vm159, %v2501
    %2505 = vrot.lane.b32.xlu0 %v1907, 96
    %v2506 = vpop.permute.xlu0 %2505
    %v2509 = vsel %vm159, %v2501, 0
    %2511 = vmatprep.subr.mxu0 0.0
    %2512 = vmatpush1.msra.mxu0 %v2506
    %2513 = vmatprep.subr.mxu0 0.0
    %2514 = vmatpush1.msra.mxu0 0.0
    %2515 = vmatprep.subr.mxu0 0.0
    %2516 = vmatpush1.msra.mxu0 0.0
    %2517 = vmatprep.subr.mxu0 0.0
    %2518 = vmatpush1.msra.mxu0 0.0
    %2519 = vmatprep.subr.mxu0 0.0
    %2520 = vmatpush1.msra.mxu0 0.0
    %2521 = vmatprep.subr.mxu0 0.0
    %2522 = vmatpush1.msra.mxu0 0.0
    %2523 = vmatprep.subr.mxu0 0.0
    %2524 = vmatpush1.msra.mxu0 0.0
    %2525 = vmatprep.subr.mxu0 0.0
    %2526 = vmatpush1.msra.mxu0 0.0
    %2527 = vmatprep.subr.mxu0 0.0
    %2528 = vmatpush1.msra.mxu0 0.0
    %2529 = vmatprep.subr.mxu0 0.0
    %2530 = vmatpush1.msra.mxu0 0.0
    %2531 = vmatprep.subr.mxu0 0.0
    %2532 = vmatpush1.msra.mxu0 0.0
    %2533 = vmatprep.subr.mxu0 0.0
    %2534 = vmatpush1.msra.mxu0 0.0
    %2535 = vmatprep.subr.mxu0 0.0
    %2536 = vmatpush1.msra.mxu0 0.0
    %2537 = vmatprep.subr.mxu0 0.0
    %2538 = vmatpush1.msra.mxu0 0.0
    %2539 = vmatprep.subr.mxu0 0.0
    %2540 = vmatpush1.msra.mxu0 0.0
    %2541 = vmatprep.subr.mxu0 0.0
    %2542 = vmatpush1.msra.mxu0 0.0
    %2543 = vmatprep.subr.mxu0 0.0
    %2544 = vmatpush1.msra.mxu0 0.0
    %2545 = vmatprep.subr.mxu0 0.0
    %2546 = vmatpush1.msra.mxu0 0.0
    %2547 = vmatprep.subr.mxu0 0.0
    %2548 = vmatpush1.msra.mxu0 0.0
    %2549 = vmatprep.subr.mxu0 0.0
    %2550 = vmatpush1.msra.mxu0 0.0
    %2551 = vmatprep.subr.mxu0 0.0
    %2552 = vmatpush1.msra.mxu0 0.0
    %2553 = vmatprep.subr.mxu0 0.0
    %2554 = vmatpush1.msra.mxu0 0.0
    %2555 = vmatprep.subr.mxu0 0.0
    %2556 = vmatpush1.msra.mxu0 0.0
    %2557 = vmatprep.subr.mxu0 0.0
    %2558 = vmatpush1.msra.mxu0 0.0
    %2559 = vmatprep.subr.mxu0 0.0
    %2560 = vmatpush1.msra.mxu0 0.0
    %2561 = vmatprep.subr.mxu0 0.0
    %2562 = vmatpush1.msra.mxu0 0.0
    %2563 = vmatprep.subr.mxu0 0.0
    %2564 = vmatpush1.msra.mxu0 0.0
    %2565 = vmatprep.subr.mxu0 0.0
    %2566 = vmatpush1.msra.mxu0 0.0
    %2567 = vmatprep.subr.mxu0 0.0
    %2568 = vmatpush1.msra.mxu0 0.0
    %2569 = vmatprep.subr.mxu0 0.0
    %2570 = vmatpush1.msra.mxu0 0.0
    %2571 = vmatprep.subr.mxu0 0.0
    %2572 = vmatpush1.msra.mxu0 0.0
    %2573 = vmatprep.subr.mxu0 0.0
    %2574 = vmatpush1.msra.mxu0 0.0
    %2575 = vmatprep.mubr.f32.mxu0 0.0
    %2576 = vmatmul.mubr.f32.gmra.mrb[0].mxu0 %v2509
    %v2577 = vpop.f32.mrb[0].mxu0
    %v2578 = vadd.f32 0.0, %v2577
    %v2579 = vpop.f32.mrb[0].mxu0
    %2580 = vdwg.mxu0
    %v2581 = vadd.f32 %v2412, %v2578
    %2583 = vrot.lane.b32.xlu0 %v1911, 96
    %v2584 = vpop.permute.xlu0 %2583
    %v2585 = vsel %vm159, %v1911, 0
    %v2587 = vsel %vm159, %v2584, 0
    %2589 = vmatprep.subr.mxu0 0.0
    %2590 = vmatpush1.xpose.msra.mxu0 %v2587
    %2591 = vmatprep.subr.mxu0 0.0
    %2592 = vmatpush1.xpose.msra.mxu0 0.0
    %2593 = vmatprep.subr.mxu0 0.0
    %2594 = vmatpush1.xpose.msra.mxu0 0.0
    %2595 = vmatprep.subr.mxu0 0.0
    %2596 = vmatpush1.xpose.msra.mxu0 0.0
    %2597 = vmatprep.subr.mxu0 0.0
    %2598 = vmatpush1.xpose.msra.mxu0 0.0
    %2599 = vmatprep.subr.mxu0 0.0
    %2600 = vmatpush1.xpose.msra.mxu0 0.0
    %2601 = vmatprep.subr.mxu0 0.0
    %2602 = vmatpush1.xpose.msra.mxu0 0.0
    %2603 = vmatprep.subr.mxu0 0.0
    %2604 = vmatpush1.xpose.msra.mxu0 0.0
    %2605 = vmatprep.subr.mxu0 0.0
    %2606 = vmatpush1.xpose.msra.mxu0 0.0
    %2607 = vmatprep.subr.mxu0 0.0
    %2608 = vmatpush1.xpose.msra.mxu0 0.0
    %2609 = vmatprep.subr.mxu0 0.0
    %2610 = vmatpush1.xpose.msra.mxu0 0.0
    %2611 = vmatprep.subr.mxu0 0.0
    %2612 = vmatpush1.xpose.msra.mxu0 0.0
    %2613 = vmatprep.subr.mxu0 0.0
    %2614 = vmatpush1.xpose.msra.mxu0 0.0
    %2615 = vmatprep.subr.mxu0 0.0
    %2616 = vmatpush1.xpose.msra.mxu0 0.0
    %2617 = vmatprep.subr.mxu0 0.0
    %2618 = vmatpush1.xpose.msra.mxu0 0.0
    %2619 = vmatprep.subr.mxu0 0.0
    %2620 = vmatpush1.xpose.msra.mxu0 0.0
    %2621 = vmatprep.subr.mxu0 0.0
    %2622 = vmatpush1.xpose.msra.mxu0 0.0
    %2623 = vmatprep.subr.mxu0 0.0
    %2624 = vmatpush1.xpose.msra.mxu0 0.0
    %2625 = vmatprep.subr.mxu0 0.0
    %2626 = vmatpush1.xpose.msra.mxu0 0.0
    %2627 = vmatprep.subr.mxu0 0.0
    %2628 = vmatpush1.xpose.msra.mxu0 0.0
    %2629 = vmatprep.subr.mxu0 0.0
    %2630 = vmatpush1.xpose.msra.mxu0 0.0
    %2631 = vmatprep.subr.mxu0 0.0
    %2632 = vmatpush1.xpose.msra.mxu0 0.0
    %2633 = vmatprep.subr.mxu0 0.0
    %2634 = vmatpush1.xpose.msra.mxu0 0.0
    %2635 = vmatprep.subr.mxu0 0.0
    %2636 = vmatpush1.xpose.msra.mxu0 0.0
    %2637 = vmatprep.subr.mxu0 0.0
    %2638 = vmatpush1.xpose.msra.mxu0 0.0
    %2639 = vmatprep.subr.mxu0 0.0
    %2640 = vmatpush1.xpose.msra.mxu0 0.0
    %2641 = vmatprep.subr.mxu0 0.0
    %2642 = vmatpush1.xpose.msra.mxu0 0.0
    %2643 = vmatprep.subr.mxu0 0.0
    %2644 = vmatpush1.xpose.msra.mxu0 0.0
    %2645 = vmatprep.subr.mxu0 0.0
    %2646 = vmatpush1.xpose.msra.mxu0 0.0
    %2647 = vmatprep.subr.mxu0 0.0
    %2648 = vmatpush1.xpose.msra.mxu0 0.0
    %2649 = vmatprep.subr.mxu0 0.0
    %2650 = vmatpush1.xpose.msra.mxu0 0.0
    %2651 = vmatprep.subr.mxu0 0.0
    %2652 = vmatpush1.xpose.msra.mxu0 0.0
    %2653 = vmatprep.mubr.f32.mxu0 0.0
    %2654 = vmatmul.mubr.f32.gmra.mrb[0].mxu0 %v2585
    %v2655 = vpop.f32.mrb[0].mxu0
    %v2656 = vadd.f32 0.0, %v2655
    %v2657 = vpop.f32.mrb[0].mxu0
    %2658 = vdwg.mxu0
    %v2659 = vsel %vm159, %v2656, -inf
    %2660 = vmax.xlane.f32.xlu0 %v2659
    %v2661 = vpop.xlane.xlu0 %2660
    %v2662 = vsub.f32 %v2656, %v2661
    %v2663 = vmul.f32 %v2662, 1.442695
    %v2664 = vpow.pop %v2663
    %v2665 = vsel %vm159, %v2664, 0.0
    %2666 = vadd.xlane.f32.xlu0 %v2665
    %v2667 = vpop.xlane.xlu0 %2666
    %v2668 = vrcp.pop %v2667
    %v2669 = vmul.f32 %v2664, %v2668
    %s2670 = scalar_lea.vmem [#allocation4], 96
    %2671 = vst.msk [vmem:[%s2670] sm:$0xff] %vm159, %v2669
    %2672 = vrot.lane.b32.xlu0 %v1911, 120
    %v2673 = vpop.permute.xlu0 %2672
    %2674 = vrot.lane.b32.xlu0 %v1911, 88
    %v2675 = vpop.permute.xlu0 %2674
    %v2676 = vsel %vm159, %v2673, 0
    %v2678 = vsel %vm159, %v2675, 0
    %2680 = vmatprep.subr.mxu0 0.0
    %2681 = vmatpush1.xpose.msra.mxu0 %v2678
    %2682 = vmatprep.subr.mxu0 0.0
    %2683 = vmatpush1.xpose.msra.mxu0 0.0
    %2684 = vmatprep.subr.mxu0 0.0
    %2685 = vmatpush1.xpose.msra.mxu0 0.0
    %2686 = vmatprep.subr.mxu0 0.0
    %2687 = vmatpush1.xpose.msra.mxu0 0.0
    %2688 = vmatprep.subr.mxu0 0.0
    %2689 = vmatpush1.xpose.msra.mxu0 0.0
    %2690 = vmatprep.subr.mxu0 0.0
    %2691 = vmatpush1.xpose.msra.mxu0 0.0
    %2692 = vmatprep.subr.mxu0 0.0
    %2693 = vmatpush1.xpose.msra.mxu0 0.0
    %2694 = vmatprep.subr.mxu0 0.0
    %2695 = vmatpush1.xpose.msra.mxu0 0.0
    %2696 = vmatprep.subr.mxu0 0.0
    %2697 = vmatpush1.xpose.msra.mxu0 0.0
    %2698 = vmatprep.subr.mxu0 0.0
    %2699 = vmatpush1.xpose.msra.mxu0 0.0
    %2700 = vmatprep.subr.mxu0 0.0
    %2701 = vmatpush1.xpose.msra.mxu0 0.0
    %2702 = vmatprep.subr.mxu0 0.0
    %2703 = vmatpush1.xpose.msra.mxu0 0.0
    %2704 = vmatprep.subr.mxu0 0.0
    %2705 = vmatpush1.xpose.msra.mxu0 0.0
    %2706 = vmatprep.subr.mxu0 0.0
    %2707 = vmatpush1.xpose.msra.mxu0 0.0
    %2708 = vmatprep.subr.mxu0 0.0
    %2709 = vmatpush1.xpose.msra.mxu0 0.0
    %2710 = vmatprep.subr.mxu0 0.0
    %2711 = vmatpush1.xpose.msra.mxu0 0.0
    %2712 = vmatprep.subr.mxu0 0.0
    %2713 = vmatpush1.xpose.msra.mxu0 0.0
    %2714 = vmatprep.subr.mxu0 0.0
    %2715 = vmatpush1.xpose.msra.mxu0 0.0
    %2716 = vmatprep.subr.mxu0 0.0
    %2717 = vmatpush1.xpose.msra.mxu0 0.0
    %2718 = vmatprep.subr.mxu0 0.0
    %2719 = vmatpush1.xpose.msra.mxu0 0.0
    %2720 = vmatprep.subr.mxu0 0.0
    %2721 = vmatpush1.xpose.msra.mxu0 0.0
    %2722 = vmatprep.subr.mxu0 0.0
    %2723 = vmatpush1.xpose.msra.mxu0 0.0
    %2724 = vmatprep.subr.mxu0 0.0
    %2725 = vmatpush1.xpose.msra.mxu0 0.0
    %2726 = vmatprep.subr.mxu0 0.0
    %2727 = vmatpush1.xpose.msra.mxu0 0.0
    %2728 = vmatprep.subr.mxu0 0.0
    %2729 = vmatpush1.xpose.msra.mxu0 0.0
    %2730 = vmatprep.subr.mxu0 0.0
    %2731 = vmatpush1.xpose.msra.mxu0 0.0
    %2732 = vmatprep.subr.mxu0 0.0
    %2733 = vmatpush1.xpose.msra.mxu0 0.0
    %2734 = vmatprep.subr.mxu0 0.0
    %2735 = vmatpush1.xpose.msra.mxu0 0.0
    %2736 = vmatprep.subr.mxu0 0.0
    %2737 = vmatpush1.xpose.msra.mxu0 0.0
    %2738 = vmatprep.subr.mxu0 0.0
    %2739 = vmatpush1.xpose.msra.mxu0 0.0
    %2740 = vmatprep.subr.mxu0 0.0
    %2741 = vmatpush1.xpose.msra.mxu0 0.0
    %2742 = vmatprep.subr.mxu0 0.0
    %2743 = vmatpush1.xpose.msra.mxu0 0.0
    %2744 = vmatprep.mubr.f32.mxu0 0.0
    %2745 = vmatmul.mubr.f32.gmra.mrb[0].mxu0 %v2676
    %v2746 = vpop.f32.mrb[0].mxu0
    %v2747 = vadd.f32 0.0, %v2746
    %v2748 = vpop.f32.mrb[0].mxu0
    %2749 = vdwg.mxu0
    %v2750 = vsel %vm159, %v2747, -inf
    %2751 = vmax.xlane.f32.xlu0 %v2750
    %v2752 = vpop.xlane.xlu0 %2751
    %v2753 = vsub.f32 %v2747, %v2752
    %v2754 = vmul.f32 %v2753, 1.442695
    %v2755 = vpow.pop %v2754
    %v2756 = vsel %vm159, %v2755, 0.0
    %2757 = vadd.xlane.f32.xlu0 %v2756
    %v2758 = vpop.xlane.xlu0 %2757
    %v2759 = vrcp.pop %v2758
    %v2760 = vmul.f32 %v2755, %v2759
    %s2761 = scalar_lea.vmem [#allocation4], 104
    %2762 = vst.msk [vmem:[%s2761] sm:$0xff] %vm159, %v2760
    %2763 = vrot.lane.b32.xlu0 %v1911, 32
    %v2764 = vpop.permute.xlu0 %2763
    %v2767 = vsel %vm159, %v2760, 0
    %2769 = vmatprep.subr.mxu0 0.0
    %2770 = vmatpush1.msra.mxu0 %v2764
    %2771 = vmatprep.subr.mxu0 0.0
    %2772 = vmatpush1.msra.mxu0 0.0
    %2773 = vmatprep.subr.mxu0 0.0
    %2774 = vmatpush1.msra.mxu0 0.0
    %2775 = vmatprep.subr.mxu0 0.0
    %2776 = vmatpush1.msra.mxu0 0.0
    %2777 = vmatprep.subr.mxu0 0.0
    %2778 = vmatpush1.msra.mxu0 0.0
    %2779 = vmatprep.subr.mxu0 0.0
    %2780 = vmatpush1.msra.mxu0 0.0
    %2781 = vmatprep.subr.mxu0 0.0
    %2782 = vmatpush1.msra.mxu0 0.0
    %2783 = vmatprep.subr.mxu0 0.0
    %2784 = vmatpush1.msra.mxu0 0.0
    %2785 = vmatprep.subr.mxu0 0.0
    %2786 = vmatpush1.msra.mxu0 0.0
    %2787 = vmatprep.subr.mxu0 0.0
    %2788 = vmatpush1.msra.mxu0 0.0
    %2789 = vmatprep.subr.mxu0 0.0
    %2790 = vmatpush1.msra.mxu0 0.0
    %2791 = vmatprep.subr.mxu0 0.0
    %2792 = vmatpush1.msra.mxu0 0.0
    %2793 = vmatprep.subr.mxu0 0.0
    %2794 = vmatpush1.msra.mxu0 0.0
    %2795 = vmatprep.subr.mxu0 0.0
    %2796 = vmatpush1.msra.mxu0 0.0
    %2797 = vmatprep.subr.mxu0 0.0
    %2798 = vmatpush1.msra.mxu0 0.0
    %2799 = vmatprep.subr.mxu0 0.0
    %2800 = vmatpush1.msra.mxu0 0.0
    %2801 = vmatprep.subr.mxu0 0.0
    %2802 = vmatpush1.msra.mxu0 0.0
    %2803 = vmatprep.subr.mxu0 0.0
    %2804 = vmatpush1.msra.mxu0 0.0
    %2805 = vmatprep.subr.mxu0 0.0
    %2806 = vmatpush1.msra.mxu0 0.0
    %2807 = vmatprep.subr.mxu0 0.0
    %2808 = vmatpush1.msra.mxu0 0.0
    %2809 = vmatprep.subr.mxu0 0.0
    %2810 = vmatpush1.msra.mxu0 0.0
    %2811 = vmatprep.subr.mxu0 0.0
    %2812 = vmatpush1.msra.mxu0 0.0
    %2813 = vmatprep.subr.mxu0 0.0
    %2814 = vmatpush1.msra.mxu0 0.0
    %2815 = vmatprep.subr.mxu0 0.0
    %2816 = vmatpush1.msra.mxu0 0.0
    %2817 = vmatprep.subr.mxu0 0.0
    %2818 = vmatpush1.msra.mxu0 0.0
    %2819 = vmatprep.subr.mxu0 0.0
    %2820 = vmatpush1.msra.mxu0 0.0
    %2821 = vmatprep.subr.mxu0 0.0
    %2822 = vmatpush1.msra.mxu0 0.0
    %2823 = vmatprep.subr.mxu0 0.0
    %2824 = vmatpush1.msra.mxu0 0.0
    %2825 = vmatprep.subr.mxu0 0.0
    %2826 = vmatpush1.msra.mxu0 0.0
    %2827 = vmatprep.subr.mxu0 0.0
    %2828 = vmatpush1.msra.mxu0 0.0
    %2829 = vmatprep.subr.mxu0 0.0
    %2830 = vmatpush1.msra.mxu0 0.0
    %2831 = vmatprep.subr.mxu0 0.0
    %2832 = vmatpush1.msra.mxu0 0.0
    %2833 = vmatprep.mubr.f32.mxu0 0.0
    %2834 = vmatmul.mubr.f32.gmra.mrb[0].mxu0 %v2767
    %v2835 = vpop.f32.mrb[0].mxu0
    %v2836 = vadd.f32 0.0, %v2835
    %v2837 = vpop.f32.mrb[0].mxu0
    %2838 = vdwg.mxu0
    %2839 = vrot.lane.b32.xlu0 %v1911, 64
    %v2840 = vpop.permute.xlu0 %2839
    %v2843 = vsel %vm159, %v2669, 0
    %2845 = vmatprep.subr.mxu0 0.0
    %2846 = vmatpush1.msra.mxu0 %v2840
    %2847 = vmatprep.subr.mxu0 0.0
    %2848 = vmatpush1.msra.mxu0 0.0
    %2849 = vmatprep.subr.mxu0 0.0
    %2850 = vmatpush1.msra.mxu0 0.0
    %2851 = vmatprep.subr.mxu0 0.0
    %2852 = vmatpush1.msra.mxu0 0.0
    %2853 = vmatprep.subr.mxu0 0.0
    %2854 = vmatpush1.msra.mxu0 0.0
    %2855 = vmatprep.subr.mxu0 0.0
    %2856 = vmatpush1.msra.mxu0 0.0
    %2857 = vmatprep.subr.mxu0 0.0
    %2858 = vmatpush1.msra.mxu0 0.0
    %2859 = vmatprep.subr.mxu0 0.0
    %2860 = vmatpush1.msra.mxu0 0.0
    %2861 = vmatprep.subr.mxu0 0.0
    %2862 = vmatpush1.msra.mxu0 0.0
    %2863 = vmatprep.subr.mxu0 0.0
    %2864 = vmatpush1.msra.mxu0 0.0
    %2865 = vmatprep.subr.mxu0 0.0
    %2866 = vmatpush1.msra.mxu0 0.0
    %2867 = vmatprep.subr.mxu0 0.0
    %2868 = vmatpush1.msra.mxu0 0.0
    %2869 = vmatprep.subr.mxu0 0.0
    %2870 = vmatpush1.msra.mxu0 0.0
    %2871 = vmatprep.subr.mxu0 0.0
    %2872 = vmatpush1.msra.mxu0 0.0
    %2873 = vmatprep.subr.mxu0 0.0
    %2874 = vmatpush1.msra.mxu0 0.0
    %2875 = vmatprep.subr.mxu0 0.0
    %2876 = vmatpush1.msra.mxu0 0.0
    %2877 = vmatprep.subr.mxu0 0.0
    %2878 = vmatpush1.msra.mxu0 0.0
    %2879 = vmatprep.subr.mxu0 0.0
    %2880 = vmatpush1.msra.mxu0 0.0
    %2881 = vmatprep.subr.mxu0 0.0
    %2882 = vmatpush1.msra.mxu0 0.0
    %2883 = vmatprep.subr.mxu0 0.0
    %2884 = vmatpush1.msra.mxu0 0.0
    %2885 = vmatprep.subr.mxu0 0.0
    %2886 = vmatpush1.msra.mxu0 0.0
    %2887 = vmatprep.subr.mxu0 0.0
    %2888 = vmatpush1.msra.mxu0 0.0
    %2889 = vmatprep.subr.mxu0 0.0
    %2890 = vmatpush1.msra.mxu0 0.0
    %2891 = vmatprep.subr.mxu0 0.0
    %2892 = vmatpush1.msra.mxu0 0.0
    %2893 = vmatprep.subr.mxu0 0.0
    %2894 = vmatpush1.msra.mxu0 0.0
    %2895 = vmatprep.subr.mxu0 0.0
    %2896 = vmatpush1.msra.mxu0 0.0
    %2897 = vmatprep.subr.mxu0 0.0
    %2898 = vmatpush1.msra.mxu0 0.0
    %2899 = vmatprep.subr.mxu0 0.0
    %2900 = vmatpush1.msra.mxu0 0.0
    %2901 = vmatprep.subr.mxu0 0.0
    %2902 = vmatpush1.msra.mxu0 0.0
    %2903 = vmatprep.subr.mxu0 0.0
    %2904 = vmatpush1.msra.mxu0 0.0
    %2905 = vmatprep.subr.mxu0 0.0
    %2906 = vmatpush1.msra.mxu0 0.0
    %2907 = vmatprep.subr.mxu0 0.0
    %2908 = vmatpush1.msra.mxu0 0.0
    %2909 = vmatprep.mubr.f32.mxu0 0.0
    %2910 = vmatmul.mubr.f32.gmra.mrb[0].mxu0 %v2843
    %v2911 = vpop.f32.mrb[0].mxu0
    %v2912 = vadd.f32 %v2836, %v2911
    %v2913 = vpop.f32.mrb[0].mxu0
    %2914 = vdwg.mxu0
    %2915 = vrot.lane.b32.xlu0 %v1911, 112
    %v2916 = vpop.permute.xlu0 %2915
    %2917 = vrot.lane.b32.xlu0 %v1911, 80
    %v2918 = vpop.permute.xlu0 %2917
    %v2919 = vsel %vm159, %v2916, 0
    %v2921 = vsel %vm159, %v2918, 0
    %2923 = vmatprep.subr.mxu0 0.0
    %2924 = vmatpush1.xpose.msra.mxu0 %v2921
    %2925 = vmatprep.subr.mxu0 0.0
    %2926 = vmatpush1.xpose.msra.mxu0 0.0
    %2927 = vmatprep.subr.mxu0 0.0
    %2928 = vmatpush1.xpose.msra.mxu0 0.0
    %2929 = vmatprep.subr.mxu0 0.0
    %2930 = vmatpush1.xpose.msra.mxu0 0.0
    %2931 = vmatprep.subr.mxu0 0.0
    %2932 = vmatpush1.xpose.msra.mxu0 0.0
    %2933 = vmatprep.subr.mxu0 0.0
    %2934 = vmatpush1.xpose.msra.mxu0 0.0
    %2935 = vmatprep.subr.mxu0 0.0
    %2936 = vmatpush1.xpose.msra.mxu0 0.0
    %2937 = vmatprep.subr.mxu0 0.0
    %2938 = vmatpush1.xpose.msra.mxu0 0.0
    %2939 = vmatprep.subr.mxu0 0.0
    %2940 = vmatpush1.xpose.msra.mxu0 0.0
    %2941 = vmatprep.subr.mxu0 0.0
    %2942 = vmatpush1.xpose.msra.mxu0 0.0
    %2943 = vmatprep.subr.mxu0 0.0
    %2944 = vmatpush1.xpose.msra.mxu0 0.0
    %2945 = vmatprep.subr.mxu0 0.0
    %2946 = vmatpush1.xpose.msra.mxu0 0.0
    %2947 = vmatprep.subr.mxu0 0.0
    %2948 = vmatpush1.xpose.msra.mxu0 0.0
    %2949 = vmatprep.subr.mxu0 0.0
    %2950 = vmatpush1.xpose.msra.mxu0 0.0
    %2951 = vmatprep.subr.mxu0 0.0
    %2952 = vmatpush1.xpose.msra.mxu0 0.0
    %2953 = vmatprep.subr.mxu0 0.0
    %2954 = vmatpush1.xpose.msra.mxu0 0.0
    %2955 = vmatprep.subr.mxu0 0.0
    %2956 = vmatpush1.xpose.msra.mxu0 0.0
    %2957 = vmatprep.subr.mxu0 0.0
    %2958 = vmatpush1.xpose.msra.mxu0 0.0
    %2959 = vmatprep.subr.mxu0 0.0
    %2960 = vmatpush1.xpose.msra.mxu0 0.0
    %2961 = vmatprep.subr.mxu0 0.0
    %2962 = vmatpush1.xpose.msra.mxu0 0.0
    %2963 = vmatprep.subr.mxu0 0.0
    %2964 = vmatpush1.xpose.msra.mxu0 0.0
    %2965 = vmatprep.subr.mxu0 0.0
    %2966 = vmatpush1.xpose.msra.mxu0 0.0
    %2967 = vmatprep.subr.mxu0 0.0
    %2968 = vmatpush1.xpose.msra.mxu0 0.0
    %2969 = vmatprep.subr.mxu0 0.0
    %2970 = vmatpush1.xpose.msra.mxu0 0.0
    %2971 = vmatprep.subr.mxu0 0.0
    %2972 = vmatpush1.xpose.msra.mxu0 0.0
    %2973 = vmatprep.subr.mxu0 0.0
    %2974 = vmatpush1.xpose.msra.mxu0 0.0
    %2975 = vmatprep.subr.mxu0 0.0
    %2976 = vmatpush1.xpose.msra.mxu0 0.0
    %2977 = vmatprep.subr.mxu0 0.0
    %2978 = vmatpush1.xpose.msra.mxu0 0.0
    %2979 = vmatprep.subr.mxu0 0.0
    %2980 = vmatpush1.xpose.msra.mxu0 0.0
    %2981 = vmatprep.subr.mxu0 0.0
    %2982 = vmatpush1.xpose.msra.mxu0 0.0
    %2983 = vmatprep.subr.mxu0 0.0
    %2984 = vmatpush1.xpose.msra.mxu0 0.0
    %2985 = vmatprep.subr.mxu0 0.0
    %2986 = vmatpush1.xpose.msra.mxu0 0.0
    %2987 = vmatprep.mubr.f32.mxu0 0.0
    %2988 = vmatmul.mubr.f32.gmra.mrb[0].mxu0 %v2919
    %v2989 = vpop.f32.mrb[0].mxu0
    %v2990 = vadd.f32 0.0, %v2989
    %v2991 = vpop.f32.mrb[0].mxu0
    %2992 = vdwg.mxu0
    %v2993 = vsel %vm159, %v2990, -inf
    %2994 = vmax.xlane.f32.xlu0 %v2993
    %v2995 = vpop.xlane.xlu0 %2994
    %v2996 = vsub.f32 %v2990, %v2995
    %v2997 = vmul.f32 %v2996, 1.442695
    %v2998 = vpow.pop %v2997
    %v2999 = vsel %vm159, %v2998, 0.0
    %3000 = vadd.xlane.f32.xlu0 %v2999
    %v3001 = vpop.xlane.xlu0 %3000
    %v3002 = vrcp.pop %v3001
    %v3003 = vmul.f32 %v2998, %v3002
    %s3004 = scalar_lea.vmem [#allocation4], 112
    %3005 = vst.msk [vmem:[%s3004] sm:$0xff] %vm159, %v3003
    %v3007 = vsel %vm159, %v3003, 0
    %3009 = vmatprep.subr.mxu0 0.0
    %3010 = vmatpush1.msra.mxu0 %v1913
    %3011 = vmatprep.subr.mxu0 0.0
    %3012 = vmatpush1.msra.mxu0 0.0
    %3013 = vmatprep.subr.mxu0 0.0
    %3014 = vmatpush1.msra.mxu0 0.0
    %3015 = vmatprep.subr.mxu0 0.0
    %3016 = vmatpush1.msra.mxu0 0.0
    %3017 = vmatprep.subr.mxu0 0.0
    %3018 = vmatpush1.msra.mxu0 0.0
    %3019 = vmatprep.subr.mxu0 0.0
    %3020 = vmatpush1.msra.mxu0 0.0
    %3021 = vmatprep.subr.mxu0 0.0
    %3022 = vmatpush1.msra.mxu0 0.0
    %3023 = vmatprep.subr.mxu0 0.0
    %3024 = vmatpush1.msra.mxu0 0.0
    %3025 = vmatprep.subr.mxu0 0.0
    %3026 = vmatpush1.msra.mxu0 0.0
    %3027 = vmatprep.subr.mxu0 0.0
    %3028 = vmatpush1.msra.mxu0 0.0
    %3029 = vmatprep.subr.mxu0 0.0
    %3030 = vmatpush1.msra.mxu0 0.0
    %3031 = vmatprep.subr.mxu0 0.0
    %3032 = vmatpush1.msra.mxu0 0.0
    %3033 = vmatprep.subr.mxu0 0.0
    %3034 = vmatpush1.msra.mxu0 0.0
    %3035 = vmatprep.subr.mxu0 0.0
    %3036 = vmatpush1.msra.mxu0 0.0
    %3037 = vmatprep.subr.mxu0 0.0
    %3038 = vmatpush1.msra.mxu0 0.0
    %3039 = vmatprep.subr.mxu0 0.0
    %3040 = vmatpush1.msra.mxu0 0.0
    %3041 = vmatprep.subr.mxu0 0.0
    %3042 = vmatpush1.msra.mxu0 0.0
    %3043 = vmatprep.subr.mxu0 0.0
    %3044 = vmatpush1.msra.mxu0 0.0
    %3045 = vmatprep.subr.mxu0 0.0
    %3046 = vmatpush1.msra.mxu0 0.0
    %3047 = vmatprep.subr.mxu0 0.0
    %3048 = vmatpush1.msra.mxu0 0.0
    %3049 = vmatprep.subr.mxu0 0.0
    %3050 = vmatpush1.msra.mxu0 0.0
    %3051 = vmatprep.subr.mxu0 0.0
    %3052 = vmatpush1.msra.mxu0 0.0
    %3053 = vmatprep.subr.mxu0 0.0
    %3054 = vmatpush1.msra.mxu0 0.0
    %3055 = vmatprep.subr.mxu0 0.0
    %3056 = vmatpush1.msra.mxu0 0.0
    %3057 = vmatprep.subr.mxu0 0.0
    %3058 = vmatpush1.msra.mxu0 0.0
    %3059 = vmatprep.subr.mxu0 0.0
    %3060 = vmatpush1.msra.mxu0 0.0
    %3061 = vmatprep.subr.mxu0 0.0
    %3062 = vmatpush1.msra.mxu0 0.0
    %3063 = vmatprep.subr.mxu0 0.0
    %3064 = vmatpush1.msra.mxu0 0.0
    %3065 = vmatprep.subr.mxu0 0.0
    %3066 = vmatpush1.msra.mxu0 0.0
    %3067 = vmatprep.subr.mxu0 0.0
    %3068 = vmatpush1.msra.mxu0 0.0
    %3069 = vmatprep.subr.mxu0 0.0
    %3070 = vmatpush1.msra.mxu0 0.0
    %3071 = vmatprep.subr.mxu0 0.0
    %3072 = vmatpush1.msra.mxu0 0.0
    %3073 = vmatprep.mubr.f32.mxu0 0.0
    %3074 = vmatmul.mubr.f32.gmra.mrb[0].mxu0 %v3007
    %v3075 = vpop.f32.mrb[0].mxu0
    %v3076 = vadd.f32 0.0, %v3075
    %v3077 = vpop.f32.mrb[0].mxu0
    %3078 = vdwg.mxu0
    %v3079 = vadd.f32 %v2912, %v3076
    %3080 = vrot.lane.b32.xlu0 %v1911, 104
    %v3081 = vpop.permute.xlu0 %3080
    %3082 = vrot.lane.b32.xlu0 %v1911, 72
    %v3083 = vpop.permute.xlu0 %3082
    %v3084 = vsel %vm159, %v3081, 0
    %v3086 = vsel %vm159, %v3083, 0
    %3088 = vmatprep.subr.mxu0 0.0
    %3089 = vmatpush1.xpose.msra.mxu0 %v3086
    %3090 = vmatprep.subr.mxu0 0.0
    %3091 = vmatpush1.xpose.msra.mxu0 0.0
    %3092 = vmatprep.subr.mxu0 0.0
    %3093 = vmatpush1.xpose.msra.mxu0 0.0
    %3094 = vmatprep.subr.mxu0 0.0
    %3095 = vmatpush1.xpose.msra.mxu0 0.0
    %3096 = vmatprep.subr.mxu0 0.0
    %3097 = vmatpush1.xpose.msra.mxu0 0.0
    %3098 = vmatprep.subr.mxu0 0.0
    %3099 = vmatpush1.xpose.msra.mxu0 0.0
    %3100 = vmatprep.subr.mxu0 0.0
    %3101 = vmatpush1.xpose.msra.mxu0 0.0
    %3102 = vmatprep.subr.mxu0 0.0
    %3103 = vmatpush1.xpose.msra.mxu0 0.0
    %3104 = vmatprep.subr.mxu0 0.0
    %3105 = vmatpush1.xpose.msra.mxu0 0.0
    %3106 = vmatprep.subr.mxu0 0.0
    %3107 = vmatpush1.xpose.msra.mxu0 0.0
    %3108 = vmatprep.subr.mxu0 0.0
    %3109 = vmatpush1.xpose.msra.mxu0 0.0
    %3110 = vmatprep.subr.mxu0 0.0
    %3111 = vmatpush1.xpose.msra.mxu0 0.0
    %3112 = vmatprep.subr.mxu0 0.0
    %3113 = vmatpush1.xpose.msra.mxu0 0.0
    %3114 = vmatprep.subr.mxu0 0.0
    %3115 = vmatpush1.xpose.msra.mxu0 0.0
    %3116 = vmatprep.subr.mxu0 0.0
    %3117 = vmatpush1.xpose.msra.mxu0 0.0
    %3118 = vmatprep.subr.mxu0 0.0
    %3119 = vmatpush1.xpose.msra.mxu0 0.0
    %3120 = vmatprep.subr.mxu0 0.0
    %3121 = vmatpush1.xpose.msra.mxu0 0.0
    %3122 = vmatprep.subr.mxu0 0.0
    %3123 = vmatpush1.xpose.msra.mxu0 0.0
    %3124 = vmatprep.subr.mxu0 0.0
    %3125 = vmatpush1.xpose.msra.mxu0 0.0
    %3126 = vmatprep.subr.mxu0 0.0
    %3127 = vmatpush1.xpose.msra.mxu0 0.0
    %3128 = vmatprep.subr.mxu0 0.0
    %3129 = vmatpush1.xpose.msra.mxu0 0.0
    %3130 = vmatprep.subr.mxu0 0.0
    %3131 = vmatpush1.xpose.msra.mxu0 0.0
    %3132 = vmatprep.subr.mxu0 0.0
    %3133 = vmatpush1.xpose.msra.mxu0 0.0
    %3134 = vmatprep.subr.mxu0 0.0
    %3135 = vmatpush1.xpose.msra.mxu0 0.0
    %3136 = vmatprep.subr.mxu0 0.0
    %3137 = vmatpush1.xpose.msra.mxu0 0.0
    %3138 = vmatprep.subr.mxu0 0.0
    %3139 = vmatpush1.xpose.msra.mxu0 0.0
    %3140 = vmatprep.subr.mxu0 0.0
    %3141 = vmatpush1.xpose.msra.mxu0 0.0
    %3142 = vmatprep.subr.mxu0 0.0
    %3143 = vmatpush1.xpose.msra.mxu0 0.0
    %3144 = vmatprep.subr.mxu0 0.0
    %3145 = vmatpush1.xpose.msra.mxu0 0.0
    %3146 = vmatprep.subr.mxu0 0.0
    %3147 = vmatpush1.xpose.msra.mxu0 0.0
    %3148 = vmatprep.subr.mxu0 0.0
    %3149 = vmatpush1.xpose.msra.mxu0 0.0
    %3150 = vmatprep.subr.mxu0 0.0
    %3151 = vmatpush1.xpose.msra.mxu0 0.0
    %3152 = vmatprep.mubr.f32.mxu0 0.0
    %3153 = vmatmul.mubr.f32.gmra.mrb[0].mxu0 %v3084
    %v3154 = vpop.f32.mrb[0].mxu0
    %v3155 = vadd.f32 0.0, %v3154
    %v3156 = vpop.f32.mrb[0].mxu0
    %3157 = vdwg.mxu0
    %v3158 = vsel %vm159, %v3155, -inf
    %3159 = vmax.xlane.f32.xlu0 %v3158
    %v3160 = vpop.xlane.xlu0 %3159
    %v3161 = vsub.f32 %v3155, %v3160
    %v3162 = vmul.f32 %v3161, 1.442695
    %v3163 = vpow.pop %v3162
    %v3164 = vsel %vm159, %v3163, 0.0
    %3165 = vadd.xlane.f32.xlu0 %v3164
    %v3166 = vpop.xlane.xlu0 %3165
    %v3167 = vrcp.pop %v3166
    %v3168 = vmul.f32 %v3163, %v3167
    %s3169 = scalar_lea.vmem [#allocation4], 120
    %3170 = vst.msk [vmem:[%s3169] sm:$0xff] %vm159, %v3168
    %3172 = vrot.lane.b32.xlu0 %v1913, 96
    %v3173 = vpop.permute.xlu0 %3172
    %v3176 = vsel %vm159, %v3168, 0
    %3178 = vmatprep.subr.mxu0 0.0
    %3179 = vmatpush1.msra.mxu0 %v3173
    %3180 = vmatprep.subr.mxu0 0.0
    %3181 = vmatpush1.msra.mxu0 0.0
    %3182 = vmatprep.subr.mxu0 0.0
    %3183 = vmatpush1.msra.mxu0 0.0
    %3184 = vmatprep.subr.mxu0 0.0
    %3185 = vmatpush1.msra.mxu0 0.0
    %3186 = vmatprep.subr.mxu0 0.0
    %3187 = vmatpush1.msra.mxu0 0.0
    %3188 = vmatprep.subr.mxu0 0.0
    %3189 = vmatpush1.msra.mxu0 0.0
    %3190 = vmatprep.subr.mxu0 0.0
    %3191 = vmatpush1.msra.mxu0 0.0
    %3192 = vmatprep.subr.mxu0 0.0
    %3193 = vmatpush1.msra.mxu0 0.0
    %3194 = vmatprep.subr.mxu0 0.0
    %3195 = vmatpush1.msra.mxu0 0.0
    %3196 = vmatprep.subr.mxu0 0.0
    %3197 = vmatpush1.msra.mxu0 0.0
    %3198 = vmatprep.subr.mxu0 0.0
    %3199 = vmatpush1.msra.mxu0 0.0
    %3200 = vmatprep.subr.mxu0 0.0
    %3201 = vmatpush1.msra.mxu0 0.0
    %3202 = vmatprep.subr.mxu0 0.0
    %3203 = vmatpush1.msra.mxu0 0.0
    %3204 = vmatprep.subr.mxu0 0.0
    %3205 = vmatpush1.msra.mxu0 0.0
    %3206 = vmatprep.subr.mxu0 0.0
    %3207 = vmatpush1.msra.mxu0 0.0
    %3208 = vmatprep.subr.mxu0 0.0
    %3209 = vmatpush1.msra.mxu0 0.0
    %3210 = vmatprep.subr.mxu0 0.0
    %3211 = vmatpush1.msra.mxu0 0.0
    %3212 = vmatprep.subr.mxu0 0.0
    %3213 = vmatpush1.msra.mxu0 0.0
    %3214 = vmatprep.subr.mxu0 0.0
    %3215 = vmatpush1.msra.mxu0 0.0
    %3216 = vmatprep.subr.mxu0 0.0
    %3217 = vmatpush1.msra.mxu0 0.0
    %3218 = vmatprep.subr.mxu0 0.0
    %3219 = vmatpush1.msra.mxu0 0.0
    %3220 = vmatprep.subr.mxu0 0.0
    %3221 = vmatpush1.msra.mxu0 0.0
    %3222 = vmatprep.subr.mxu0 0.0
    %3223 = vmatpush1.msra.mxu0 0.0
    %3224 = vmatprep.subr.mxu0 0.0
    %3225 = vmatpush1.msra.mxu0 0.0
    %3226 = vmatprep.subr.mxu0 0.0
    %3227 = vmatpush1.msra.mxu0 0.0
    %3228 = vmatprep.subr.mxu0 0.0
    %3229 = vmatpush1.msra.mxu0 0.0
    %3230 = vmatprep.subr.mxu0 0.0
    %3231 = vmatpush1.msra.mxu0 0.0
    %3232 = vmatprep.subr.mxu0 0.0
    %3233 = vmatpush1.msra.mxu0 0.0
    %3234 = vmatprep.subr.mxu0 0.0
    %3235 = vmatpush1.msra.mxu0 0.0
    %3236 = vmatprep.subr.mxu0 0.0
    %3237 = vmatpush1.msra.mxu0 0.0
    %3238 = vmatprep.subr.mxu0 0.0
    %3239 = vmatpush1.msra.mxu0 0.0
    %3240 = vmatprep.subr.mxu0 0.0
    %3241 = vmatpush1.msra.mxu0 0.0
    %3242 = vmatprep.mubr.f32.mxu0 0.0
    %3243 = vmatmul.mubr.f32.gmra.mrb[0].mxu0 %v3176
    %v3244 = vpop.f32.mrb[0].mxu0
    %v3245 = vadd.f32 0.0, %v3244
    %v3246 = vpop.f32.mrb[0].mxu0
    %3247 = vdwg.mxu0
    %v3248 = vadd.f32 %v3079, %v3245
    %v3249 = vadd.f32 %v1780, %v2581
    %v3250 = vadd.f32 %v1781, %v3248
    %v3251 = vld [vmem:[%s1782 + $0x4] sm:$0x1]
    %v3252 = vlaneseq
    %v3253 = vshrl.u32 %v3252, 7
    %v3254 = vsub.s32 0, %v3253
    %v3255 = vrot.slane %v3251, %v3254
    %v3256 = vadd.f32 %v3249, %v3255
    %v3257 = vadd.f32 %v3250, %v3255
    %v3258 = vld [vmem:[%s1782 + $0x2] sm:$0x1]
    %v3259 = vld [vmem:[%s1782 + $0x3] sm:$0x1]
    %v3260 = vsel %vm25, %v3256, 0.0
    %3261 = vadd.xlane.f32.xlu0 %v3260
    %v3262 = vpop.xlane.xlu0 %3261
    %v3263 = vsel %vm25, %v3257, 0.0
    %3264 = vadd.xlane.f32.xlu0 %v3263
    %v3265 = vpop.xlane.xlu0 %3264
    %v3266 = vmul.f32 %v3262, %v32
    %v3267 = vmul.f32 %v3265, %v32
    %v3268 = vsub.f32 %v3256, %v3266
    %v3269 = vsub.f32 %v3257, %v3267
    %v3270 = vmul.f32 %v3268, %v3268
    %v3271 = vmul.f32 %v3269, %v3269
    %v3272 = vsel %vm25, %v3270, 0.0
    %3273 = vadd.xlane.f32.xlu0 %v3272
    %v3274 = vpop.xlane.xlu0 %3273
    %v3275 = vsel %vm25, %v3271, 0.0
    %3276 = vadd.xlane.f32.xlu0 %v3275
    %v3277 = vpop.xlane.xlu0 %3276
    %v3278 = vmul.f32 %v3274, %v32
    %v3279 = vmul.f32 %v3277, %v32
    %v3280 = vadd.f32 %v3278, 1e-05
    %v3281 = vadd.f32 %v3279, 1e-05
    %v3282 = vrsqrt.pop %v3280
    %v3283 = vrsqrt.pop %v3281
    %v3284 = vmul.f32 %v3268, %v3282
    %v3285 = vmul.f32 %v3269, %v3283
    %v3286 = vlaneseq
    %v3287 = vshrl.u32 %v3286, 7
    %v3288 = vsub.s32 0, %v3287
    %v3289 = vrot.slane %v3258, %v3288
    %v3290 = vmul.f32 %v3284, %v3289
    %v3291 = vmul.f32 %v3285, %v3289
    %v3292 = vlaneseq
    %v3293 = vshrl.u32 %v3292, 7
    %v3294 = vsub.s32 0, %v3293
    %v3295 = vrot.slane %v3259, %v3294
    %v3296 = vadd.f32 %v3290, %v3295
    %v3297 = vadd.f32 %v3291, %v3295
    %s3298 = scalar_lea.vmem %s3, 96
    %v3299 = vld [vmem:[%s3298] sm:$0xff]
    %v3300 = vld [vmem:[%s3298 + $0x8] sm:$0xff]
    %v3301 = vld [vmem:[%s3298 + $0x10] sm:$0xff]
    %v3302 = vld [vmem:[%s3298 + $0x18] sm:$0xff]
    %v3303 = vld [vmem:[%s1782 + $0x6] sm:$0x1]
    %v3304 = vlaneseq
    %v3305 = vshrl.u32 %v3304, 7
    %v3306 = vsub.s32 0, %v3305
    %v3307 = vrot.slane %v3303, %v3306
    %v3309 = vsel %vm25, %v3296, 0
    %v3312 = vsel %vm25, %v3297, 0
    %3314 = vmatprep.subr.mxu0 0.0
    %3315 = vmatpush1.msra.mxu0 %v3299
    %3316 = vmatprep.subr.mxu0 0.0
    %3317 = vmatpush1.msra.mxu0 %v3300
    %3318 = vmatprep.subr.mxu0 0.0
    %3319 = vmatpush1.msra.mxu0 %v3301
    %3320 = vmatprep.subr.mxu0 0.0
    %3321 = vmatpush1.msra.mxu0 %v3302
    %3322 = vmatprep.subr.mxu0 0.0
    %3323 = vmatpush1.msra.mxu0 0.0
    %3324 = vmatprep.subr.mxu0 0.0
    %3325 = vmatpush1.msra.mxu0 0.0
    %3326 = vmatprep.subr.mxu0 0.0
    %3327 = vmatpush1.msra.mxu0 0.0
    %3328 = vmatprep.subr.mxu0 0.0
    %3329 = vmatpush1.msra.mxu0 0.0
    %3330 = vmatprep.subr.mxu0 0.0
    %3331 = vmatpush1.msra.mxu0 0.0
    %3332 = vmatprep.subr.mxu0 0.0
    %3333 = vmatpush1.msra.mxu0 0.0
    %3334 = vmatprep.subr.mxu0 0.0
    %3335 = vmatpush1.msra.mxu0 0.0
    %3336 = vmatprep.subr.mxu0 0.0
    %3337 = vmatpush1.msra.mxu0 0.0
    %3338 = vmatprep.subr.mxu0 0.0
    %3339 = vmatpush1.msra.mxu0 0.0
    %3340 = vmatprep.subr.mxu0 0.0
    %3341 = vmatpush1.msra.mxu0 0.0
    %3342 = vmatprep.subr.mxu0 0.0
    %3343 = vmatpush1.msra.mxu0 0.0
    %3344 = vmatprep.subr.mxu0 0.0
    %3345 = vmatpush1.msra.mxu0 0.0
    %3346 = vmatprep.subr.mxu0 0.0
    %3347 = vmatpush1.msra.mxu0 0.0
    %3348 = vmatprep.subr.mxu0 0.0
    %3349 = vmatpush1.msra.mxu0 0.0
    %3350 = vmatprep.subr.mxu0 0.0
    %3351 = vmatpush1.msra.mxu0 0.0
    %3352 = vmatprep.subr.mxu0 0.0
    %3353 = vmatpush1.msra.mxu0 0.0
    %3354 = vmatprep.subr.mxu0 0.0
    %3355 = vmatpush1.msra.mxu0 0.0
    %3356 = vmatprep.subr.mxu0 0.0
    %3357 = vmatpush1.msra.mxu0 0.0
    %3358 = vmatprep.subr.mxu0 0.0
    %3359 = vmatpush1.msra.mxu0 0.0
    %3360 = vmatprep.subr.mxu0 0.0
    %3361 = vmatpush1.msra.mxu0 0.0
    %3362 = vmatprep.subr.mxu0 0.0
    %3363 = vmatpush1.msra.mxu0 0.0
    %3364 = vmatprep.subr.mxu0 0.0
    %3365 = vmatpush1.msra.mxu0 0.0
    %3366 = vmatprep.subr.mxu0 0.0
    %3367 = vmatpush1.msra.mxu0 0.0
    %3368 = vmatprep.subr.mxu0 0.0
    %3369 = vmatpush1.msra.mxu0 0.0
    %3370 = vmatprep.subr.mxu0 0.0
    %3371 = vmatpush1.msra.mxu0 0.0
    %3372 = vmatprep.subr.mxu0 0.0
    %3373 = vmatpush1.msra.mxu0 0.0
    %3374 = vmatprep.subr.mxu0 0.0
    %3375 = vmatpush1.msra.mxu0 0.0
    %3376 = vmatprep.subr.mxu0 0.0
    %3377 = vmatpush1.msra.mxu0 0.0
    %3378 = vmatprep.mubr.f32.mxu0 0.0
    %3379 = vmatmul.mubr.f32.gmra.mrb[0].mxu0 %v3309
    %v3380 = vpop.f32.mrb[0].mxu0
    %v3381 = vadd.f32 %v3307, %v3380
    %v3382 = vpop.f32.mrb[0].mxu0
    %3383 = vmatprep.mubr.f32.mxu0 0.0
    %3384 = vmatmul.mubr.f32.gmra.mrb[0].mxu0 %v3312
    %v3385 = vpop.f32.mrb[0].mxu0
    %v3386 = vadd.f32 %v3307, %v3385
    %v3387 = vpop.f32.mrb[0].mxu0
    %3388 = vdwg.mxu0
    %v3389 = vmul.f32 %v3381, 0.5
    %v3390 = vmul.f32 %v3386, 0.5
    %v3391 = vmul.f32 %v3381, 0.70710677
    %v3392 = vmul.f32 %v3386, 0.70710677
    %vm3393 = vcmp.ge.f32.partialorder %v3391, 0.0
    %vm3394 = vcmp.ge.f32.partialorder %v3392, 0.0
    %v3395 = vsub.f32 0.0, %v3391
    %v3396 = vsub.f32 0.0, %v3392
    %v3397 = vsel %vm3393, %v3391, %v3395
    %v3398 = vsel %vm3394, %v3392, %v3396
    %v3399 = vmul.f32 %v3397, 0.3275911
    %v3400 = vmul.f32 %v3398, 0.3275911
    %v3401 = vadd.f32 %v3399, 1.0
    %v3402 = vadd.f32 %v3400, 1.0
    %v3403 = vrcp.pop %v3401
    %v3404 = vmul.f32 1.0, %v3403
    %v3405 = vrcp.pop %v3402
    %v3406 = vmul.f32 1.0, %v3405
    %v3407 = vmul.f32 %v3404, 1.0614054
    %v3408 = vmul.f32 %v3406, 1.0614054
    %v3409 = vsub.f32 %v3407, 1.4531521
    %v3410 = vsub.f32 %v3408, 1.4531521
    %v3411 = vmul.f32 %v3409, %v3404
    %v3412 = vmul.f32 %v3410, %v3406
    %v3413 = vadd.f32 %v3411, 1.4214138
    %v3414 = vadd.f32 %v3412, 1.4214138
    %v3415 = vmul.f32 %v3413, %v3404
    %v3416 = vmul.f32 %v3414, %v3406
    %v3417 = vsub.f32 %v3415, 0.28449672
    %v3418 = vsub.f32 %v3416, 0.28449672
    %v3419 = vmul.f32 %v3417, %v3404
    %v3420 = vmul.f32 %v3418, %v3406
    %v3421 = vadd.f32 %v3419, 0.2548296
    %v3422 = vadd.f32 %v3420, 0.2548296
    %v3423 = vmul.f32 %v3421, %v3404
    %v3424 = vmul.f32 %v3422, %v3406
    %v3425 = vsub.f32 0.0, %v3397
    %v3426 = vsub.f32 0.0, %v3398
    %v3427 = vmul.f32 %v3425, %v3397
    %v3428 = vmul.f32 %v3426, %v3398
    %v3429 = vmul.f32 %v3427, 1.442695
    %v3430 = vpow.pop %v3429
    %v3431 = vmul.f32 %v3428, 1.442695
    %v3432 = vpow.pop %v3431
    %v3433 = vmul.f32 %v3423, %v3430
    %v3434 = vmul.f32 %v3424, %v3432
    %v3435 = vsub.f32 1.0, %v3433
    %v3436 = vsub.f32 1.0, %v3434
    %v3437 = vsub.f32 0.0, %v3435
    %v3438 = vsub.f32 0.0, %v3436
    %v3439 = vsel %vm3393, %v3435, %v3437
    %v3440 = vsel %vm3394, %v3436, %v3438
    %v3441 = vadd.f32 %v3439, 1.0
    %v3442 = vadd.f32 %v3440, 1.0
    %v3443 = vmul.f32 %v3389, %v3441
    %v3444 = vmul.f32 %v3390, %v3442
    %v3445 = vld [vmem:[%s3298 + $0x20] sm:$0xff]
    %v3446 = vld [vmem:[%s3298 + $0x28] sm:$0xff]
    %v3447 = vld [vmem:[%s3298 + $0x30] sm:$0xff]
    %v3448 = vld [vmem:[%s3298 + $0x38] sm:$0xff]
    %v3449 = vld [vmem:[%s3298 + $0x40] sm:$0xff]
    %v3450 = vld [vmem:[%s3298 + $0x48] sm:$0xff]
    %v3451 = vld [vmem:[%s3298 + $0x50] sm:$0xff]
    %v3452 = vld [vmem:[%s3298 + $0x58] sm:$0xff]
    %v3453 = vld [vmem:[%s1782 + $0x5] sm:$0x1]
    %v3454 = vlaneseq
    %v3455 = vshrl.u32 %v3454, 7
    %v3456 = vsub.s32 0, %v3455
    %v3457 = vrot.slane %v3453, %v3456
    %v3459 = vsel %vm1698, %v3443, 0
    %v3462 = vsel %vm1698, %v3444, 0
    %3464 = vmatprep.subr.mxu0 0.0
    %3465 = vmatpush1.msra.mxu0 %v3445
    %3466 = vmatprep.subr.mxu0 0.0
    %3467 = vmatpush1.msra.mxu0 %v3446
    %3468 = vmatprep.subr.mxu0 0.0
    %3469 = vmatpush1.msra.mxu0 %v3447
    %3470 = vmatprep.subr.mxu0 0.0
    %3471 = vmatpush1.msra.mxu0 %v3448
    %3472 = vmatprep.subr.mxu0 0.0
    %3473 = vmatpush1.msra.mxu0 %v3449
    %3474 = vmatprep.subr.mxu0 0.0
    %3475 = vmatpush1.msra.mxu0 %v3450
    %3476 = vmatprep.subr.mxu0 0.0
    %3477 = vmatpush1.msra.mxu0 %v3451
    %3478 = vmatprep.subr.mxu0 0.0
    %3479 = vmatpush1.msra.mxu0 %v3452
    %3480 = vmatprep.subr.mxu0 0.0
    %3481 = vmatpush1.msra.mxu0 0.0
    %3482 = vmatprep.subr.mxu0 0.0
    %3483 = vmatpush1.msra.mxu0 0.0
    %3484 = vmatprep.subr.mxu0 0.0
    %3485 = vmatpush1.msra.mxu0 0.0
    %3486 = vmatprep.subr.mxu0 0.0
    %3487 = vmatpush1.msra.mxu0 0.0
    %3488 = vmatprep.subr.mxu0 0.0
    %3489 = vmatpush1.msra.mxu0 0.0
    %3490 = vmatprep.subr.mxu0 0.0
    %3491 = vmatpush1.msra.mxu0 0.0
    %3492 = vmatprep.subr.mxu0 0.0
    %3493 = vmatpush1.msra.mxu0 0.0
    %3494 = vmatprep.subr.mxu0 0.0
    %3495 = vmatpush1.msra.mxu0 0.0
    %3496 = vmatprep.subr.mxu0 0.0
    %3497 = vmatpush1.msra.mxu0 0.0
    %3498 = vmatprep.subr.mxu0 0.0
    %3499 = vmatpush1.msra.mxu0 0.0
    %3500 = vmatprep.subr.mxu0 0.0
    %3501 = vmatpush1.msra.mxu0 0.0
    %3502 = vmatprep.subr.mxu0 0.0
    %3503 = vmatpush1.msra.mxu0 0.0
    %3504 = vmatprep.subr.mxu0 0.0
    %3505 = vmatpush1.msra.mxu0 0.0
    %3506 = vmatprep.subr.mxu0 0.0
    %3507 = vmatpush1.msra.mxu0 0.0
    %3508 = vmatprep.subr.mxu0 0.0
    %3509 = vmatpush1.msra.mxu0 0.0
    %3510 = vmatprep.subr.mxu0 0.0
    %3511 = vmatpush1.msra.mxu0 0.0
    %3512 = vmatprep.subr.mxu0 0.0
    %3513 = vmatpush1.msra.mxu0 0.0
    %3514 = vmatprep.subr.mxu0 0.0
    %3515 = vmatpush1.msra.mxu0 0.0
    %3516 = vmatprep.subr.mxu0 0.0
    %3517 = vmatpush1.msra.mxu0 0.0
    %3518 = vmatprep.subr.mxu0 0.0
    %3519 = vmatpush1.msra.mxu0 0.0
    %3520 = vmatprep.subr.mxu0 0.0
    %3521 = vmatpush1.msra.mxu0 0.0
    %3522 = vmatprep.subr.mxu0 0.0
    %3523 = vmatpush1.msra.mxu0 0.0
    %3524 = vmatprep.subr.mxu0 0.0
    %3525 = vmatpush1.msra.mxu0 0.0
    %3526 = vmatprep.subr.mxu0 0.0
    %3527 = vmatpush1.msra.mxu0 0.0
    %3528 = vmatprep.mubr.f32.mxu0 0.0
    %3529 = vmatmul.mubr.f32.gmra.mrb[0].mxu0 %v3459
    %v3530 = vpop.f32.mrb[0].mxu0
    %v3531 = vadd.f32 %v3457, %v3530
    %v3532 = vpop.f32.mrb[0].mxu0
    %3533 = vmatprep.mubr.f32.mxu0 0.0
    %3534 = vmatmul.mubr.f32.gmra.mrb[0].mxu0 %v3462
    %v3535 = vpop.f32.mrb[0].mxu0
    %v3536 = vadd.f32 %v3457, %v3535
    %v3537 = vpop.f32.mrb[0].mxu0
    %3538 = vdwg.mxu0
    %v3539 = vadd.f32 %v3256, %v3531
    %v3540 = vadd.f32 %v3257, %v3536
    %3541 = vst.msk [vmem:[#allocation2] sm:$0xff] %vm25, %v3539
    %3542 = vst.msk [vmem:[#allocation2 + $0x8] sm:$0xff] %vm25, %v3540
    // Predicated region
    $region18: #{transformer_forward.1} parent=1 // pred_check
      _
    $region19: #{transformer_forward.1} parent=1 // pred_check_branch
      %3544 = sbr.rel (0) target = $region21
    $region20: #{transformer_forward.1} parent=1 // pred_region
      %s3546 = ssub.s32 256, 256
      %3547 = vsyncadd [#allocation3], %s3546
      %s3548 = sshll.u32 [#allocation2], 4
      %s3549 = int_to_ptr.vmem [resolvable:$true] %s3548
      %3554 = dma.vmem_to_hbm [thread:$0]  %s3549, 256, %s4, [#allocation3], 128, 128, 8
    $region21: #{transformer_forward.1} parent=1 // pred_fallthru
      _
    // Predicated region
    $region22: #{transformer_forward.1} parent=1 // pred_check
      _
    $region23: #{transformer_forward.1} parent=1 // pred_check_branch
      %3556 = sbr.rel (0) target = $region25
    $region24: #{transformer_forward.1} parent=1 // pred_region
      %s3558 = ssub.s32 2048, 2048
      %3559 = vsyncadd [#allocation5], %s3558
      %s3560 = sshll.u32 [#allocation4], 4
      %s3561 = int_to_ptr.vmem [resolvable:$true] %s3560
      %3566 = dma.vmem_to_hbm [thread:$0]  %s3561, 2048, %s5, [#allocation5], 128, 128, 8
    $region25: #{transformer_forward.1} parent=1 // pred_fallthru
      _
    // Predicated region
    $region26: #{transformer_forward.1} parent=1 // pred_check
      _
    $region27: #{transformer_forward.1} parent=1 // pred_check_branch
      %3568 = sbr.rel (0) target = $region29
    $region28: #{transformer_forward.1} parent=1 // pred_region
      %3569 = dma.done [#allocation3], 256
    $region29: #{transformer_forward.1} parent=1 // pred_fallthru
      _
    // Predicated region
    $region30: #{transformer_forward.1} parent=1 // pred_check
      _
    $region31: #{transformer_forward.1} parent=1 // pred_check_branch
      %3571 = sbr.rel (0) target = $region33
    $region32: #{transformer_forward.1} parent=1 // pred_region
      %3572 = dma.done [#allocation5], 2048
    $region33: #{transformer_forward.1} parent=1 // pred_fallthru
      _
    %3573 = vsyncpa [#allocation3], 1
    %3574 = vsyncpa [#allocation5], 1

</llo_original>
